<compile_context>
chip_gen: v7x
topology: tpu7x:2x2x1
jax: 0.10.0
libtpu: 0.0.40
codegen_flags: <defaults>
</compile_context>

<pallas_src>
import functools

import jax
import jax.numpy as jnp
from jax.experimental import pallas as pl
from jax.experimental.pallas import tpu as pltpu


def _round_up(x, m):
    return ((x + m - 1) // m) * m


def _pad_rows(x, rows):
    if x.shape[0] == rows:
        return x
    return jnp.zeros((rows,) + x.shape[1:], x.dtype).at[: x.shape[0]].set(x)


# --------------------------------------------------------------------------- #
# Shared in-kernel compute: Bahdanau attention + one GRU step for a batch block.
# --------------------------------------------------------------------------- #
def _attn_gru_compute(emb_ref, hid_ref, enc_ref, mask_ref,
                      wa_ref, ua_ref, va_ref,
                      wie_r, wie_z, wie_n,
                      wic_r, wic_z, wic_n,
                      whh_r, whh_z, whh_n,
                      b_r, b_z, b_in, b_hn,
                      *, approx_recip):
    TB, Sp, E = enc_ref.shape
    H = hid_ref.shape[-1]
    cdt = wa_ref.dtype                         # matmul-operand dtype (bf16 or f32)

    emb = emb_ref[...]                         # (TB, EMB) f32
    hid = hid_ref[...]                         # (TB, H)   f32
    enc3 = enc_ref[...]                        # (TB, Sp, E) cdt
    mask2 = mask_ref[...]                      # (TB, Sp)  f32, lane-dense (1 = valid)

    # ---- additive attention -------------------------------------------------
    # encoder projection: batch folded into M -> one (TB*Sp, E) @ (E, H) MXU matmul
    proj_enc = jnp.dot(enc3.reshape(TB * Sp, E).astype(cdt), wa_ref[...],
                       preferred_element_type=jnp.float32)           # (TB*Sp, H)
    proj_dec = jnp.dot(hid.astype(cdt), ua_ref[...],
                       preferred_element_type=jnp.float32)           # (TB, H)
    t3 = jnp.tanh((proj_enc.reshape(TB, Sp, H)
                   + proj_dec[:, None, :]).astype(cdt))              # (TB, Sp, H)

    # score: VPU mul + reduce over H -> lane-dense (TB, Sp); no N=1 MXU matmul.
    va = va_ref[...].reshape(1, 1, H).astype(cdt)
    score = jnp.sum((t3 * va).astype(jnp.float32), axis=-1)          # (TB, Sp)

    # masked softmax over the sequence axis, all on the lane-dense (TB, Sp) layout
    score = jnp.where(mask2 > 0.0, score, jnp.float32(-1000000000.0))
    score = score - jnp.max(score, axis=-1, keepdims=True)
    p = jnp.exp(score)
    denom = jnp.sum(p, axis=-1, keepdims=True)
    attn = p * pl.reciprocal(denom, approx=approx_recip)             # (TB, Sp)

    # context: single relayout to (TB, Sp, 1), weighted sum over Sp
    context = jnp.sum(attn[:, :, None] * enc3.astype(jnp.float32), axis=1)  # (TB, E)

    # ---- GRU cell (PyTorch gate order r, z, n), per-gate lane-aligned matmuls
    emb_c = emb.astype(cdt)
    ctx_c = context.astype(cdt)
    hid_c = hid.astype(cdt)

    def mm(x, w_ref):
        return jnp.dot(x, w_ref[...], preferred_element_type=jnp.float32)

    a_r = mm(emb_c, wie_r) + mm(ctx_c, wic_r) + mm(hid_c, whh_r) + b_r[...]
    a_z = mm(emb_c, wie_z) + mm(ctx_c, wic_z) + mm(hid_c, whh_z) + b_z[...]
    gi_n = mm(emb_c, wie_n) + mm(ctx_c, wic_n) + b_in[...]
    gh_n = mm(hid_c, whh_n) + b_hn[...]

    r = jax.nn.sigmoid(a_r)
    z = jax.nn.sigmoid(a_z)
    n = jnp.tanh(gi_n + r * gh_n)
    return (1.0 - z) * n + z * hid                                   # (TB, H) f32


# --------------------------------------------------------------------------- #
# Kernel bodies.
# --------------------------------------------------------------------------- #
def attn_gru_kernel(emb_ref, hid_ref, enc_ref, mask_ref,
                    wa_ref, ua_ref, va_ref,
                    wie_r, wie_z, wie_n, wic_r, wic_z, wic_n,
                    whh_r, whh_z, whh_n, b_r, b_z, b_in, b_hn,
                    hnew_ref, *, approx_recip):
    hnew_ref[...] = _attn_gru_compute(
        emb_ref, hid_ref, enc_ref, mask_ref, wa_ref, ua_ref, va_ref,
        wie_r, wie_z, wie_n, wic_r, wic_z, wic_n,
        whh_r, whh_z, whh_n, b_r, b_z, b_in, b_hn,
        approx_recip=approx_recip)


def fused_step_kernel(emb_ref, hid_ref, enc_ref, mask_ref,
                      wa_ref, ua_ref, va_ref,
                      wie_r, wie_z, wie_n, wic_r, wic_z, wic_n,
                      whh_r, whh_z, whh_n, b_r, b_z, b_in, b_hn,
                      w_out_ref, b_out_ref,
                      logits_ref, hnew_ref, h_scr, *, approx_recip):
    # grid = (num_vocab_tiles,): attention + GRU run once (j == 0) into VMEM
    # scratch; every step multiplies the resident h against the j-th w_out tile.
    @pl.when(pl.program_id(0) == 0)
    def _():
        h_scr[...] = _attn_gru_compute(
            emb_ref, hid_ref, enc_ref, mask_ref, wa_ref, ua_ref, va_ref,
            wie_r, wie_z, wie_n, wic_r, wic_z, wic_n,
            whh_r, whh_z, whh_n, b_r, b_z, b_in, b_hn,
            approx_recip=approx_recip)

    h = h_scr[...]
    hnew_ref[...] = h
    logits_ref[...] = (jnp.dot(h.astype(w_out_ref.dtype), w_out_ref[...],
                               preferred_element_type=jnp.float32)
                       + b_out_ref[...])


def out_proj_kernel(h_ref, w_ref, b_ref, logits_ref):
    logits_ref[...] = (jnp.dot(h_ref[...].astype(w_ref.dtype), w_ref[...],
                               preferred_element_type=jnp.float32)
                       + b_ref[...])


# --------------------------------------------------------------------------- #
# Loop-invariant preparation (run once per decode loop / source sequence).
# --------------------------------------------------------------------------- #
def prepare_params(params, *, compute_dtype=jnp.bfloat16, vocab_tile=None):
    """Per-gate GRU weight split, casts to the compute dtype, vocab-tile padding."""
    cdt = compute_dtype
    H = params["w_hh"].shape[0]
    V = params["w_out"].shape[1]

    def gate(w, g):
        return jnp.asarray(w[:, g * H:(g + 1) * H], dtype=cdt)

    b_ih = params["b_ih"].astype(jnp.float32).reshape(1, 3 * H)
    b_hh = params["b_hh"].astype(jnp.float32).reshape(1, 3 * H)

    VT = vocab_tile or (V if V <= 2048 else 2048)
    VT = min(VT, V)
    if V >= 128:
        VT = max(128, (VT // 128) * 128)
    Vp = _round_up(V, VT)
    w_out = params["w_out"].astype(cdt)
    b_out = params["b_out"].astype(jnp.float32).reshape(1, V)
    if Vp != V:
        w_out = jnp.zeros((H, Vp), cdt).at[:, :V].set(w_out)
        b_out = jnp.zeros((1, Vp), jnp.float32).at[:, :V].set(b_out)

    return {
        "compute_dtype": cdt, "H": H, "V": V, "VT": VT, "Vp": Vp,
        "embedding": jnp.asarray(params["embedding"]),
        "wa": params["wa"].astype(cdt),
        "ua": params["ua"].astype(cdt),
        "va_row": params["va"].reshape(1, H).astype(cdt),
        "wie": tuple(gate(params["w_ih_emb"], g) for g in range(3)),
        "wic": tuple(gate(params["w_ih_ctx"], g) for g in range(3)),
        "whh": tuple(gate(params["w_hh"], g) for g in range(3)),
        "b_r": b_ih[:, 0:H] + b_hh[:, 0:H],          # r/z biases can be pre-summed
        "b_z": b_ih[:, H:2 * H] + b_hh[:, H:2 * H],
        "b_in": b_ih[:, 2 * H:3 * H],                # n gate: hidden bias stays
        "b_hn": b_hh[:, 2 * H:3 * H],                # separate (multiplied by r)
        "w_out": w_out, "b_out": b_out,
    }


def _pick_batch_block(B, Sp, E, H, enc_bytes, budget_bytes):
    # dominant per-batch-row VMEM terms inside the attention/GRU kernel
    per_row = 2 * Sp * E * enc_bytes                 # double-buffered encoder block
    per_row += 2 * Sp * 4                            # lane-dense f32 mask (x2 bufs)
    per_row += Sp * H * 4 + Sp * H * enc_bytes       # proj_enc (f32) + tanh interm.
    per_row += 16 * max(E, H) * 4                    # emb/hid/context/gates/h_new
    tb = int(budget_bytes // max(per_row, 1))
    return max(8, min(128, (tb // 8) * 8))


def prepare_encoder(encoder_outputs, encoder_mask, *, compute_dtype=jnp.bfloat16,
                    gru_hidden_size=None, batch_block=None,
                    vmem_budget_bytes=48 * 1024 * 1024):
    """Pad batch/sequence, build a lane-dense (Bp, Sp) f32 mask, stream encoder
    outputs in the compute dtype, and pick a batch block within the VMEM budget."""
    B, S, E = encoder_outputs.shape
    H = gru_hidden_size or E
    Sp = _round_up(S, 8)
    cdt = compute_dtype
    enc_bytes = jnp.dtype(cdt).itemsize

    TB = batch_block or _pick_batch_block(B, Sp, E, H, enc_bytes, vmem_budget_bytes)
    TB = min(TB, _round_up(B, 8))
    # TODO(synk): on v7x with a single batch block and B >= 16, pass
    # batch_block=round_up(B // 2, 8) so the second TensorCore gets work.
    Bp = _round_up(B, TB)

    enc = encoder_outputs.astype(cdt)
    if Sp != S:
        enc = jnp.zeros((B, Sp, E), cdt).at[:, :S].set(enc)
    enc = _pad_rows(enc, Bp)

    mask = encoder_mask.astype(jnp.float32).reshape(B, S)
    if Sp != S:
        mask = jnp.zeros((B, Sp), jnp.float32).at[:, :S].set(mask)
    mask = _pad_rows(mask, Bp)

    return {"enc": enc, "mask": mask, "B": B, "S": S, "E": E,
            "Bp": Bp, "Sp": Sp, "TB": TB, "nb": Bp // TB}


# --------------------------------------------------------------------------- #
# One decode step.
# --------------------------------------------------------------------------- #
def code_decoder_step(decoder_input, decoder_hidden, pparams, penc, *,
                      approx_recip=True, vmem_limit_bytes=64 * 1024 * 1024):
    """Returns (logits (B, V), new_hidden (B, H)).

    approx_recip=True uses the EUP approximate reciprocal for the softmax
    denominator: attention weights sum to 1 only approximately (fast path)."""
    if decoder_input.ndim == 2:
        decoder_input = decoder_input[:, 0]

    B, Bp, Sp, TB, nb = penc["B"], penc["Bp"], penc["Sp"], penc["TB"], penc["nb"]
    E = penc["E"]
    H, V, VT, Vp = pparams["H"], pparams["V"], pparams["VT"], pparams["Vp"]
    EMB = pparams["embedding"].shape[-1]
    nv = Vp // VT

    # glue: embedding gather; eval-mode dropout == identity.
    embedded = pparams["embedding"][decoder_input].astype(jnp.float32)   # (B, EMB)
    emb_p = _pad_rows(embedded, Bp)
    hid_p = _pad_rows(decoder_hidden.astype(jnp.float32), Bp)

    attn_arrays = (emb_p, hid_p, penc["enc"], penc["mask"],
                   pparams["wa"], pparams["ua"], pparams["va_row"],
                   *pparams["wie"], *pparams["wic"], *pparams["whh"],
                   pparams["b_r"], pparams["b_z"], pparams["b_in"], pparams["b_hn"])

    def whole(a, n_axes):
        zeros = (0,) * a.ndim
        if n_axes == 1:
            return pl.BlockSpec(a.shape, lambda j: zeros)
        return pl.BlockSpec(a.shape, lambda j, i: zeros)

    if nb == 1:
        # ---- fused attention + GRU + vocab projection (one kernel launch) ----
        in_specs = ([
            pl.BlockSpec((TB, EMB), lambda j: (0, 0)),
            pl.BlockSpec((TB, H), lambda j: (0, 0)),
            pl.BlockSpec((TB, Sp, E), lambda j: (0, 0, 0)),
            pl.BlockSpec((TB, Sp), lambda j: (0, 0)),
        ] + [whole(a, 1) for a in attn_arrays[4:]] + [
            pl.BlockSpec((H, VT), lambda j: (0, j)),
            pl.BlockSpec((1, VT), lambda j: (0, j)),
        ])
        kern = functools.partial(fused_step_kernel, approx_recip=approx_recip)
        logits_p, h_new_p = pl.pallas_call(
            kern,
            grid=(nv,),
            in_specs=in_specs,
            out_specs=(pl.BlockSpec((TB, VT), lambda j: (0, j)),
                       pl.BlockSpec((TB, H), lambda j: (0, 0))),
            out_shape=(jax.ShapeDtypeStruct((Bp, Vp), jnp.float32),
                       jax.ShapeDtypeStruct((Bp, H), jnp.float32)),
            scratch_shapes=[pltpu.VMEM((TB, H), jnp.float32)],
            compiler_params=pltpu.CompilerParams(
                dimension_semantics=("arbitrary",),
                vmem_limit_bytes=vmem_limit_bytes),
        )(*attn_arrays, pparams["w_out"], pparams["b_out"])
        return logits_p[:B, :V], h_new_p[:B]

    # ---- multi-batch-block path: attention/GRU kernel, then tiled projection ----
    attn_specs = ([
        pl.BlockSpec((TB, EMB), lambda i: (i, 0)),
        pl.BlockSpec((TB, H), lambda i: (i, 0)),
        pl.BlockSpec((TB, Sp, E), lambda i: (i, 0, 0)),
        pl.BlockSpec((TB, Sp), lambda i: (i, 0)),
    ] + [whole(a, 1) for a in attn_arrays[4:]])
    kern_a = functools.partial(attn_gru_kernel, approx_recip=approx_recip)
    h_new_p = pl.pallas_call(
        kern_a,
        grid=(nb,),
        in_specs=attn_specs,
        out_specs=pl.BlockSpec((TB, H), lambda i: (i, 0)),
        out_shape=jax.ShapeDtypeStruct((Bp, H), jnp.float32),
        compiler_params=pltpu.CompilerParams(
            dimension_semantics=("parallel",),
            vmem_limit_bytes=vmem_limit_bytes),
    )(*attn_arrays)

    # vocab-tile outer / batch-block inner: each (H, VT) w_out tile is fetched once
    logits_p = pl.pallas_call(
        out_proj_kernel,
        grid=(nv, nb),
        in_specs=[
            pl.BlockSpec((TB, H), lambda j, i: (i, 0)),
            pl.BlockSpec((H, VT), lambda j, i: (0, j)),
            pl.BlockSpec((1, VT), lambda j, i: (0, j)),
        ],
        out_specs=pl.BlockSpec((TB, VT), lambda j, i: (i, j)),
        out_shape=jax.ShapeDtypeStruct((Bp, Vp), jnp.float32),
        compiler_params=pltpu.CompilerParams(
            dimension_semantics=("parallel", "parallel"),
            vmem_limit_bytes=vmem_limit_bytes),
    )(h_new_p, pparams["w_out"], pparams["b_out"])

    return logits_p[:B, :V], h_new_p[:B]


# --------------------------------------------------------------------------- #
# Pure-JAX reference mirroring the PyTorch forward (f32).
# --------------------------------------------------------------------------- #
def reference_step(decoder_input, decoder_hidden, encoder_outputs, encoder_mask, params):
    if decoder_input.ndim == 2:
        decoder_input = decoder_input[:, 0]
    H = decoder_hidden.shape[-1]
    embedded = params["embedding"][decoder_input]
    proj_dec = decoder_hidden @ params["ua"]
    proj_enc = jnp.einsum("bse,eh->bsh", encoder_outputs, params["wa"])
    t = jnp.tanh(proj_enc + proj_dec[:, None, :])
    score = jnp.sum(t * params["va"][:, 0], axis=-1)
    score = jnp.where(encoder_mask > 0, score, -1000000000.0)
    attn = jax.nn.softmax(score, axis=1)
    context = jnp.einsum("bs,bse->be", attn, encoder_outputs)
    gi = (embedded @ params["w_ih_emb"] + context @ params["w_ih_ctx"]
          + params["b_ih"][0])
    gh = decoder_hidden @ params["w_hh"] + params["b_hh"][0]
    r = jax.nn.sigmoid(gi[:, :H] + gh[:, :H])
    z = jax.nn.sigmoid(gi[:, H:2 * H] + gh[:, H:2 * H])
    n = jnp.tanh(gi[:, 2 * H:] + r * gh[:, 2 * H:])
    h_new = (1.0 - z) * n + z * decoder_hidden
    logits = h_new @ params["w_out"] + params["b_out"][0]
    return logits, h_new


if __name__ == "__main__":
    B, S = 2, 8
    H = 32                 # gru_hidden_size
    EMB = 32               # embedding_size
    E = 2 * H              # encoder_output_dim (bidirectional-GRU style)
    V = 256                # vocab_size

    key = jax.random.PRNGKey(0)
    ks = jax.random.split(key, 16)
    scale = 0.1
    params = {
        "embedding": scale * jax.random.normal(ks[0], (V, EMB), jnp.float32),
        # attention (weights stored transposed: y = x @ W)
        "wa": scale * jax.random.normal(ks[1], (E, H), jnp.float32),
        "ua": scale * jax.random.normal(ks[2], (H, H), jnp.float32),
        "va": scale * jax.random.normal(ks[3], (H, 1), jnp.float32),
        # GRU (gate column order r, z, n - PyTorch convention); w_ih pre-split
        "w_ih_emb": scale * jax.random.normal(ks[4], (EMB, 3 * H), jnp.float32),
        "w_ih_ctx": scale * jax.random.normal(ks[5], (E, 3 * H), jnp.float32),
        "b_ih": scale * jax.random.normal(ks[6], (1, 3 * H), jnp.float32),
        "w_hh": scale * jax.random.normal(ks[7], (H, 3 * H), jnp.float32),
        "b_hh": scale * jax.random.normal(ks[8], (1, 3 * H), jnp.float32),
        # output projection (PyTorch init: weight uniform(-0.1, 0.1), bias zero)
        "w_out": jax.random.uniform(ks[9], (H, V), jnp.float32, -0.1, 0.1),
        "b_out": jnp.zeros((1, V), jnp.float32),
    }

    decoder_input = jax.random.randint(ks[10], (B,), 0, V, dtype=jnp.int32)
    decoder_hidden = jax.random.normal(ks[11], (B, H), jnp.float32)
    encoder_outputs = jax.random.normal(ks[12], (B, S, E), jnp.float32)
    encoder_mask = jnp.array([[1] * S, [1] * (S - 3) + [0] * 3], dtype=jnp.int32)

    ref_logits, ref_h = reference_step(decoder_input, decoder_hidden,
                                       encoder_outputs, encoder_mask, params)

    # 1) exact f32 path, fused kernel with two vocab tiles (tight correctness check)
    pp32 = prepare_params(params, compute_dtype=jnp.float32, vocab_tile=128)
    pe32 = prepare_encoder(encoder_outputs, encoder_mask,
                           compute_dtype=jnp.float32, gru_hidden_size=H)
    logits32, h32 = code_decoder_step(decoder_input, decoder_hidden, pp32, pe32,
                                      approx_recip=False)
    jax.block_until_ready((logits32, h32))
    assert jnp.allclose(logits32, ref_logits, rtol=1e-4, atol=1e-4)
    assert jnp.allclose(h32, ref_h, rtol=1e-4, atol=1e-4)

    # 2) fast bf16 path (bf16 operands / f32 accumulation, EUP approx reciprocal)
    ppbf = prepare_params(params, compute_dtype=jnp.bfloat16)
    pebf = prepare_encoder(encoder_outputs, encoder_mask,
                           compute_dtype=jnp.bfloat16, gru_hidden_size=H)
    logits_bf, h_bf = code_decoder_step(decoder_input, decoder_hidden, ppbf, pebf,
                                        approx_recip=True)
    jax.block_until_ready((logits_bf, h_bf))
    assert jnp.allclose(logits_bf, ref_logits, rtol=5e-2, atol=5e-2)
    assert jnp.allclose(h_bf, ref_h, rtol=5e-2, atol=5e-2)

    # 3) multi-batch-block path (separate attention + projection kernels, nb = 2)
    B2 = 16
    k2 = jax.random.split(jax.random.PRNGKey(1), 4)
    di2 = jax.random.randint(k2[0], (B2,), 0, V, dtype=jnp.int32)
    dh2 = jax.random.normal(k2[1], (B2, H), jnp.float32)
    eo2 = jax.random.normal(k2[2], (B2, S, E), jnp.float32)
    em2 = (jax.random.uniform(k2[3], (B2, S)) > 0.2).astype(jnp.int32)
    em2 = em2.at[:, 0].set(1)          # keep at least one valid position per row
    ref_l2, ref_h2 = reference_step(di2, dh2, eo2, em2, params)
    pp2 = prepare_params(params, compute_dtype=jnp.float32)
    pe2 = prepare_encoder(eo2, em2, compute_dtype=jnp.float32,
                          gru_hidden_size=H, batch_block=8)
    l2, h2 = code_decoder_step(di2, dh2, pp2, pe2, approx_recip=False)
    jax.block_until_ready((l2, h2))
    assert jnp.allclose(l2, ref_l2, rtol=1e-4, atol=1e-4)
    assert jnp.allclose(h2, ref_h2, rtol=1e-4, atol=1e-4)

    print("KERNEL_OK")
</pallas_src>

<mosaic_0001>
module attributes {stable_mosaic.version = 11 : i64} {
  func.func @fused_step_kernel(%arg0: i32, %arg1: memref<8x32xf32, #tpu.memory_space<vmem>>, %arg2: memref<8x32xf32, #tpu.memory_space<vmem>>, %arg3: memref<8x8x64xf32, #tpu.memory_space<vmem>>, %arg4: memref<8x8xf32, #tpu.memory_space<vmem>>, %arg5: memref<64x32xf32, #tpu.memory_space<vmem>>, %arg6: memref<32x32xf32, #tpu.memory_space<vmem>>, %arg7: memref<1x32xf32, #tpu.memory_space<vmem>>, %arg8: memref<32x32xf32, #tpu.memory_space<vmem>>, %arg9: memref<32x32xf32, #tpu.memory_space<vmem>>, %arg10: memref<32x32xf32, #tpu.memory_space<vmem>>, %arg11: memref<64x32xf32, #tpu.memory_space<vmem>>, %arg12: memref<64x32xf32, #tpu.memory_space<vmem>>, %arg13: memref<64x32xf32, #tpu.memory_space<vmem>>, %arg14: memref<32x32xf32, #tpu.memory_space<vmem>>, %arg15: memref<32x32xf32, #tpu.memory_space<vmem>>, %arg16: memref<32x32xf32, #tpu.memory_space<vmem>>, %arg17: memref<1x32xf32, #tpu.memory_space<vmem>>, %arg18: memref<1x32xf32, #tpu.memory_space<vmem>>, %arg19: memref<1x32xf32, #tpu.memory_space<vmem>>, %arg20: memref<1x32xf32, #tpu.memory_space<vmem>>, %arg21: memref<32x128xf32, #tpu.memory_space<vmem>>, %arg22: memref<1x128xf32, #tpu.memory_space<vmem>>, %arg23: memref<8x128xf32, #tpu.memory_space<vmem>>, %arg24: memref<8x32xf32, #tpu.memory_space<vmem>>, %arg25: memref<8x32xf32, #tpu.memory_space<vmem>>) attributes {dimension_semantics = [#tpu.dimension_semantics<arbitrary>], iteration_bounds = array<i64: 2>, scalar_prefetch = 0 : i64, scratch_operands = 1 : i64, tpu.core_type = #tpu.core_type<tc>, window_params = [{pipeline_mode = #tpu.pipeline_mode<synchronous>, transform_indices = @transform_0, window_bounds = array<i64: 8, 32>}, {pipeline_mode = #tpu.pipeline_mode<synchronous>, transform_indices = @transform_1, window_bounds = array<i64: 8, 32>}, {pipeline_mode = #tpu.pipeline_mode<synchronous>, transform_indices = @transform_2, window_bounds = array<i64: 8, 8, 64>}, {pipeline_mode = #tpu.pipeline_mode<synchronous>, transform_indices = @transform_3, window_bounds = array<i64: 8, 8>}, {pipeline_mode = #tpu.pipeline_mode<synchronous>, transform_indices = @transform_4, window_bounds = array<i64: 64, 32>}, {pipeline_mode = #tpu.pipeline_mode<synchronous>, transform_indices = @transform_5, window_bounds = array<i64: 32, 32>}, {pipeline_mode = #tpu.pipeline_mode<synchronous>, transform_indices = @transform_6, window_bounds = array<i64: 1, 32>}, {pipeline_mode = #tpu.pipeline_mode<synchronous>, transform_indices = @transform_7, window_bounds = array<i64: 32, 32>}, {pipeline_mode = #tpu.pipeline_mode<synchronous>, transform_indices = @transform_8, window_bounds = array<i64: 32, 32>}, {pipeline_mode = #tpu.pipeline_mode<synchronous>, transform_indices = @transform_9, window_bounds = array<i64: 32, 32>}, {pipeline_mode = #tpu.pipeline_mode<synchronous>, transform_indices = @transform_10, window_bounds = array<i64: 64, 32>}, {pipeline_mode = #tpu.pipeline_mode<synchronous>, transform_indices = @transform_11, window_bounds = array<i64: 64, 32>}, {pipeline_mode = #tpu.pipeline_mode<synchronous>, transform_indices = @transform_12, window_bounds = array<i64: 64, 32>}, {pipeline_mode = #tpu.pipeline_mode<synchronous>, transform_indices = @transform_13, window_bounds = array<i64: 32, 32>}, {pipeline_mode = #tpu.pipeline_mode<synchronous>, transform_indices = @transform_14, window_bounds = array<i64: 32, 32>}, {pipeline_mode = #tpu.pipeline_mode<synchronous>, transform_indices = @transform_15, window_bounds = array<i64: 32, 32>}, {pipeline_mode = #tpu.pipeline_mode<synchronous>, transform_indices = @transform_16, window_bounds = array<i64: 1, 32>}, {pipeline_mode = #tpu.pipeline_mode<synchronous>, transform_indices = @transform_17, window_bounds = array<i64: 1, 32>}, {pipeline_mode = #tpu.pipeline_mode<synchronous>, transform_indices = @transform_18, window_bounds = array<i64: 1, 32>}, {pipeline_mode = #tpu.pipeline_mode<synchronous>, transform_indices = @transform_19, window_bounds = array<i64: 1, 32>}, {transform_indices = @transform_20, window_bounds = array<i64: 32, 128>}, {transform_indices = @transform_21, window_bounds = array<i64: 1, 128>}, {transform_indices = @transform_22, window_bounds = array<i64: 8, 128>}, {pipeline_mode = #tpu.pipeline_mode<synchronous>, transform_indices = @transform_23, window_bounds = array<i64: 8, 32>}]} {
    %c0_i32 = arith.constant 0 : i32
    %0 = arith.cmpi eq, %arg0, %c0_i32 : i32
    %1 = arith.extui %0 : i1 to i32
    %c0_i32_0 = arith.constant 0 : i32
    %2 = arith.cmpi ne, %1, %c0_i32_0 : i32
    scf.if %2 {
      %c0_10 = arith.constant 0 : index
      %c0_11 = arith.constant 0 : index
      %11 = vector.load %arg1[%c0_10, %c0_11] : memref<8x32xf32, #tpu.memory_space<vmem>>, vector<8x32xf32>
      %c0_12 = arith.constant 0 : index
      %c0_13 = arith.constant 0 : index
      %12 = vector.load %arg2[%c0_12, %c0_13] : memref<8x32xf32, #tpu.memory_space<vmem>>, vector<8x32xf32>
      %c0_14 = arith.constant 0 : index
      %c0_15 = arith.constant 0 : index
      %c0_16 = arith.constant 0 : index
      %13 = vector.load %arg3[%c0_14, %c0_15, %c0_16] : memref<8x8x64xf32, #tpu.memory_space<vmem>>, vector<8x8x64xf32>
      %c0_17 = arith.constant 0 : index
      %c0_18 = arith.constant 0 : index
      %14 = vector.load %arg4[%c0_17, %c0_18] : memref<8x8xf32, #tpu.memory_space<vmem>>, vector<8x8xf32>
      %15 = vector.shape_cast %13 : vector<8x8x64xf32> to vector<64x64xf32>
      %c0_19 = arith.constant 0 : index
      %c0_20 = arith.constant 0 : index
      %16 = vector.load %arg5[%c0_19, %c0_20] : memref<64x32xf32, #tpu.memory_space<vmem>>, vector<64x32xf32>
      %cst_21 = arith.constant dense<0.000000e+00> : vector<64x32xf32>
      %17 = tpu.matmul %15, %16, %cst_21 {dimension_numbers = #tpu.dot_dimension_numbers<[1], [0], [0], [1], [0, 0, 1, 1], [], []>} : vector<64x64xf32>, vector<64x32xf32>, vector<64x32xf32> -> vector<64x32xf32>
      %c0_22 = arith.constant 0 : index
      %c0_23 = arith.constant 0 : index
      %18 = vector.load %arg6[%c0_22, %c0_23] : memref<32x32xf32, #tpu.memory_space<vmem>>, vector<32x32xf32>
      %cst_24 = arith.constant dense<0.000000e+00> : vector<8x32xf32>
      %19 = tpu.matmul %12, %18, %cst_24 {dimension_numbers = #tpu.dot_dimension_numbers<[1], [0], [0], [1], [0, 0, 1, 1], [], []>} : vector<8x32xf32>, vector<32x32xf32>, vector<8x32xf32> -> vector<8x32xf32>
      %20 = vector.shape_cast %17 : vector<64x32xf32> to vector<8x8x32xf32>
      %21 = vector.shape_cast %19 : vector<8x32xf32> to vector<8x1x32xf32>
      %22 = vector.broadcast %21 : vector<8x1x32xf32> to vector<8x8x32xf32>
      %23 = arith.addf %20, %22 : vector<8x8x32xf32>
      %24 = math.tanh %23 : vector<8x8x32xf32>
      %c0_25 = arith.constant 0 : index
      %c0_26 = arith.constant 0 : index
      %25 = vector.load %arg7[%c0_25, %c0_26] : memref<1x32xf32, #tpu.memory_space<vmem>>, vector<1x32xf32>
      %26 = vector.shape_cast %25 : vector<1x32xf32> to vector<1x1x32xf32>
      %27 = vector.broadcast %26 : vector<1x1x32xf32> to vector<8x8x32xf32>
      %28 = arith.mulf %24, %27 : vector<8x8x32xf32>
      %cst_27 = arith.constant dense<0.000000e+00> : vector<8x8xf32>
      %29 = vector.multi_reduction <add>, %28, %cst_27 [2] : vector<8x8x32xf32> to vector<8x8xf32>
      %cst_28 = arith.constant 0.000000e+00 : f32
      %30 = vector.broadcast %cst_28 : f32 to vector<8x8xf32>
      %31 = arith.cmpf ogt, %14, %30 : vector<8x8xf32>
      %cst_29 = arith.constant -1.000000e+09 : f32
      %32 = vector.broadcast %cst_29 : f32 to vector<8x8xf32>
      %33 = arith.select %31, %29, %32 : vector<8x8xi1>, vector<8x8xf32>
      %cst_30 = arith.constant dense<0xFF800000> : vector<8xf32>
      %34 = vector.multi_reduction <maximumf>, %33, %cst_30 [1] : vector<8x8xf32> to vector<8xf32>
      %35 = vector.shape_cast %34 : vector<8xf32> to vector<8x1xf32>
      %36 = vector.broadcast %35 : vector<8x1xf32> to vector<8x8xf32>
      %37 = arith.subf %33, %36 : vector<8x8xf32>
      %38 = math.exp %37 : vector<8x8xf32>
      %cst_31 = arith.constant dense<0.000000e+00> : vector<8xf32>
      %39 = vector.multi_reduction <add>, %38, %cst_31 [1] : vector<8x8xf32> to vector<8xf32>
      %40 = vector.shape_cast %39 : vector<8xf32> to vector<8x1xf32>
      %41 = tpu.reciprocal %40 : vector<8x1xf32> -> vector<8x1xf32>
      %42 = vector.broadcast %41 : vector<8x1xf32> to vector<8x8xf32>
      %43 = arith.mulf %38, %42 : vector<8x8xf32>
      %44 = vector.shape_cast %43 : vector<8x8xf32> to vector<8x8x1xf32>
      %45 = vector.broadcast %44 : vector<8x8x1xf32> to vector<8x8x64xf32>
      %46 = arith.mulf %45, %13 : vector<8x8x64xf32>
      %cst_32 = arith.constant dense<0.000000e+00> : vector<8x64xf32>
      %47 = vector.multi_reduction <add>, %46, %cst_32 [1] : vector<8x8x64xf32> to vector<8x64xf32>
      %c0_33 = arith.constant 0 : index
      %c0_34 = arith.constant 0 : index
      %48 = vector.load %arg8[%c0_33, %c0_34] : memref<32x32xf32, #tpu.memory_space<vmem>>, vector<32x32xf32>
      %cst_35 = arith.constant dense<0.000000e+00> : vector<8x32xf32>
      %49 = tpu.matmul %11, %48, %cst_35 {dimension_numbers = #tpu.dot_dimension_numbers<[1], [0], [0], [1], [0, 0, 1, 1], [], []>} : vector<8x32xf32>, vector<32x32xf32>, vector<8x32xf32> -> vector<8x32xf32>
      %c0_36 = arith.constant 0 : index
      %c0_37 = arith.constant 0 : index
      %50 = vector.load %arg11[%c0_36, %c0_37] : memref<64x32xf32, #tpu.memory_space<vmem>>, vector<64x32xf32>
      %cst_38 = arith.constant dense<0.000000e+00> : vector<8x32xf32>
      %51 = tpu.matmul %47, %50, %cst_38 {dimension_numbers = #tpu.dot_dimension_numbers<[1], [0], [0], [1], [0, 0, 1, 1], [], []>} : vector<8x64xf32>, vector<64x32xf32>, vector<8x32xf32> -> vector<8x32xf32>
      %52 = arith.addf %49, %51 : vector<8x32xf32>
      %c0_39 = arith.constant 0 : index
      %c0_40 = arith.constant 0 : index
      %53 = vector.load %arg14[%c0_39, %c0_40] : memref<32x32xf32, #tpu.memory_space<vmem>>, vector<32x32xf32>
      %cst_41 = arith.constant dense<0.000000e+00> : vector<8x32xf32>
      %54 = tpu.matmul %12, %53, %cst_41 {dimension_numbers = #tpu.dot_dimension_numbers<[1], [0], [0], [1], [0, 0, 1, 1], [], []>} : vector<8x32xf32>, vector<32x32xf32>, vector<8x32xf32> -> vector<8x32xf32>
      %55 = arith.addf %52, %54 : vector<8x32xf32>
      %c0_42 = arith.constant 0 : index
      %c0_43 = arith.constant 0 : index
      %56 = vector.load %arg17[%c0_42, %c0_43] : memref<1x32xf32, #tpu.memory_space<vmem>>, vector<1x32xf32>
      %57 = vector.broadcast %56 : vector<1x32xf32> to vector<8x32xf32>
      %58 = arith.addf %55, %57 : vector<8x32xf32>
      %c0_44 = arith.constant 0 : index
      %c0_45 = arith.constant 0 : index
      %59 = vector.load %arg9[%c0_44, %c0_45] : memref<32x32xf32, #tpu.memory_space<vmem>>, vector<32x32xf32>
      %cst_46 = arith.constant dense<0.000000e+00> : vector<8x32xf32>
      %60 = tpu.matmul %11, %59, %cst_46 {dimension_numbers = #tpu.dot_dimension_numbers<[1], [0], [0], [1], [0, 0, 1, 1], [], []>} : vector<8x32xf32>, vector<32x32xf32>, vector<8x32xf32> -> vector<8x32xf32>
      %c0_47 = arith.constant 0 : index
      %c0_48 = arith.constant 0 : index
      %61 = vector.load %arg12[%c0_47, %c0_48] : memref<64x32xf32, #tpu.memory_space<vmem>>, vector<64x32xf32>
      %cst_49 = arith.constant dense<0.000000e+00> : vector<8x32xf32>
      %62 = tpu.matmul %47, %61, %cst_49 {dimension_numbers = #tpu.dot_dimension_numbers<[1], [0], [0], [1], [0, 0, 1, 1], [], []>} : vector<8x64xf32>, vector<64x32xf32>, vector<8x32xf32> -> vector<8x32xf32>
      %63 = arith.addf %60, %62 : vector<8x32xf32>
      %c0_50 = arith.constant 0 : index
      %c0_51 = arith.constant 0 : index
      %64 = vector.load %arg15[%c0_50, %c0_51] : memref<32x32xf32, #tpu.memory_space<vmem>>, vector<32x32xf32>
      %cst_52 = arith.constant dense<0.000000e+00> : vector<8x32xf32>
      %65 = tpu.matmul %12, %64, %cst_52 {dimension_numbers = #tpu.dot_dimension_numbers<[1], [0], [0], [1], [0, 0, 1, 1], [], []>} : vector<8x32xf32>, vector<32x32xf32>, vector<8x32xf32> -> vector<8x32xf32>
      %66 = arith.addf %63, %65 : vector<8x32xf32>
      %c0_53 = arith.constant 0 : index
      %c0_54 = arith.constant 0 : index
      %67 = vector.load %arg18[%c0_53, %c0_54] : memref<1x32xf32, #tpu.memory_space<vmem>>, vector<1x32xf32>
      %68 = vector.broadcast %67 : vector<1x32xf32> to vector<8x32xf32>
      %69 = arith.addf %66, %68 : vector<8x32xf32>
      %c0_55 = arith.constant 0 : index
      %c0_56 = arith.constant 0 : index
      %70 = vector.load %arg10[%c0_55, %c0_56] : memref<32x32xf32, #tpu.memory_space<vmem>>, vector<32x32xf32>
      %cst_57 = arith.constant dense<0.000000e+00> : vector<8x32xf32>
      %71 = tpu.matmul %11, %70, %cst_57 {dimension_numbers = #tpu.dot_dimension_numbers<[1], [0], [0], [1], [0, 0, 1, 1], [], []>} : vector<8x32xf32>, vector<32x32xf32>, vector<8x32xf32> -> vector<8x32xf32>
      %c0_58 = arith.constant 0 : index
      %c0_59 = arith.constant 0 : index
      %72 = vector.load %arg13[%c0_58, %c0_59] : memref<64x32xf32, #tpu.memory_space<vmem>>, vector<64x32xf32>
      %cst_60 = arith.constant dense<0.000000e+00> : vector<8x32xf32>
      %73 = tpu.matmul %47, %72, %cst_60 {dimension_numbers = #tpu.dot_dimension_numbers<[1], [0], [0], [1], [0, 0, 1, 1], [], []>} : vector<8x64xf32>, vector<64x32xf32>, vector<8x32xf32> -> vector<8x32xf32>
      %74 = arith.addf %71, %73 : vector<8x32xf32>
      %c0_61 = arith.constant 0 : index
      %c0_62 = arith.constant 0 : index
      %75 = vector.load %arg19[%c0_61, %c0_62] : memref<1x32xf32, #tpu.memory_space<vmem>>, vector<1x32xf32>
      %76 = vector.broadcast %75 : vector<1x32xf32> to vector<8x32xf32>
      %77 = arith.addf %74, %76 : vector<8x32xf32>
      %c0_63 = arith.constant 0 : index
      %c0_64 = arith.constant 0 : index
      %78 = vector.load %arg16[%c0_63, %c0_64] : memref<32x32xf32, #tpu.memory_space<vmem>>, vector<32x32xf32>
      %cst_65 = arith.constant dense<0.000000e+00> : vector<8x32xf32>
      %79 = tpu.matmul %12, %78, %cst_65 {dimension_numbers = #tpu.dot_dimension_numbers<[1], [0], [0], [1], [0, 0, 1, 1], [], []>} : vector<8x32xf32>, vector<32x32xf32>, vector<8x32xf32> -> vector<8x32xf32>
      %c0_66 = arith.constant 0 : index
      %c0_67 = arith.constant 0 : index
      %80 = vector.load %arg20[%c0_66, %c0_67] : memref<1x32xf32, #tpu.memory_space<vmem>>, vector<1x32xf32>
      %81 = vector.broadcast %80 : vector<1x32xf32> to vector<8x32xf32>
      %82 = arith.addf %79, %81 : vector<8x32xf32>
      %83 = arith.negf %58 : vector<8x32xf32>
      %84 = math.exp %83 : vector<8x32xf32>
      %cst_68 = arith.constant 1.000000e+00 : f32
      %85 = vector.broadcast %cst_68 : f32 to vector<8x32xf32>
      %86 = arith.addf %85, %84 : vector<8x32xf32>
      %87 = arith.divf %85, %86 : vector<8x32xf32>
      %88 = arith.negf %69 : vector<8x32xf32>
      %89 = math.exp %88 : vector<8x32xf32>
      %cst_69 = arith.constant 1.000000e+00 : f32
      %90 = vector.broadcast %cst_69 : f32 to vector<8x32xf32>
      %91 = arith.addf %90, %89 : vector<8x32xf32>
      %92 = arith.divf %90, %91 : vector<8x32xf32>
      %93 = arith.mulf %87, %82 : vector<8x32xf32>
      %94 = arith.addf %77, %93 : vector<8x32xf32>
      %95 = math.tanh %94 : vector<8x32xf32>
      %cst_70 = arith.constant 1.000000e+00 : f32
      %96 = vector.broadcast %cst_70 : f32 to vector<8x32xf32>
      %97 = arith.subf %96, %92 : vector<8x32xf32>
      %98 = arith.mulf %97, %95 : vector<8x32xf32>
      %99 = arith.mulf %92, %12 : vector<8x32xf32>
      %100 = arith.addf %98, %99 : vector<8x32xf32>
      %c0_71 = arith.constant 0 : index
      %c0_72 = arith.constant 0 : index
      %101 = vector.load %arg25[%c0_71, %c0_72] : memref<8x32xf32, #tpu.memory_space<vmem>>, vector<8x32xf32>
      tpu.vector_store %arg25[%c0_71, %c0_72], %100 {strides = array<i32>} : memref<8x32xf32, #tpu.memory_space<vmem>>, vector<8x32xf32>,
    } else {
    }
    %c0 = arith.constant 0 : index
    %c0_1 = arith.constant 0 : index
    %3 = vector.load %arg25[%c0, %c0_1] : memref<8x32xf32, #tpu.memory_space<vmem>>, vector<8x32xf32>
    %c0_2 = arith.constant 0 : index
    %c0_3 = arith.constant 0 : index
    %4 = vector.load %arg24[%c0_2, %c0_3] : memref<8x32xf32, #tpu.memory_space<vmem>>, vector<8x32xf32>
    tpu.vector_store %arg24[%c0_2, %c0_3], %3 {strides = array<i32>} : memref<8x32xf32, #tpu.memory_space<vmem>>, vector<8x32xf32>,
    %c0_4 = arith.constant 0 : index
    %c0_5 = arith.constant 0 : index
    %5 = vector.load %arg21[%c0_4, %c0_5] : memref<32x128xf32, #tpu.memory_space<vmem>>, vector<32x128xf32>
    %cst = arith.constant dense<0.000000e+00> : vector<8x128xf32>
    %6 = tpu.matmul %3, %5, %cst {dimension_numbers = #tpu.dot_dimension_numbers<[1], [0], [0], [1], [0, 0, 1, 1], [], []>} : vector<8x32xf32>, vector<32x128xf32>, vector<8x128xf32> -> vector<8x128xf32>
    %c0_6 = arith.constant 0 : index
    %c0_7 = arith.constant 0 : index
    %7 = vector.load %arg22[%c0_6, %c0_7] : memref<1x128xf32, #tpu.memory_space<vmem>>, vector<1x128xf32>
    %8 = vector.broadcast %7 : vector<1x128xf32> to vector<8x128xf32>
    %9 = arith.addf %6, %8 : vector<8x128xf32>
    %c0_8 = arith.constant 0 : index
    %c0_9 = arith.constant 0 : index
    %10 = vector.load %arg23[%c0_8, %c0_9] : memref<8x128xf32, #tpu.memory_space<vmem>>, vector<8x128xf32>
    tpu.vector_store %arg23[%c0_8, %c0_9], %9 {strides = array<i32>} : memref<8x128xf32, #tpu.memory_space<vmem>>, vector<8x128xf32>,
    return
  }
  func.func @transform_0(%arg0: i32) -> (i32, i32) {
    %c0_i32 = arith.constant 0 : i32
    %c0_i32_0 = arith.constant 0 : i32
    %c0_i32_1 = arith.constant 0 : i32
    return %c0_i32, %c0_i32_0 : i32, i32
  }
  func.func @transform_1(%arg0: i32) -> (i32, i32) {
    %c0_i32 = arith.constant 0 : i32
    %c0_i32_0 = arith.constant 0 : i32
    %c0_i32_1 = arith.constant 0 : i32
    return %c0_i32, %c0_i32_0 : i32, i32
  }
  func.func @transform_2(%arg0: i32) -> (i32, i32, i32) {
    %c0_i32 = arith.constant 0 : i32
    %c0_i32_0 = arith.constant 0 : i32
    %c0_i32_1 = arith.constant 0 : i32
    %c0_i32_2 = arith.constant 0 : i32
    return %c0_i32, %c0_i32_0, %c0_i32_1 : i32, i32, i32
  }
  func.func @transform_3(%arg0: i32) -> (i32, i32) {
    %c0_i32 = arith.constant 0 : i32
    %c0_i32_0 = arith.constant 0 : i32
    %c0_i32_1 = arith.constant 0 : i32
    return %c0_i32, %c0_i32_0 : i32, i32
  }
  func.func @transform_4(%arg0: i32) -> (i32, i32) {
    %c0_i32 = arith.constant 0 : i32
    %c0_i32_0 = arith.constant 0 : i32
    %c0_i32_1 = arith.constant 0 : i32
    return %c0_i32, %c0_i32_0 : i32, i32
  }
  func.func @transform_5(%arg0: i32) -> (i32, i32) {
    %c0_i32 = arith.constant 0 : i32
    %c0_i32_0 = arith.constant 0 : i32
    %c0_i32_1 = arith.constant 0 : i32
    return %c0_i32, %c0_i32_0 : i32, i32
  }
  func.func @transform_6(%arg0: i32) -> (i32, i32) {
    %c0_i32 = arith.constant 0 : i32
    %c0_i32_0 = arith.constant 0 : i32
    %c0_i32_1 = arith.constant 0 : i32
    return %c0_i32, %c0_i32_0 : i32, i32
  }
  func.func @transform_7(%arg0: i32) -> (i32, i32) {
    %c0_i32 = arith.constant 0 : i32
    %c0_i32_0 = arith.constant 0 : i32
    %c0_i32_1 = arith.constant 0 : i32
    return %c0_i32, %c0_i32_0 : i32, i32
  }
  func.func @transform_8(%arg0: i32) -> (i32, i32) {
    %c0_i32 = arith.constant 0 : i32
    %c0_i32_0 = arith.constant 0 : i32
    %c0_i32_1 = arith.constant 0 : i32
    return %c0_i32, %c0_i32_0 : i32, i32
  }
  func.func @transform_9(%arg0: i32) -> (i32, i32) {
    %c0_i32 = arith.constant 0 : i32
    %c0_i32_0 = arith.constant 0 : i32
    %c0_i32_1 = arith.constant 0 : i32
    return %c0_i32, %c0_i32_0 : i32, i32
  }
  func.func @transform_10(%arg0: i32) -> (i32, i32) {
    %c0_i32 = arith.constant 0 : i32
    %c0_i32_0 = arith.constant 0 : i32
    %c0_i32_1 = arith.constant 0 : i32
    return %c0_i32, %c0_i32_0 : i32, i32
  }
  func.func @transform_11(%arg0: i32) -> (i32, i32) {
    %c0_i32 = arith.constant 0 : i32
    %c0_i32_0 = arith.constant 0 : i32
    %c0_i32_1 = arith.constant 0 : i32
    return %c0_i32, %c0_i32_0 : i32, i32
  }
  func.func @transform_12(%arg0: i32) -> (i32, i32) {
    %c0_i32 = arith.constant 0 : i32
    %c0_i32_0 = arith.constant 0 : i32
    %c0_i32_1 = arith.constant 0 : i32
    return %c0_i32, %c0_i32_0 : i32, i32
  }
  func.func @transform_13(%arg0: i32) -> (i32, i32) {
    %c0_i32 = arith.constant 0 : i32
    %c0_i32_0 = arith.constant 0 : i32
    %c0_i32_1 = arith.constant 0 : i32
    return %c0_i32, %c0_i32_0 : i32, i32
  }
  func.func @transform_14(%arg0: i32) -> (i32, i32) {
    %c0_i32 = arith.constant 0 : i32
    %c0_i32_0 = arith.constant 0 : i32
    %c0_i32_1 = arith.constant 0 : i32
    return %c0_i32, %c0_i32_0 : i32, i32
  }
  func.func @transform_15(%arg0: i32) -> (i32, i32) {
    %c0_i32 = arith.constant 0 : i32
    %c0_i32_0 = arith.constant 0 : i32
    %c0_i32_1 = arith.constant 0 : i32
    return %c0_i32, %c0_i32_0 : i32, i32
  }
  func.func @transform_16(%arg0: i32) -> (i32, i32) {
    %c0_i32 = arith.constant 0 : i32
    %c0_i32_0 = arith.constant 0 : i32
    %c0_i32_1 = arith.constant 0 : i32
    return %c0_i32, %c0_i32_0 : i32, i32
  }
  func.func @transform_17(%arg0: i32) -> (i32, i32) {
    %c0_i32 = arith.constant 0 : i32
    %c0_i32_0 = arith.constant 0 : i32
    %c0_i32_1 = arith.constant 0 : i32
    return %c0_i32, %c0_i32_0 : i32, i32
  }
  func.func @transform_18(%arg0: i32) -> (i32, i32) {
    %c0_i32 = arith.constant 0 : i32
    %c0_i32_0 = arith.constant 0 : i32
    %c0_i32_1 = arith.constant 0 : i32
    return %c0_i32, %c0_i32_0 : i32, i32
  }
  func.func @transform_19(%arg0: i32) -> (i32, i32) {
    %c0_i32 = arith.constant 0 : i32
    %c0_i32_0 = arith.constant 0 : i32
    %c0_i32_1 = arith.constant 0 : i32
    return %c0_i32, %c0_i32_0 : i32, i32
  }
  func.func @transform_20(%arg0: i32) -> (i32, i32) {
    %c0_i32 = arith.constant 0 : i32
    %c0_i32_0 = arith.constant 0 : i32
    return %c0_i32, %arg0 : i32, i32
  }
  func.func @transform_21(%arg0: i32) -> (i32, i32) {
    %c0_i32 = arith.constant 0 : i32
    %c0_i32_0 = arith.constant 0 : i32
    return %c0_i32, %arg0 : i32, i32
  }
  func.func @transform_22(%arg0: i32) -> (i32, i32) {
    %c0_i32 = arith.constant 0 : i32
    %c0_i32_0 = arith.constant 0 : i32
    return %c0_i32, %arg0 : i32, i32
  }
  func.func @transform_23(%arg0: i32) -> (i32, i32) {
    %c0_i32 = arith.constant 0 : i32
    %c0_i32_0 = arith.constant 0 : i32
    %c0_i32_1 = arith.constant 0 : i32
    return %c0_i32, %c0_i32_0 : i32, i32
  }
}

</mosaic_0001>

<llo_original>
// kernel: tpu_custom_call.1
$region0: #{tpu_custom_call.1}
  #allocation0 [shape = 'u32[]', space=smem, size = 0x4, offset = 0x4, fixed_abs, tag = 'smem constant byte address 0x4 - core index']
  #allocation1 [shape = 'u32[144,128]{1,0:T(1,128)}', space=vmem, size = 0x12000, scoped, tag = 'internal scratch']
  #allocation2 [shape = 'f32[8,32]{1,0:T(8,128)}', space=vmem, size = 0x1000, scoped, tag = 'scratch operand']
  %s0 = inlined_call_operand.hbm [shape: f32[8,32], index: 0, kind: input, shape index: {}]
  %s1 = inlined_call_operand.hbm [shape: f32[8,32], index: 1, kind: input, shape index: {}]
  %s2 = inlined_call_operand.hbm [shape: f32[8,8,64], index: 2, kind: input, shape index: {}]
  %s3 = inlined_call_operand.hbm [shape: f32[8,8], index: 3, kind: input, shape index: {}]
  %s4 = inlined_call_operand.hbm [shape: f32[64,32], index: 4, kind: input, shape index: {}]
  %s5 = inlined_call_operand.hbm [shape: f32[32,32], index: 5, kind: input, shape index: {}]
  %s6 = inlined_call_operand.hbm [shape: f32[1,32], index: 6, kind: input, shape index: {}]
  %s7 = inlined_call_operand.hbm [shape: f32[32,32], index: 7, kind: input, shape index: {}]
  %s8 = inlined_call_operand.hbm [shape: f32[32,32], index: 8, kind: input, shape index: {}]
  %s9 = inlined_call_operand.hbm [shape: f32[32,32], index: 9, kind: input, shape index: {}]
  %s10 = inlined_call_operand.hbm [shape: f32[64,32], index: 10, kind: input, shape index: {}]
  %s11 = inlined_call_operand.hbm [shape: f32[64,32], index: 11, kind: input, shape index: {}]
  %s12 = inlined_call_operand.hbm [shape: f32[64,32], index: 12, kind: input, shape index: {}]
  %s13 = inlined_call_operand.hbm [shape: f32[32,32], index: 13, kind: input, shape index: {}]
  %s14 = inlined_call_operand.hbm [shape: f32[32,32], index: 14, kind: input, shape index: {}]
  %s15 = inlined_call_operand.hbm [shape: f32[32,32], index: 15, kind: input, shape index: {}]
  %s16 = inlined_call_operand.hbm [shape: f32[1,32], index: 16, kind: input, shape index: {}]
  %s17 = inlined_call_operand.hbm [shape: f32[1,32], index: 17, kind: input, shape index: {}]
  %s18 = inlined_call_operand.hbm [shape: f32[1,32], index: 18, kind: input, shape index: {}]
  %s19 = inlined_call_operand.hbm [shape: f32[1,32], index: 19, kind: input, shape index: {}]
  %s20 = inlined_call_operand.hbm [shape: f32[32,256], index: 20, kind: input, shape index: {}]
  %s21 = inlined_call_operand.hbm [shape: f32[1,256], index: 21, kind: input, shape index: {}]
  %s22 = inlined_call_operand.hbm [shape: f32[8,256], index: 22, kind: output, shape index: {0}]
  %s23 = inlined_call_operand.hbm [shape: f32[8,32], index: 23, kind: output, shape index: {1}]
  %24 = xla_tuple %s22, %s23
  %s25 = sld [smem:[#allocation0]]
  $region221: #{tpu_custom_call.1} parent=0
    _
  %s27 = ssub.s32 1, %s25
  %s28 = scalar_select 0, %s27, %s25
  $region1: #{tpu_custom_call.1} parent=0
    #allocation3 [shape = 'u8[4096]{0}', space=vmem, size = 0x1000, scoped, tag = 'input window, operand 0, single buffered']
    #allocation4 [shape = 's32[2]{0}', space=sflag, size = 0x8, scoped, tag = 'scoped memory for tpu_custom_call.1']
    #allocation5 [shape = 's32[2]{0}', space=sflag, size = 0x8, scoped, tag = 'scoped memory for tpu_custom_call.1']
    #allocation6 [shape = 'u8[4096]{0}', space=vmem, size = 0x1000, scoped, tag = 'input window, operand 1, single buffered']
    #allocation7 [shape = 's32[1]{0}', space=sflag, size = 0x4, scoped, tag = 'scoped memory for tpu_custom_call.1']
    #allocation8 [shape = 'u8[32768]{0}', space=vmem, size = 0x8000, scoped, tag = 'input window, operand 2, single buffered']
    #allocation9 [shape = 'u8[4096]{0}', space=vmem, size = 0x1000, scoped, tag = 'input window, operand 3, single buffered']
    #allocation10 [shape = 's32[1]{0}', space=sflag, size = 0x4, scoped, tag = 'scoped memory for tpu_custom_call.1']
    #allocation11 [shape = 'u8[32768]{0}', space=vmem, size = 0x8000, scoped, tag = 'input window, operand 4, single buffered']
    #allocation12 [shape = 'u8[16384]{0}', space=vmem, size = 0x4000, scoped, tag = 'input window, operand 5, single buffered']
    #allocation13 [shape = 's32[1]{0}', space=sflag, size = 0x4, scoped, tag = 'scoped memory for tpu_custom_call.1']
    #allocation14 [shape = 'u8[512]{0}', space=vmem, size = 0x400, scoped, tag = 'input window, operand 6, single buffered']
    #allocation15 [shape = 'u8[16384]{0}', space=vmem, size = 0x4000, scoped, tag = 'input window, operand 7, single buffered']
    #allocation16 [shape = 's32[1]{0}', space=sflag, size = 0x4, scoped, tag = 'scoped memory for tpu_custom_call.1']
    #allocation17 [shape = 'u8[16384]{0}', space=vmem, size = 0x4000, scoped, tag = 'input window, operand 8, single buffered']
    #allocation18 [shape = 'u8[16384]{0}', space=vmem, size = 0x4000, scoped, tag = 'input window, operand 9, single buffered']
    #allocation19 [shape = 's32[1]{0}', space=sflag, size = 0x4, scoped, tag = 'scoped memory for tpu_custom_call.1']
    #allocation20 [shape = 'u8[32768]{0}', space=vmem, size = 0x8000, scoped, tag = 'input window, operand 10, single buffered']
    #allocation21 [shape = 'u8[32768]{0}', space=vmem, size = 0x8000, scoped, tag = 'input window, operand 11, single buffered']
    #allocation22 [shape = 's32[1]{0}', space=sflag, size = 0x4, scoped, tag = 'scoped memory for tpu_custom_call.1']
    #allocation23 [shape = 'u8[32768]{0}', space=vmem, size = 0x8000, scoped, tag = 'input window, operand 12, single buffered']
    #allocation24 [shape = 'u8[16384]{0}', space=vmem, size = 0x4000, scoped, tag = 'input window, operand 13, single buffered']
    #allocation25 [shape = 's32[1]{0}', space=sflag, size = 0x4, scoped, tag = 'scoped memory for tpu_custom_call.1']
    #allocation26 [shape = 'u8[16384]{0}', space=vmem, size = 0x4000, scoped, tag = 'input window, operand 14, single buffered']
    #allocation27 [shape = 'u8[16384]{0}', space=vmem, size = 0x4000, scoped, tag = 'input window, operand 15, single buffered']
    #allocation28 [shape = 's32[1]{0}', space=sflag, size = 0x4, scoped, tag = 'scoped memory for tpu_custom_call.1']
    #allocation29 [shape = 'u8[512]{0}', space=vmem, size = 0x400, scoped, tag = 'input window, operand 16, single buffered']
    #allocation30 [shape = 'u8[512]{0}', space=vmem, size = 0x400, scoped, tag = 'input window, operand 17, single buffered']
    #allocation31 [shape = 's32[1]{0}', space=sflag, size = 0x4, scoped, tag = 'scoped memory for tpu_custom_call.1']
    #allocation32 [shape = 'u8[512]{0}', space=vmem, size = 0x400, scoped, tag = 'input window, operand 18, single buffered']
    #allocation33 [shape = 'u8[512]{0}', space=vmem, size = 0x400, scoped, tag = 'input window, operand 19, single buffered']
    #allocation34 [shape = 's32[1]{0}', space=sflag, size = 0x4, scoped, tag = 'scoped memory for tpu_custom_call.1']
    #allocation35 [shape = 'u8[32768]{0}', space=vmem, size = 0x8000, scoped, tag = 'input window, operand 20']
    #allocation36 [shape = 'u8[1024]{0}', space=vmem, size = 0x400, scoped, tag = 'input window, operand 21']
    #allocation37 [shape = 'u8[8192]{0}', space=vmem, size = 0x2000, scoped, tag = 'output window, operand 0']
    #allocation38 [shape = 'u8[4096]{0}', space=vmem, size = 0x1000, scoped, tag = 'output window, operand 1, single buffered']
    #allocation39 [shape = 's32[1]{0}', space=sflag, size = 0x4, scoped, tag = 'scoped memory for tpu_custom_call.1']
    %29 = vsyncpa [#allocation4], 0
    %30 = vsyncpa [#allocation7], 0
    %31 = vsyncpa [#allocation10], 0
    %32 = vsyncpa [#allocation13], 0
    %33 = vsyncpa [#allocation16], 0
    %34 = vsyncpa [#allocation19], 0
    %35 = vsyncpa [#allocation22], 0
    %36 = vsyncpa [#allocation25], 0
    %37 = vsyncpa [#allocation28], 0
    %38 = vsyncpa [#allocation31], 0
    %39 = vsyncpa [#allocation34], 0
    %40 = vsyncpa [#allocation5], 0
    %s41 = scalar_lea.sflag [#allocation5], 1
    %42 = vsyncpa %s41, 0
    %43 = vsyncpa [#allocation39], 0
    loop: start=0, step=1, limit=4
    $region2: #{tpu_custom_call.1} parent=1 // loop_pre_header
      _
    $region3: #{tpu_custom_call.1} parent=1 // loop_header
      %s45 = sphi 0, %s49
      %p46 = scmp.ge.s32.totalorder %s45, 4
      %s53 = sphi 0, %s53
      %s55 = sphi 0, %s53
      %s56 = sphi 0, %s55
      %s70 = sphi 0, %s56
      %s74 = sphi 0, %s74
      %s76 = sphi 0, %s74
      %s77 = sphi 0, %s76
      %s91 = sphi 0, %s77
      %s95 = sphi 0, %s95
      %s97 = sphi 0, %s95
      %s98 = sphi 0, %s97
      %s112 = sphi 0, %s98
      %s116 = sphi 0, %s116
      %s118 = sphi 0, %s116
      %s119 = sphi 0, %s118
      %s133 = sphi 0, %s119
      %s137 = sphi 0, %s137
      %s139 = sphi 0, %s137
      %s140 = sphi 0, %s139
      %s154 = sphi 0, %s140
      %s158 = sphi 0, %s158
      %s160 = sphi 0, %s158
      %s161 = sphi 0, %s160
      %s175 = sphi 0, %s161
      %s179 = sphi 0, %s179
      %s181 = sphi 0, %s179
      %s182 = sphi 0, %s181
      %s196 = sphi 0, %s182
      %s200 = sphi 0, %s200
      %s202 = sphi 0, %s200
      %s203 = sphi 0, %s202
      %s217 = sphi 0, %s203
      %s221 = sphi 0, %s221
      %s223 = sphi 0, %s221
      %s224 = sphi 0, %s223
      %s238 = sphi 0, %s224
      %s242 = sphi 0, %s242
      %s244 = sphi 0, %s242
      %s245 = sphi 0, %s244
      %s259 = sphi 0, %s245
      %s263 = sphi 0, %s263
      %s265 = sphi 0, %s263
      %s266 = sphi 0, %s265
      %s280 = sphi 0, %s266
      %s284 = sphi 0, %s284
      %s286 = sphi 0, %s284
      %s287 = sphi 0, %s286
      %s301 = sphi 0, %s287
      %s305 = sphi 0, %s305
      %s307 = sphi 0, %s305
      %s308 = sphi 0, %s307
      %s322 = sphi 0, %s308
      %s326 = sphi 0, %s326
      %s328 = sphi 0, %s326
      %s329 = sphi 0, %s328
      %s343 = sphi 0, %s329
      %s347 = sphi 0, %s347
      %s349 = sphi 0, %s347
      %s350 = sphi 0, %s349
      %s364 = sphi 0, %s350
      %s368 = sphi 0, %s368
      %s370 = sphi 0, %s368
      %s371 = sphi 0, %s370
      %s385 = sphi 0, %s371
      %s389 = sphi 0, %s389
      %s391 = sphi 0, %s389
      %s392 = sphi 0, %s391
      %s406 = sphi 0, %s392
      %s410 = sphi 0, %s410
      %s412 = sphi 0, %s410
      %s413 = sphi 0, %s412
      %s427 = sphi 0, %s413
      %s431 = sphi 0, %s431
      %s433 = sphi 0, %s431
      %s434 = sphi 0, %s433
      %s448 = sphi 0, %s434
      %s452 = sphi 0, %s452
      %s454 = sphi 0, %s452
      %s455 = sphi 0, %s454
      %s469 = sphi 0, %s455
      %s475 = sphi 0, %s477
      %s478 = sphi 0, %s475
      %s479 = sphi 0, %s478
      %s495 = sphi 0, %s479
      %s501 = sphi 0, %s503
      %s504 = sphi 0, %s501
      %s505 = sphi 0, %s504
      %s521 = sphi 0, %s505
      %s527 = sphi 0, %s529
      %s530 = sphi 0, %s527
      %s531 = sphi 0, %s530
      %s547 = sphi 0, %s531
      %s551 = sphi 0, %s551
      %s553 = sphi 0, %s551
      %s554 = sphi 0, %s553
      %s568 = sphi 0, %s554
    $region4: #{tpu_custom_call.1} parent=1 // loop_header_branch
      %48 = sbr.rel (%p46) target = $region8
    $region5: #{tpu_custom_call.1} parent=1 // loop_body
      %s50 = ssub.s32 %s45, 1
      %s51 = ssub.s32 %s45, 2
      %s52 = sadd.s32 %s45, 1
      %s54 = sadd.s32 %s53, 1
      %p57 = scmp.eq.s32.totalorder %s45, 1
      %p58 = scmp.ne.s32.totalorder %s53, %s55
      %p59 = scmp.eq.s32.totalorder %s45, 0
      %p60 = por %p58, %p59
      %p61 = scmp.ne.s32.totalorder %s53, %s55
      %p62 = scmp.eq.s32.totalorder %s50, 1
      %p63 = por %p61, %p62
      %p64 = scmp.ne.s32.totalorder %s55, %s56
      %p65 = scmp.eq.s32.totalorder %s50, 0
      %p66 = por %p64, %p65
      %p67 = scmp.ne.s32.totalorder %s55, %s56
      %p68 = scmp.eq.s32.totalorder %s51, 1
      %p69 = por %p67, %p68
      %p71 = scmp.ne.s32.totalorder %s56, %s70
      %p72 = scmp.eq.s32.totalorder %s51, 0
      %p73 = por %p71, %p72
      %s75 = sadd.s32 %s74, 1
      %p78 = scmp.eq.s32.totalorder %s45, 1
      %p79 = scmp.ne.s32.totalorder %s74, %s76
      %p80 = scmp.eq.s32.totalorder %s45, 0
      %p81 = por %p79, %p80
      %p82 = scmp.ne.s32.totalorder %s74, %s76
      %p83 = scmp.eq.s32.totalorder %s50, 1
      %p84 = por %p82, %p83
      %p85 = scmp.ne.s32.totalorder %s76, %s77
      %p86 = scmp.eq.s32.totalorder %s50, 0
      %p87 = por %p85, %p86
      %p88 = scmp.ne.s32.totalorder %s76, %s77
      %p89 = scmp.eq.s32.totalorder %s51, 1
      %p90 = por %p88, %p89
      %p92 = scmp.ne.s32.totalorder %s77, %s91
      %p93 = scmp.eq.s32.totalorder %s51, 0
      %p94 = por %p92, %p93
      %s96 = sadd.s32 %s95, 1
      %p99 = scmp.eq.s32.totalorder %s45, 1
      %p100 = scmp.ne.s32.totalorder %s95, %s97
      %p101 = scmp.eq.s32.totalorder %s45, 0
      %p102 = por %p100, %p101
      %p103 = scmp.ne.s32.totalorder %s95, %s97
      %p104 = scmp.eq.s32.totalorder %s50, 1
      %p105 = por %p103, %p104
      %p106 = scmp.ne.s32.totalorder %s97, %s98
      %p107 = scmp.eq.s32.totalorder %s50, 0
      %p108 = por %p106, %p107
      %p109 = scmp.ne.s32.totalorder %s97, %s98
      %p110 = scmp.eq.s32.totalorder %s51, 1
      %p111 = por %p109, %p110
      %p113 = scmp.ne.s32.totalorder %s98, %s112
      %p114 = scmp.eq.s32.totalorder %s51, 0
      %p115 = por %p113, %p114
      %s117 = sadd.s32 %s116, 1
      %p120 = scmp.eq.s32.totalorder %s45, 1
      %p121 = scmp.ne.s32.totalorder %s116, %s118
      %p122 = scmp.eq.s32.totalorder %s45, 0
      %p123 = por %p121, %p122
      %p124 = scmp.ne.s32.totalorder %s116, %s118
      %p125 = scmp.eq.s32.totalorder %s50, 1
      %p126 = por %p124, %p125
      %p127 = scmp.ne.s32.totalorder %s118, %s119
      %p128 = scmp.eq.s32.totalorder %s50, 0
      %p129 = por %p127, %p128
      %p130 = scmp.ne.s32.totalorder %s118, %s119
      %p131 = scmp.eq.s32.totalorder %s51, 1
      %p132 = por %p130, %p131
      %p134 = scmp.ne.s32.totalorder %s119, %s133
      %p135 = scmp.eq.s32.totalorder %s51, 0
      %p136 = por %p134, %p135
      %s138 = sadd.s32 %s137, 1
      %p141 = scmp.eq.s32.totalorder %s45, 1
      %p142 = scmp.ne.s32.totalorder %s137, %s139
      %p143 = scmp.eq.s32.totalorder %s45, 0
      %p144 = por %p142, %p143
      %p145 = scmp.ne.s32.totalorder %s137, %s139
      %p146 = scmp.eq.s32.totalorder %s50, 1
      %p147 = por %p145, %p146
      %p148 = scmp.ne.s32.totalorder %s139, %s140
      %p149 = scmp.eq.s32.totalorder %s50, 0
      %p150 = por %p148, %p149
      %p151 = scmp.ne.s32.totalorder %s139, %s140
      %p152 = scmp.eq.s32.totalorder %s51, 1
      %p153 = por %p151, %p152
      %p155 = scmp.ne.s32.totalorder %s140, %s154
      %p156 = scmp.eq.s32.totalorder %s51, 0
      %p157 = por %p155, %p156
      %s159 = sadd.s32 %s158, 1
      %p162 = scmp.eq.s32.totalorder %s45, 1
      %p163 = scmp.ne.s32.totalorder %s158, %s160
      %p164 = scmp.eq.s32.totalorder %s45, 0
      %p165 = por %p163, %p164
      %p166 = scmp.ne.s32.totalorder %s158, %s160
      %p167 = scmp.eq.s32.totalorder %s50, 1
      %p168 = por %p166, %p167
      %p169 = scmp.ne.s32.totalorder %s160, %s161
      %p170 = scmp.eq.s32.totalorder %s50, 0
      %p171 = por %p169, %p170
      %p172 = scmp.ne.s32.totalorder %s160, %s161
      %p173 = scmp.eq.s32.totalorder %s51, 1
      %p174 = por %p172, %p173
      %p176 = scmp.ne.s32.totalorder %s161, %s175
      %p177 = scmp.eq.s32.totalorder %s51, 0
      %p178 = por %p176, %p177
      %s180 = sadd.s32 %s179, 1
      %p183 = scmp.eq.s32.totalorder %s45, 1
      %p184 = scmp.ne.s32.totalorder %s179, %s181
      %p185 = scmp.eq.s32.totalorder %s45, 0
      %p186 = por %p184, %p185
      %p187 = scmp.ne.s32.totalorder %s179, %s181
      %p188 = scmp.eq.s32.totalorder %s50, 1
      %p189 = por %p187, %p188
      %p190 = scmp.ne.s32.totalorder %s181, %s182
      %p191 = scmp.eq.s32.totalorder %s50, 0
      %p192 = por %p190, %p191
      %p193 = scmp.ne.s32.totalorder %s181, %s182
      %p194 = scmp.eq.s32.totalorder %s51, 1
      %p195 = por %p193, %p194
      %p197 = scmp.ne.s32.totalorder %s182, %s196
      %p198 = scmp.eq.s32.totalorder %s51, 0
      %p199 = por %p197, %p198
      %s201 = sadd.s32 %s200, 1
      %p204 = scmp.eq.s32.totalorder %s45, 1
      %p205 = scmp.ne.s32.totalorder %s200, %s202
      %p206 = scmp.eq.s32.totalorder %s45, 0
      %p207 = por %p205, %p206
      %p208 = scmp.ne.s32.totalorder %s200, %s202
      %p209 = scmp.eq.s32.totalorder %s50, 1
      %p210 = por %p208, %p209
      %p211 = scmp.ne.s32.totalorder %s202, %s203
      %p212 = scmp.eq.s32.totalorder %s50, 0
      %p213 = por %p211, %p212
      %p214 = scmp.ne.s32.totalorder %s202, %s203
      %p215 = scmp.eq.s32.totalorder %s51, 1
      %p216 = por %p214, %p215
      %p218 = scmp.ne.s32.totalorder %s203, %s217
      %p219 = scmp.eq.s32.totalorder %s51, 0
      %p220 = por %p218, %p219
      %s222 = sadd.s32 %s221, 1
      %p225 = scmp.eq.s32.totalorder %s45, 1
      %p226 = scmp.ne.s32.totalorder %s221, %s223
      %p227 = scmp.eq.s32.totalorder %s45, 0
      %p228 = por %p226, %p227
      %p229 = scmp.ne.s32.totalorder %s221, %s223
      %p230 = scmp.eq.s32.totalorder %s50, 1
      %p231 = por %p229, %p230
      %p232 = scmp.ne.s32.totalorder %s223, %s224
      %p233 = scmp.eq.s32.totalorder %s50, 0
      %p234 = por %p232, %p233
      %p235 = scmp.ne.s32.totalorder %s223, %s224
      %p236 = scmp.eq.s32.totalorder %s51, 1
      %p237 = por %p235, %p236
      %p239 = scmp.ne.s32.totalorder %s224, %s238
      %p240 = scmp.eq.s32.totalorder %s51, 0
      %p241 = por %p239, %p240
      %s243 = sadd.s32 %s242, 1
      %p246 = scmp.eq.s32.totalorder %s45, 1
      %p247 = scmp.ne.s32.totalorder %s242, %s244
      %p248 = scmp.eq.s32.totalorder %s45, 0
      %p249 = por %p247, %p248
      %p250 = scmp.ne.s32.totalorder %s242, %s244
      %p251 = scmp.eq.s32.totalorder %s50, 1
      %p252 = por %p250, %p251
      %p253 = scmp.ne.s32.totalorder %s244, %s245
      %p254 = scmp.eq.s32.totalorder %s50, 0
      %p255 = por %p253, %p254
      %p256 = scmp.ne.s32.totalorder %s244, %s245
      %p257 = scmp.eq.s32.totalorder %s51, 1
      %p258 = por %p256, %p257
      %p260 = scmp.ne.s32.totalorder %s245, %s259
      %p261 = scmp.eq.s32.totalorder %s51, 0
      %p262 = por %p260, %p261
      %s264 = sadd.s32 %s263, 1
      %p267 = scmp.eq.s32.totalorder %s45, 1
      %p268 = scmp.ne.s32.totalorder %s263, %s265
      %p269 = scmp.eq.s32.totalorder %s45, 0
      %p270 = por %p268, %p269
      %p271 = scmp.ne.s32.totalorder %s263, %s265
      %p272 = scmp.eq.s32.totalorder %s50, 1
      %p273 = por %p271, %p272
      %p274 = scmp.ne.s32.totalorder %s265, %s266
      %p275 = scmp.eq.s32.totalorder %s50, 0
      %p276 = por %p274, %p275
      %p277 = scmp.ne.s32.totalorder %s265, %s266
      %p278 = scmp.eq.s32.totalorder %s51, 1
      %p279 = por %p277, %p278
      %p281 = scmp.ne.s32.totalorder %s266, %s280
      %p282 = scmp.eq.s32.totalorder %s51, 0
      %p283 = por %p281, %p282
      %s285 = sadd.s32 %s284, 1
      %p288 = scmp.eq.s32.totalorder %s45, 1
      %p289 = scmp.ne.s32.totalorder %s284, %s286
      %p290 = scmp.eq.s32.totalorder %s45, 0
      %p291 = por %p289, %p290
      %p292 = scmp.ne.s32.totalorder %s284, %s286
      %p293 = scmp.eq.s32.totalorder %s50, 1
      %p294 = por %p292, %p293
      %p295 = scmp.ne.s32.totalorder %s286, %s287
      %p296 = scmp.eq.s32.totalorder %s50, 0
      %p297 = por %p295, %p296
      %p298 = scmp.ne.s32.totalorder %s286, %s287
      %p299 = scmp.eq.s32.totalorder %s51, 1
      %p300 = por %p298, %p299
      %p302 = scmp.ne.s32.totalorder %s287, %s301
      %p303 = scmp.eq.s32.totalorder %s51, 0
      %p304 = por %p302, %p303
      %s306 = sadd.s32 %s305, 1
      %p309 = scmp.eq.s32.totalorder %s45, 1
      %p310 = scmp.ne.s32.totalorder %s305, %s307
      %p311 = scmp.eq.s32.totalorder %s45, 0
      %p312 = por %p310, %p311
      %p313 = scmp.ne.s32.totalorder %s305, %s307
      %p314 = scmp.eq.s32.totalorder %s50, 1
      %p315 = por %p313, %p314
      %p316 = scmp.ne.s32.totalorder %s307, %s308
      %p317 = scmp.eq.s32.totalorder %s50, 0
      %p318 = por %p316, %p317
      %p319 = scmp.ne.s32.totalorder %s307, %s308
      %p320 = scmp.eq.s32.totalorder %s51, 1
      %p321 = por %p319, %p320
      %p323 = scmp.ne.s32.totalorder %s308, %s322
      %p324 = scmp.eq.s32.totalorder %s51, 0
      %p325 = por %p323, %p324
      %s327 = sadd.s32 %s326, 1
      %p330 = scmp.eq.s32.totalorder %s45, 1
      %p331 = scmp.ne.s32.totalorder %s326, %s328
      %p332 = scmp.eq.s32.totalorder %s45, 0
      %p333 = por %p331, %p332
      %p334 = scmp.ne.s32.totalorder %s326, %s328
      %p335 = scmp.eq.s32.totalorder %s50, 1
      %p336 = por %p334, %p335
      %p337 = scmp.ne.s32.totalorder %s328, %s329
      %p338 = scmp.eq.s32.totalorder %s50, 0
      %p339 = por %p337, %p338
      %p340 = scmp.ne.s32.totalorder %s328, %s329
      %p341 = scmp.eq.s32.totalorder %s51, 1
      %p342 = por %p340, %p341
      %p344 = scmp.ne.s32.totalorder %s329, %s343
      %p345 = scmp.eq.s32.totalorder %s51, 0
      %p346 = por %p344, %p345
      %s348 = sadd.s32 %s347, 1
      %p351 = scmp.eq.s32.totalorder %s45, 1
      %p352 = scmp.ne.s32.totalorder %s347, %s349
      %p353 = scmp.eq.s32.totalorder %s45, 0
      %p354 = por %p352, %p353
      %p355 = scmp.ne.s32.totalorder %s347, %s349
      %p356 = scmp.eq.s32.totalorder %s50, 1
      %p357 = por %p355, %p356
      %p358 = scmp.ne.s32.totalorder %s349, %s350
      %p359 = scmp.eq.s32.totalorder %s50, 0
      %p360 = por %p358, %p359
      %p361 = scmp.ne.s32.totalorder %s349, %s350
      %p362 = scmp.eq.s32.totalorder %s51, 1
      %p363 = por %p361, %p362
      %p365 = scmp.ne.s32.totalorder %s350, %s364
      %p366 = scmp.eq.s32.totalorder %s51, 0
      %p367 = por %p365, %p366
      %s369 = sadd.s32 %s368, 1
      %p372 = scmp.eq.s32.totalorder %s45, 1
      %p373 = scmp.ne.s32.totalorder %s368, %s370
      %p374 = scmp.eq.s32.totalorder %s45, 0
      %p375 = por %p373, %p374
      %p376 = scmp.ne.s32.totalorder %s368, %s370
      %p377 = scmp.eq.s32.totalorder %s50, 1
      %p378 = por %p376, %p377
      %p379 = scmp.ne.s32.totalorder %s370, %s371
      %p380 = scmp.eq.s32.totalorder %s50, 0
      %p381 = por %p379, %p380
      %p382 = scmp.ne.s32.totalorder %s370, %s371
      %p383 = scmp.eq.s32.totalorder %s51, 1
      %p384 = por %p382, %p383
      %p386 = scmp.ne.s32.totalorder %s371, %s385
      %p387 = scmp.eq.s32.totalorder %s51, 0
      %p388 = por %p386, %p387
      %s390 = sadd.s32 %s389, 1
      %p393 = scmp.eq.s32.totalorder %s45, 1
      %p394 = scmp.ne.s32.totalorder %s389, %s391
      %p395 = scmp.eq.s32.totalorder %s45, 0
      %p396 = por %p394, %p395
      %p397 = scmp.ne.s32.totalorder %s389, %s391
      %p398 = scmp.eq.s32.totalorder %s50, 1
      %p399 = por %p397, %p398
      %p400 = scmp.ne.s32.totalorder %s391, %s392
      %p401 = scmp.eq.s32.totalorder %s50, 0
      %p402 = por %p400, %p401
      %p403 = scmp.ne.s32.totalorder %s391, %s392
      %p404 = scmp.eq.s32.totalorder %s51, 1
      %p405 = por %p403, %p404
      %p407 = scmp.ne.s32.totalorder %s392, %s406
      %p408 = scmp.eq.s32.totalorder %s51, 0
      %p409 = por %p407, %p408
      %s411 = sadd.s32 %s410, 1
      %p414 = scmp.eq.s32.totalorder %s45, 1
      %p415 = scmp.ne.s32.totalorder %s410, %s412
      %p416 = scmp.eq.s32.totalorder %s45, 0
      %p417 = por %p415, %p416
      %p418 = scmp.ne.s32.totalorder %s410, %s412
      %p419 = scmp.eq.s32.totalorder %s50, 1
      %p420 = por %p418, %p419
      %p421 = scmp.ne.s32.totalorder %s412, %s413
      %p422 = scmp.eq.s32.totalorder %s50, 0
      %p423 = por %p421, %p422
      %p424 = scmp.ne.s32.totalorder %s412, %s413
      %p425 = scmp.eq.s32.totalorder %s51, 1
      %p426 = por %p424, %p425
      %p428 = scmp.ne.s32.totalorder %s413, %s427
      %p429 = scmp.eq.s32.totalorder %s51, 0
      %p430 = por %p428, %p429
      %s432 = sadd.s32 %s431, 1
      %p435 = scmp.eq.s32.totalorder %s45, 1
      %p436 = scmp.ne.s32.totalorder %s431, %s433
      %p437 = scmp.eq.s32.totalorder %s45, 0
      %p438 = por %p436, %p437
      %p439 = scmp.ne.s32.totalorder %s431, %s433
      %p440 = scmp.eq.s32.totalorder %s50, 1
      %p441 = por %p439, %p440
      %p442 = scmp.ne.s32.totalorder %s433, %s434
      %p443 = scmp.eq.s32.totalorder %s50, 0
      %p444 = por %p442, %p443
      %p445 = scmp.ne.s32.totalorder %s433, %s434
      %p446 = scmp.eq.s32.totalorder %s51, 1
      %p447 = por %p445, %p446
      %p449 = scmp.ne.s32.totalorder %s434, %s448
      %p450 = scmp.eq.s32.totalorder %s51, 0
      %p451 = por %p449, %p450
      %s453 = sadd.s32 %s452, 1
      %p456 = scmp.eq.s32.totalorder %s45, 1
      %p457 = scmp.ne.s32.totalorder %s452, %s454
      %p458 = scmp.eq.s32.totalorder %s45, 0
      %p459 = por %p457, %p458
      %p460 = scmp.ne.s32.totalorder %s452, %s454
      %p461 = scmp.eq.s32.totalorder %s50, 1
      %p462 = por %p460, %p461
      %p463 = scmp.ne.s32.totalorder %s454, %s455
      %p464 = scmp.eq.s32.totalorder %s50, 0
      %p465 = por %p463, %p464
      %p466 = scmp.ne.s32.totalorder %s454, %s455
      %p467 = scmp.eq.s32.totalorder %s51, 1
      %p468 = por %p466, %p467
      %p470 = scmp.ne.s32.totalorder %s455, %s469
      %p471 = scmp.eq.s32.totalorder %s51, 0
      %p472 = por %p470, %p471
      %s473 = ssub.s32 %s45, %s52
      %p474 = scmp.eq.s32.totalorder %s473, 0
      %s476 = sadd.s32 %s475, 1
      %s477 = scalar_select %p474, %s475, %s476
      %p480 = pneg %p474
      %p481 = scmp.eq.s32.totalorder %s45, 1
      %p482 = por %p480, %p481
      %p483 = scmp.ne.s32.totalorder %s475, %s478
      %p484 = scmp.eq.s32.totalorder %s45, 0
      %p485 = por %p483, %p484
      %p486 = scmp.ne.s32.totalorder %s475, %s478
      %p487 = scmp.eq.s32.totalorder %s50, 1
      %p488 = por %p486, %p487
      %p489 = scmp.ne.s32.totalorder %s478, %s479
      %p490 = scmp.eq.s32.totalorder %s50, 0
      %p491 = por %p489, %p490
      %p492 = scmp.ne.s32.totalorder %s478, %s479
      %p493 = scmp.eq.s32.totalorder %s51, 1
      %p494 = por %p492, %p493
      %p496 = scmp.ne.s32.totalorder %s479, %s495
      %p497 = scmp.eq.s32.totalorder %s51, 0
      %p498 = por %p496, %p497
      %s499 = ssub.s32 %s45, %s52
      %p500 = scmp.eq.s32.totalorder %s499, 0
      %s502 = sadd.s32 %s501, 1
      %s503 = scalar_select %p500, %s501, %s502
      %p506 = pneg %p500
      %p507 = scmp.eq.s32.totalorder %s45, 1
      %p508 = por %p506, %p507
      %p509 = scmp.ne.s32.totalorder %s501, %s504
      %p510 = scmp.eq.s32.totalorder %s45, 0
      %p511 = por %p509, %p510
      %p512 = scmp.ne.s32.totalorder %s501, %s504
      %p513 = scmp.eq.s32.totalorder %s50, 1
      %p514 = por %p512, %p513
      %p515 = scmp.ne.s32.totalorder %s504, %s505
      %p516 = scmp.eq.s32.totalorder %s50, 0
      %p517 = por %p515, %p516
      %p518 = scmp.ne.s32.totalorder %s504, %s505
      %p519 = scmp.eq.s32.totalorder %s51, 1
      %p520 = por %p518, %p519
      %p522 = scmp.ne.s32.totalorder %s505, %s521
      %p523 = scmp.eq.s32.totalorder %s51, 0
      %p524 = por %p522, %p523
      %s525 = ssub.s32 %s45, %s52
      %p526 = scmp.eq.s32.totalorder %s525, 0
      %s528 = sadd.s32 %s527, 1
      %s529 = scalar_select %p526, %s527, %s528
      %p532 = pneg %p526
      %p533 = scmp.eq.s32.totalorder %s45, 1
      %p534 = por %p532, %p533
      %p535 = scmp.ne.s32.totalorder %s527, %s530
      %p536 = scmp.eq.s32.totalorder %s45, 0
      %p537 = por %p535, %p536
      %p538 = scmp.ne.s32.totalorder %s527, %s530
      %p539 = scmp.eq.s32.totalorder %s50, 1
      %p540 = por %p538, %p539
      %p541 = scmp.ne.s32.totalorder %s530, %s531
      %p542 = scmp.eq.s32.totalorder %s50, 0
      %p543 = por %p541, %p542
      %p544 = scmp.ne.s32.totalorder %s530, %s531
      %p545 = scmp.eq.s32.totalorder %s51, 1
      %p546 = por %p544, %p545
      %p548 = scmp.ne.s32.totalorder %s531, %s547
      %p549 = scmp.eq.s32.totalorder %s51, 0
      %p550 = por %p548, %p549
      %s552 = sadd.s32 %s551, 1
      %p555 = scmp.eq.s32.totalorder %s45, 1
      %p556 = scmp.ne.s32.totalorder %s551, %s553
      %p557 = scmp.eq.s32.totalorder %s45, 0
      %p558 = por %p556, %p557
      %p559 = scmp.ne.s32.totalorder %s551, %s553
      %p560 = scmp.eq.s32.totalorder %s50, 1
      %p561 = por %p559, %p560
      %p562 = scmp.ne.s32.totalorder %s553, %s554
      %p563 = scmp.eq.s32.totalorder %s50, 0
      %p564 = por %p562, %p563
      %p565 = scmp.ne.s32.totalorder %s553, %s554
      %p566 = scmp.eq.s32.totalorder %s51, 1
      %p567 = por %p565, %p566
      %p569 = scmp.ne.s32.totalorder %s554, %s568
      %p570 = scmp.eq.s32.totalorder %s51, 0
      %p571 = por %p569, %p570
      %p572 = scmp.le.s32.totalorder 1, %s45
      %p573 = scmp.lt.s32.totalorder %s45, 3
      %p574 = pnand %p572, %p573
      %p575 = pneg %p574
      // Predicated region
      $region9: #{tpu_custom_call.1} parent=5 // pred_check
        _
      $region10: #{tpu_custom_call.1} parent=5 // pred_check_branch
        %577 = sbr.rel (%p574) target = $region12
      $region11: #{tpu_custom_call.1} parent=5 // pred_region
        %s578 = ssub.s32 %s45, 1
        // Predicated region
        $region13: #{tpu_custom_call.1} parent=11 // pred_check
          %p579 = pneg %p66
        $region14: #{tpu_custom_call.1} parent=11 // pred_check_branch
          %581 = sbr.rel (%p579) target = $region16
        $region15: #{tpu_custom_call.1} parent=11 // pred_region
          %s583 = ssub.s32 128, 128
          %584 = vsyncadd [#allocation4], %s583
          %s586 = sshll.u32 [#allocation3], 4
          %s587 = int_to_ptr.vmem [resolvable:$true] %s586
          %589 = dma.hbm_to_vmem [thread:$0]  %s0, 128, %s587, [#allocation4]
        $region16: #{tpu_custom_call.1} parent=11 // pred_fallthru
          _
        // Predicated region
        $region17: #{tpu_custom_call.1} parent=11 // pred_check
          %p590 = pneg %p87
        $region18: #{tpu_custom_call.1} parent=11 // pred_check_branch
          %592 = sbr.rel (%p590) target = $region20
        $region19: #{tpu_custom_call.1} parent=11 // pred_region
          %s594 = ssub.s32 128, 128
          %595 = vsyncadd [#allocation7], %s594
          %s597 = sshll.u32 [#allocation6], 4
          %s598 = int_to_ptr.vmem [resolvable:$true] %s597
          %600 = dma.hbm_to_vmem [thread:$0]  %s1, 128, %s598, [#allocation7]
        $region20: #{tpu_custom_call.1} parent=11 // pred_fallthru
          _
        // Predicated region
        $region21: #{tpu_custom_call.1} parent=11 // pred_check
          %p601 = pneg %p108
        $region22: #{tpu_custom_call.1} parent=11 // pred_check_branch
          %603 = sbr.rel (%p601) target = $region24
        $region23: #{tpu_custom_call.1} parent=11 // pred_region
          %s605 = ssub.s32 1024, 1024
          %606 = vsyncadd [#allocation7], %s605
          %s607 = sshll.u32 [#allocation8], 4
          %s608 = int_to_ptr.vmem [resolvable:$true] %s607
          %613 = dma.hbm_to_vmem [thread:$0]  %s2, 1024, %s608, [#allocation7], 128, 128, 8
        $region24: #{tpu_custom_call.1} parent=11 // pred_fallthru
          _
        // Predicated region
        $region25: #{tpu_custom_call.1} parent=11 // pred_check
          %p614 = pneg %p129
        $region26: #{tpu_custom_call.1} parent=11 // pred_check_branch
          %616 = sbr.rel (%p614) target = $region28
        $region27: #{tpu_custom_call.1} parent=11 // pred_region
          %s618 = ssub.s32 128, 128
          %619 = vsyncadd [#allocation10], %s618
          %s621 = sshll.u32 [#allocation9], 4
          %s622 = int_to_ptr.vmem [resolvable:$true] %s621
          %624 = dma.hbm_to_vmem [thread:$0]  %s3, 128, %s622, [#allocation10]
        $region28: #{tpu_custom_call.1} parent=11 // pred_fallthru
          _
        // Predicated region
        $region29: #{tpu_custom_call.1} parent=11 // pred_check
          %p625 = pneg %p150
        $region30: #{tpu_custom_call.1} parent=11 // pred_check_branch
          %627 = sbr.rel (%p625) target = $region32
        $region31: #{tpu_custom_call.1} parent=11 // pred_region
          %s629 = ssub.s32 1024, 1024
          %630 = vsyncadd [#allocation10], %s629
          %s631 = sshll.u32 [#allocation11], 4
          %s632 = int_to_ptr.vmem [resolvable:$true] %s631
          %637 = dma.hbm_to_vmem [thread:$0]  %s4, 1024, %s632, [#allocation10], 128, 128, 8
        $region32: #{tpu_custom_call.1} parent=11 // pred_fallthru
          _
        // Predicated region
        $region33: #{tpu_custom_call.1} parent=11 // pred_check
          %p638 = pneg %p171
        $region34: #{tpu_custom_call.1} parent=11 // pred_check_branch
          %640 = sbr.rel (%p638) target = $region36
        $region35: #{tpu_custom_call.1} parent=11 // pred_region
          %s642 = ssub.s32 512, 512
          %643 = vsyncadd [#allocation13], %s642
          %s644 = sshll.u32 [#allocation12], 4
          %s645 = int_to_ptr.vmem [resolvable:$true] %s644
          %650 = dma.hbm_to_vmem [thread:$0]  %s5, 512, %s645, [#allocation13], 128, 128, 8
        $region36: #{tpu_custom_call.1} parent=11 // pred_fallthru
          _
        // Predicated region
        $region37: #{tpu_custom_call.1} parent=11 // pred_check
          %p651 = pneg %p192
        $region38: #{tpu_custom_call.1} parent=11 // pred_check_branch
          %653 = sbr.rel (%p651) target = $region40
        $region39: #{tpu_custom_call.1} parent=11 // pred_region
          %s655 = ssub.s32 16, 16
          %656 = vsyncadd [#allocation13], %s655
          %s658 = sshll.u32 [#allocation14], 4
          %s659 = int_to_ptr.vmem [resolvable:$true] %s658
          %661 = dma.hbm_to_vmem [thread:$0]  %s6, 16, %s659, [#allocation13]
        $region40: #{tpu_custom_call.1} parent=11 // pred_fallthru
          _
        // Predicated region
        $region41: #{tpu_custom_call.1} parent=11 // pred_check
          %p662 = pneg %p213
        $region42: #{tpu_custom_call.1} parent=11 // pred_check_branch
          %664 = sbr.rel (%p662) target = $region44
        $region43: #{tpu_custom_call.1} parent=11 // pred_region
          %s666 = ssub.s32 512, 512
          %667 = vsyncadd [#allocation16], %s666
          %s668 = sshll.u32 [#allocation15], 4
          %s669 = int_to_ptr.vmem [resolvable:$true] %s668
          %674 = dma.hbm_to_vmem [thread:$0]  %s7, 512, %s669, [#allocation16], 128, 128, 8
        $region44: #{tpu_custom_call.1} parent=11 // pred_fallthru
          _
        // Predicated region
        $region45: #{tpu_custom_call.1} parent=11 // pred_check
          %p675 = pneg %p234
        $region46: #{tpu_custom_call.1} parent=11 // pred_check_branch
          %677 = sbr.rel (%p675) target = $region48
        $region47: #{tpu_custom_call.1} parent=11 // pred_region
          %s679 = ssub.s32 512, 512
          %680 = vsyncadd [#allocation16], %s679
          %s681 = sshll.u32 [#allocation17], 4
          %s682 = int_to_ptr.vmem [resolvable:$true] %s681
          %687 = dma.hbm_to_vmem [thread:$0]  %s8, 512, %s682, [#allocation16], 128, 128, 8
        $region48: #{tpu_custom_call.1} parent=11 // pred_fallthru
          _
        // Predicated region
        $region49: #{tpu_custom_call.1} parent=11 // pred_check
          %p688 = pneg %p255
        $region50: #{tpu_custom_call.1} parent=11 // pred_check_branch
          %690 = sbr.rel (%p688) target = $region52
        $region51: #{tpu_custom_call.1} parent=11 // pred_region
          %s692 = ssub.s32 512, 512
          %693 = vsyncadd [#allocation19], %s692
          %s694 = sshll.u32 [#allocation18], 4
          %s695 = int_to_ptr.vmem [resolvable:$true] %s694
          %700 = dma.hbm_to_vmem [thread:$0]  %s9, 512, %s695, [#allocation19], 128, 128, 8
        $region52: #{tpu_custom_call.1} parent=11 // pred_fallthru
          _
        // Predicated region
        $region53: #{tpu_custom_call.1} parent=11 // pred_check
          %p701 = pneg %p276
        $region54: #{tpu_custom_call.1} parent=11 // pred_check_branch
          %703 = sbr.rel (%p701) target = $region56
        $region55: #{tpu_custom_call.1} parent=11 // pred_region
          %s705 = ssub.s32 1024, 1024
          %706 = vsyncadd [#allocation19], %s705
          %s707 = sshll.u32 [#allocation20], 4
          %s708 = int_to_ptr.vmem [resolvable:$true] %s707
          %713 = dma.hbm_to_vmem [thread:$0]  %s10, 1024, %s708, [#allocation19], 128, 128, 8
        $region56: #{tpu_custom_call.1} parent=11 // pred_fallthru
          _
        // Predicated region
        $region57: #{tpu_custom_call.1} parent=11 // pred_check
          %p714 = pneg %p297
        $region58: #{tpu_custom_call.1} parent=11 // pred_check_branch
          %716 = sbr.rel (%p714) target = $region60
        $region59: #{tpu_custom_call.1} parent=11 // pred_region
          %s718 = ssub.s32 1024, 1024
          %719 = vsyncadd [#allocation22], %s718
          %s720 = sshll.u32 [#allocation21], 4
          %s721 = int_to_ptr.vmem [resolvable:$true] %s720
          %726 = dma.hbm_to_vmem [thread:$0]  %s11, 1024, %s721, [#allocation22], 128, 128, 8
        $region60: #{tpu_custom_call.1} parent=11 // pred_fallthru
          _
        // Predicated region
        $region61: #{tpu_custom_call.1} parent=11 // pred_check
          %p727 = pneg %p318
        $region62: #{tpu_custom_call.1} parent=11 // pred_check_branch
          %729 = sbr.rel (%p727) target = $region64
        $region63: #{tpu_custom_call.1} parent=11 // pred_region
          %s731 = ssub.s32 1024, 1024
          %732 = vsyncadd [#allocation22], %s731
          %s733 = sshll.u32 [#allocation23], 4
          %s734 = int_to_ptr.vmem [resolvable:$true] %s733
          %739 = dma.hbm_to_vmem [thread:$0]  %s12, 1024, %s734, [#allocation22], 128, 128, 8
        $region64: #{tpu_custom_call.1} parent=11 // pred_fallthru
          _
        // Predicated region
        $region65: #{tpu_custom_call.1} parent=11 // pred_check
          %p740 = pneg %p339
        $region66: #{tpu_custom_call.1} parent=11 // pred_check_branch
          %742 = sbr.rel (%p740) target = $region68
        $region67: #{tpu_custom_call.1} parent=11 // pred_region
          %s744 = ssub.s32 512, 512
          %745 = vsyncadd [#allocation25], %s744
          %s746 = sshll.u32 [#allocation24], 4
          %s747 = int_to_ptr.vmem [resolvable:$true] %s746
          %752 = dma.hbm_to_vmem [thread:$0]  %s13, 512, %s747, [#allocation25], 128, 128, 8
        $region68: #{tpu_custom_call.1} parent=11 // pred_fallthru
          _
        // Predicated region
        $region69: #{tpu_custom_call.1} parent=11 // pred_check
          %p753 = pneg %p360
        $region70: #{tpu_custom_call.1} parent=11 // pred_check_branch
          %755 = sbr.rel (%p753) target = $region72
        $region71: #{tpu_custom_call.1} parent=11 // pred_region
          %s757 = ssub.s32 512, 512
          %758 = vsyncadd [#allocation25], %s757
          %s759 = sshll.u32 [#allocation26], 4
          %s760 = int_to_ptr.vmem [resolvable:$true] %s759
          %765 = dma.hbm_to_vmem [thread:$0]  %s14, 512, %s760, [#allocation25], 128, 128, 8
        $region72: #{tpu_custom_call.1} parent=11 // pred_fallthru
          _
        // Predicated region
        $region73: #{tpu_custom_call.1} parent=11 // pred_check
          %p766 = pneg %p381
        $region74: #{tpu_custom_call.1} parent=11 // pred_check_branch
          %768 = sbr.rel (%p766) target = $region76
        $region75: #{tpu_custom_call.1} parent=11 // pred_region
          %s770 = ssub.s32 512, 512
          %771 = vsyncadd [#allocation28], %s770
          %s772 = sshll.u32 [#allocation27], 4
          %s773 = int_to_ptr.vmem [resolvable:$true] %s772
          %778 = dma.hbm_to_vmem [thread:$0]  %s15, 512, %s773, [#allocation28], 128, 128, 8
        $region76: #{tpu_custom_call.1} parent=11 // pred_fallthru
          _
        // Predicated region
        $region77: #{tpu_custom_call.1} parent=11 // pred_check
          %p779 = pneg %p402
        $region78: #{tpu_custom_call.1} parent=11 // pred_check_branch
          %781 = sbr.rel (%p779) target = $region80
        $region79: #{tpu_custom_call.1} parent=11 // pred_region
          %s783 = ssub.s32 16, 16
          %784 = vsyncadd [#allocation28], %s783
          %s786 = sshll.u32 [#allocation29], 4
          %s787 = int_to_ptr.vmem [resolvable:$true] %s786
          %789 = dma.hbm_to_vmem [thread:$0]  %s16, 16, %s787, [#allocation28]
        $region80: #{tpu_custom_call.1} parent=11 // pred_fallthru
          _
        // Predicated region
        $region81: #{tpu_custom_call.1} parent=11 // pred_check
          %p790 = pneg %p423
        $region82: #{tpu_custom_call.1} parent=11 // pred_check_branch
          %792 = sbr.rel (%p790) target = $region84
        $region83: #{tpu_custom_call.1} parent=11 // pred_region
          %s794 = ssub.s32 16, 16
          %795 = vsyncadd [#allocation31], %s794
          %s797 = sshll.u32 [#allocation30], 4
          %s798 = int_to_ptr.vmem [resolvable:$true] %s797
          %800 = dma.hbm_to_vmem [thread:$0]  %s17, 16, %s798, [#allocation31]
        $region84: #{tpu_custom_call.1} parent=11 // pred_fallthru
          _
        // Predicated region
        $region85: #{tpu_custom_call.1} parent=11 // pred_check
          %p801 = pneg %p444
        $region86: #{tpu_custom_call.1} parent=11 // pred_check_branch
          %803 = sbr.rel (%p801) target = $region88
        $region87: #{tpu_custom_call.1} parent=11 // pred_region
          %s805 = ssub.s32 16, 16
          %806 = vsyncadd [#allocation31], %s805
          %s808 = sshll.u32 [#allocation32], 4
          %s809 = int_to_ptr.vmem [resolvable:$true] %s808
          %811 = dma.hbm_to_vmem [thread:$0]  %s18, 16, %s809, [#allocation31]
        $region88: #{tpu_custom_call.1} parent=11 // pred_fallthru
          _
        // Predicated region
        $region89: #{tpu_custom_call.1} parent=11 // pred_check
          %p812 = pneg %p465
        $region90: #{tpu_custom_call.1} parent=11 // pred_check_branch
          %814 = sbr.rel (%p812) target = $region92
        $region91: #{tpu_custom_call.1} parent=11 // pred_region
          %s816 = ssub.s32 16, 16
          %817 = vsyncadd [#allocation34], %s816
          %s819 = sshll.u32 [#allocation33], 4
          %s820 = int_to_ptr.vmem [resolvable:$true] %s819
          %822 = dma.hbm_to_vmem [thread:$0]  %s19, 16, %s820, [#allocation34]
        $region92: #{tpu_custom_call.1} parent=11 // pred_fallthru
          _
      $region12: #{tpu_custom_call.1} parent=5 // pred_fallthru
        _
      %p823 = scmp.lt.s32.totalorder %s45, 2
      // Predicated region
      $region93: #{tpu_custom_call.1} parent=5 // pred_check
        %p824 = pneg %p823
      $region94: #{tpu_custom_call.1} parent=5 // pred_check_branch
        %826 = sbr.rel (%p824) target = $region96
      $region95: #{tpu_custom_call.1} parent=5 // pred_region
        // Predicated region
        $region97: #{tpu_custom_call.1} parent=95 // pred_check
          %p827 = pneg %p485
        $region98: #{tpu_custom_call.1} parent=95 // pred_check_branch
          %829 = sbr.rel (%p827) target = $region100
        $region99: #{tpu_custom_call.1} parent=95 // pred_region
          %s830 = sand.u32 %s45, 1
          %s831 = scalar_lea.sflag [#allocation4], %s830
          %s832 = sand.u32 %s475, 1
          %s833 = smul.addr %s832, 32
          %s834 = scalar_lea.vmem [#allocation35], %s833
          %s836 = ssub.s32 512, 512
          %837 = vsyncadd %s831, %s836
          %s838 = smul.addr %s45, 128
          %s839 = scalar_lea.hbm %s20, %s838
          %s840 = sshll.u32 %s834, 4
          %s841 = int_to_ptr.vmem [resolvable:$true] %s840
          %846 = dma.hbm_to_vmem [thread:$0]  %s839, 512, %s841, %s831, 256, 128, 8
        $region100: #{tpu_custom_call.1} parent=95 // pred_fallthru
          _
        // Predicated region
        $region101: #{tpu_custom_call.1} parent=95 // pred_check
          %p847 = pneg %p511
        $region102: #{tpu_custom_call.1} parent=95 // pred_check_branch
          %849 = sbr.rel (%p847) target = $region104
        $region103: #{tpu_custom_call.1} parent=95 // pred_region
          %s850 = sand.u32 %s45, 1
          %s851 = scalar_lea.sflag [#allocation4], %s850
          %s852 = sand.u32 %s501, 1
          %s853 = scalar_lea.vmem [#allocation36], %s852
          %s855 = ssub.s32 16, 16
          %856 = vsyncadd %s851, %s855
          %s857 = smul.addr %s45, 16
          %s858 = scalar_lea.hbm %s21, %s857
          %s860 = sshll.u32 %s853, 4
          %s861 = int_to_ptr.vmem [resolvable:$true] %s860
          %863 = dma.hbm_to_vmem [thread:$0]  %s858, 16, %s861, %s851
        $region104: #{tpu_custom_call.1} parent=95 // pred_fallthru
          _
      $region96: #{tpu_custom_call.1} parent=5 // pred_fallthru
        _
      %p864 = scmp.le.s32.totalorder 1, %s45
      %p865 = scmp.lt.s32.totalorder %s45, 3
      %p866 = pnand %p864, %p865
      %p867 = pneg %p866
      // Predicated region
      $region105: #{tpu_custom_call.1} parent=5 // pred_check
        _
      $region106: #{tpu_custom_call.1} parent=5 // pred_check_branch
        %869 = sbr.rel (%p866) target = $region108
      $region107: #{tpu_custom_call.1} parent=5 // pred_region
        %s870 = ssub.s32 %s45, 1
        // Predicated region
        $region109: #{tpu_custom_call.1} parent=107 // pred_check
          %p871 = pneg %p66
        $region110: #{tpu_custom_call.1} parent=107 // pred_check_branch
          %873 = sbr.rel (%p871) target = $region112
        $region111: #{tpu_custom_call.1} parent=107 // pred_region
          %874 = dma.done [#allocation4], 128
        $region112: #{tpu_custom_call.1} parent=107 // pred_fallthru
          _
        // Predicated region
        $region113: #{tpu_custom_call.1} parent=107 // pred_check
          %p875 = pneg %p87
        $region114: #{tpu_custom_call.1} parent=107 // pred_check_branch
          %877 = sbr.rel (%p875) target = $region116
        $region115: #{tpu_custom_call.1} parent=107 // pred_region
          %878 = dma.done [#allocation7], 128
        $region116: #{tpu_custom_call.1} parent=107 // pred_fallthru
          _
        // Predicated region
        $region117: #{tpu_custom_call.1} parent=107 // pred_check
          %p879 = pneg %p108
        $region118: #{tpu_custom_call.1} parent=107 // pred_check_branch
          %881 = sbr.rel (%p879) target = $region120
        $region119: #{tpu_custom_call.1} parent=107 // pred_region
          %882 = dma.done [#allocation7], 1024
        $region120: #{tpu_custom_call.1} parent=107 // pred_fallthru
          _
        // Predicated region
        $region121: #{tpu_custom_call.1} parent=107 // pred_check
          %p883 = pneg %p129
        $region122: #{tpu_custom_call.1} parent=107 // pred_check_branch
          %885 = sbr.rel (%p883) target = $region124
        $region123: #{tpu_custom_call.1} parent=107 // pred_region
          %886 = dma.done [#allocation10], 128
        $region124: #{tpu_custom_call.1} parent=107 // pred_fallthru
          _
        // Predicated region
        $region125: #{tpu_custom_call.1} parent=107 // pred_check
          %p887 = pneg %p150
        $region126: #{tpu_custom_call.1} parent=107 // pred_check_branch
          %889 = sbr.rel (%p887) target = $region128
        $region127: #{tpu_custom_call.1} parent=107 // pred_region
          %890 = dma.done [#allocation10], 1024
        $region128: #{tpu_custom_call.1} parent=107 // pred_fallthru
          _
        // Predicated region
        $region129: #{tpu_custom_call.1} parent=107 // pred_check
          %p891 = pneg %p171
        $region130: #{tpu_custom_call.1} parent=107 // pred_check_branch
          %893 = sbr.rel (%p891) target = $region132
        $region131: #{tpu_custom_call.1} parent=107 // pred_region
          %894 = dma.done [#allocation13], 512
        $region132: #{tpu_custom_call.1} parent=107 // pred_fallthru
          _
        // Predicated region
        $region133: #{tpu_custom_call.1} parent=107 // pred_check
          %p895 = pneg %p192
        $region134: #{tpu_custom_call.1} parent=107 // pred_check_branch
          %897 = sbr.rel (%p895) target = $region136
        $region135: #{tpu_custom_call.1} parent=107 // pred_region
          %898 = dma.done [#allocation13], 16
        $region136: #{tpu_custom_call.1} parent=107 // pred_fallthru
          _
        // Predicated region
        $region137: #{tpu_custom_call.1} parent=107 // pred_check
          %p899 = pneg %p213
        $region138: #{tpu_custom_call.1} parent=107 // pred_check_branch
          %901 = sbr.rel (%p899) target = $region140
        $region139: #{tpu_custom_call.1} parent=107 // pred_region
          %902 = dma.done [#allocation16], 512
        $region140: #{tpu_custom_call.1} parent=107 // pred_fallthru
          _
        // Predicated region
        $region141: #{tpu_custom_call.1} parent=107 // pred_check
          %p903 = pneg %p234
        $region142: #{tpu_custom_call.1} parent=107 // pred_check_branch
          %905 = sbr.rel (%p903) target = $region144
        $region143: #{tpu_custom_call.1} parent=107 // pred_region
          %906 = dma.done [#allocation16], 512
        $region144: #{tpu_custom_call.1} parent=107 // pred_fallthru
          _
        // Predicated region
        $region145: #{tpu_custom_call.1} parent=107 // pred_check
          %p907 = pneg %p255
        $region146: #{tpu_custom_call.1} parent=107 // pred_check_branch
          %909 = sbr.rel (%p907) target = $region148
        $region147: #{tpu_custom_call.1} parent=107 // pred_region
          %910 = dma.done [#allocation19], 512
        $region148: #{tpu_custom_call.1} parent=107 // pred_fallthru
          _
        // Predicated region
        $region149: #{tpu_custom_call.1} parent=107 // pred_check
          %p911 = pneg %p276
        $region150: #{tpu_custom_call.1} parent=107 // pred_check_branch
          %913 = sbr.rel (%p911) target = $region152
        $region151: #{tpu_custom_call.1} parent=107 // pred_region
          %914 = dma.done [#allocation19], 1024
        $region152: #{tpu_custom_call.1} parent=107 // pred_fallthru
          _
        // Predicated region
        $region153: #{tpu_custom_call.1} parent=107 // pred_check
          %p915 = pneg %p297
        $region154: #{tpu_custom_call.1} parent=107 // pred_check_branch
          %917 = sbr.rel (%p915) target = $region156
        $region155: #{tpu_custom_call.1} parent=107 // pred_region
          %918 = dma.done [#allocation22], 1024
        $region156: #{tpu_custom_call.1} parent=107 // pred_fallthru
          _
        // Predicated region
        $region157: #{tpu_custom_call.1} parent=107 // pred_check
          %p919 = pneg %p318
        $region158: #{tpu_custom_call.1} parent=107 // pred_check_branch
          %921 = sbr.rel (%p919) target = $region160
        $region159: #{tpu_custom_call.1} parent=107 // pred_region
          %922 = dma.done [#allocation22], 1024
        $region160: #{tpu_custom_call.1} parent=107 // pred_fallthru
          _
        // Predicated region
        $region161: #{tpu_custom_call.1} parent=107 // pred_check
          %p923 = pneg %p339
        $region162: #{tpu_custom_call.1} parent=107 // pred_check_branch
          %925 = sbr.rel (%p923) target = $region164
        $region163: #{tpu_custom_call.1} parent=107 // pred_region
          %926 = dma.done [#allocation25], 512
        $region164: #{tpu_custom_call.1} parent=107 // pred_fallthru
          _
        // Predicated region
        $region165: #{tpu_custom_call.1} parent=107 // pred_check
          %p927 = pneg %p360
        $region166: #{tpu_custom_call.1} parent=107 // pred_check_branch
          %929 = sbr.rel (%p927) target = $region168
        $region167: #{tpu_custom_call.1} parent=107 // pred_region
          %930 = dma.done [#allocation25], 512
        $region168: #{tpu_custom_call.1} parent=107 // pred_fallthru
          _
        // Predicated region
        $region169: #{tpu_custom_call.1} parent=107 // pred_check
          %p931 = pneg %p381
        $region170: #{tpu_custom_call.1} parent=107 // pred_check_branch
          %933 = sbr.rel (%p931) target = $region172
        $region171: #{tpu_custom_call.1} parent=107 // pred_region
          %934 = dma.done [#allocation28], 512
        $region172: #{tpu_custom_call.1} parent=107 // pred_fallthru
          _
        // Predicated region
        $region173: #{tpu_custom_call.1} parent=107 // pred_check
          %p935 = pneg %p402
        $region174: #{tpu_custom_call.1} parent=107 // pred_check_branch
          %937 = sbr.rel (%p935) target = $region176
        $region175: #{tpu_custom_call.1} parent=107 // pred_region
          %938 = dma.done [#allocation28], 16
        $region176: #{tpu_custom_call.1} parent=107 // pred_fallthru
          _
        // Predicated region
        $region177: #{tpu_custom_call.1} parent=107 // pred_check
          %p939 = pneg %p423
        $region178: #{tpu_custom_call.1} parent=107 // pred_check_branch
          %941 = sbr.rel (%p939) target = $region180
        $region179: #{tpu_custom_call.1} parent=107 // pred_region
          %942 = dma.done [#allocation31], 16
        $region180: #{tpu_custom_call.1} parent=107 // pred_fallthru
          _
        // Predicated region
        $region181: #{tpu_custom_call.1} parent=107 // pred_check
          %p943 = pneg %p444
        $region182: #{tpu_custom_call.1} parent=107 // pred_check_branch
          %945 = sbr.rel (%p943) target = $region184
        $region183: #{tpu_custom_call.1} parent=107 // pred_region
          %946 = dma.done [#allocation31], 16
        $region184: #{tpu_custom_call.1} parent=107 // pred_fallthru
          _
        // Predicated region
        $region185: #{tpu_custom_call.1} parent=107 // pred_check
          %p947 = pneg %p465
        $region186: #{tpu_custom_call.1} parent=107 // pred_check_branch
          %949 = sbr.rel (%p947) target = $region188
        $region187: #{tpu_custom_call.1} parent=107 // pred_region
          %950 = dma.done [#allocation34], 16
        $region188: #{tpu_custom_call.1} parent=107 // pred_fallthru
          _
        %s951 = sand.u32 %s50, 1
        %s952 = scalar_lea.sflag [#allocation4], %s951
        %s953 = sand.u32 %s478, 1
        %s954 = smul.addr %s953, 32
        %s955 = scalar_lea.vmem [#allocation35], %s954
        // Predicated region
        $region189: #{tpu_custom_call.1} parent=107 // pred_check
          %p956 = pneg %p491
        $region190: #{tpu_custom_call.1} parent=107 // pred_check_branch
          %958 = sbr.rel (%p956) target = $region192
        $region191: #{tpu_custom_call.1} parent=107 // pred_region
          %959 = dma.done %s952, 512
        $region192: #{tpu_custom_call.1} parent=107 // pred_fallthru
          _
        %s960 = sand.u32 %s50, 1
        %s961 = scalar_lea.sflag [#allocation4], %s960
        %s962 = sand.u32 %s504, 1
        %s963 = scalar_lea.vmem [#allocation36], %s962
        // Predicated region
        $region193: #{tpu_custom_call.1} parent=107 // pred_check
          %p964 = pneg %p517
        $region194: #{tpu_custom_call.1} parent=107 // pred_check_branch
          %966 = sbr.rel (%p964) target = $region196
        $region195: #{tpu_custom_call.1} parent=107 // pred_region
          %967 = dma.done %s961, 16
        $region196: #{tpu_custom_call.1} parent=107 // pred_fallthru
          _
        %p968 = pneg %p66
        %p969 = pneg %p63
        %p970 = pneg %p87
        %p971 = pneg %p84
        %p972 = pneg %p108
        %p973 = pneg %p105
        %p974 = pneg %p129
        %p975 = pneg %p126
        %p976 = pneg %p150
        %p977 = pneg %p147
        %p978 = pneg %p171
        %p979 = pneg %p168
        %p980 = pneg %p192
        %p981 = pneg %p189
        %p982 = pneg %p213
        %p983 = pneg %p210
        %p984 = pneg %p234
        %p985 = pneg %p231
        %p986 = pneg %p255
        %p987 = pneg %p252
        %p988 = pneg %p276
        %p989 = pneg %p273
        %p990 = pneg %p297
        %p991 = pneg %p294
        %p992 = pneg %p318
        %p993 = pneg %p315
        %p994 = pneg %p339
        %p995 = pneg %p336
        %p996 = pneg %p360
        %p997 = pneg %p357
        %p998 = pneg %p381
        %p999 = pneg %p378
        %p1000 = pneg %p402
        %p1001 = pneg %p399
        %p1002 = pneg %p423
        %p1003 = pneg %p420
        %p1004 = pneg %p444
        %p1005 = pneg %p441
        %p1006 = pneg %p465
        %p1007 = pneg %p462
        %s1008 = sand.u32 %s50, 1
        %s1009 = scalar_lea.sflag [#allocation4], %s1008
        %s1010 = sand.u32 %s478, 1
        %s1011 = smul.addr %s1010, 32
        %s1012 = scalar_lea.vmem [#allocation35], %s1011
        %p1013 = pneg %p491
        %p1014 = pneg %p488
        %s1015 = sand.u32 %s50, 1
        %s1016 = scalar_lea.sflag [#allocation4], %s1015
        %s1017 = sand.u32 %s504, 1
        %s1018 = scalar_lea.vmem [#allocation36], %s1017
        %p1019 = pneg %p517
        %p1020 = pneg %p514
        %p1021 = pneg %p543
        %p1022 = pneg %p540
        %s1023 = sand.u32 %s530, 1
        %s1024 = scalar_lea.sflag [#allocation5], %s1023
        %s1025 = sand.u32 %s530, 1
        %s1026 = smul.addr %s1025, 8
        %s1027 = scalar_lea.vmem [#allocation37], %s1026
        %p1028 = pneg %p564
        %p1029 = pneg %p561
        %p1030 = scmp.eq.s32.totalorder %s50, 0
        // Predicated region
        $region197: #{tpu_custom_call.1} parent=107 // pred_check
          %p1031 = pneg %p1030
        $region198: #{tpu_custom_call.1} parent=107 // pred_check_branch
          %1033 = sbr.rel (%p1031) target = $region200
        $region199: #{tpu_custom_call.1} parent=107 // pred_region
          %v1034 = vld [vmem:[#allocation3] sm:$0xff]
          %v1035 = vld [vmem:[#allocation6] sm:$0xff]
          %v1036 = vld [vmem:[#allocation8] sm:$0xff]
          %v1037 = vld [vmem:[#allocation8 + $0x8] sm:$0xff]
          %v1038 = vld [vmem:[#allocation8 + $0x10] sm:$0xff]
          %v1039 = vld [vmem:[#allocation8 + $0x18] sm:$0xff]
          %v1040 = vld [vmem:[#allocation8 + $0x20] sm:$0xff]
          %v1041 = vld [vmem:[#allocation8 + $0x28] sm:$0xff]
          %v1042 = vld [vmem:[#allocation8 + $0x30] sm:$0xff]
          %v1043 = vld [vmem:[#allocation8 + $0x38] sm:$0xff]
          %v1044 = vld [vmem:[#allocation9] sm:$0xff]
          %v1045 = vld [vmem:[#allocation11] sm:$0xff]
          %v1046 = vld [vmem:[#allocation11 + $0x8] sm:$0xff]
          %v1047 = vld [vmem:[#allocation11 + $0x10] sm:$0xff]
          %v1048 = vld [vmem:[#allocation11 + $0x18] sm:$0xff]
          %v1049 = vld [vmem:[#allocation11 + $0x20] sm:$0xff]
          %v1050 = vld [vmem:[#allocation11 + $0x28] sm:$0xff]
          %v1051 = vld [vmem:[#allocation11 + $0x30] sm:$0xff]
          %v1052 = vld [vmem:[#allocation11 + $0x38] sm:$0xff]
          %vm1053 = vcmask 523264
          %v1055 = vsel %vm1053, %v1036, 0
          %v1058 = vsel %vm1053, %v1037, 0
          %v1061 = vsel %vm1053, %v1038, 0
          %v1064 = vsel %vm1053, %v1039, 0
          %v1067 = vsel %vm1053, %v1040, 0
          %v1070 = vsel %vm1053, %v1041, 0
          %v1073 = vsel %vm1053, %v1042, 0
          %v1076 = vsel %vm1053, %v1043, 0
          %1078 = vmatprep.subr.mxu0 0.0
          %1079 = vmatpush1.msra.mxu0 %v1045
          %1080 = vmatprep.subr.mxu0 0.0
          %1081 = vmatpush1.msra.mxu0 %v1046
          %1082 = vmatprep.subr.mxu0 0.0
          %1083 = vmatpush1.msra.mxu0 %v1047
          %1084 = vmatprep.subr.mxu0 0.0
          %1085 = vmatpush1.msra.mxu0 %v1048
          %1086 = vmatprep.subr.mxu0 0.0
          %1087 = vmatpush1.msra.mxu0 %v1049
          %1088 = vmatprep.subr.mxu0 0.0
          %1089 = vmatpush1.msra.mxu0 %v1050
          %1090 = vmatprep.subr.mxu0 0.0
          %1091 = vmatpush1.msra.mxu0 %v1051
          %1092 = vmatprep.subr.mxu0 0.0
          %1093 = vmatpush1.msra.mxu0 %v1052
          %1094 = vmatprep.subr.mxu0 0.0
          %1095 = vmatpush1.msra.mxu0 0.0
          %1096 = vmatprep.subr.mxu0 0.0
          %1097 = vmatpush1.msra.mxu0 0.0
          %1098 = vmatprep.subr.mxu0 0.0
          %1099 = vmatpush1.msra.mxu0 0.0
          %1100 = vmatprep.subr.mxu0 0.0
          %1101 = vmatpush1.msra.mxu0 0.0
          %1102 = vmatprep.subr.mxu0 0.0
          %1103 = vmatpush1.msra.mxu0 0.0
          %1104 = vmatprep.subr.mxu0 0.0
          %1105 = vmatpush1.msra.mxu0 0.0
          %1106 = vmatprep.subr.mxu0 0.0
          %1107 = vmatpush1.msra.mxu0 0.0
          %1108 = vmatprep.subr.mxu0 0.0
          %1109 = vmatpush1.msra.mxu0 0.0
          %1110 = vmatprep.subr.mxu0 0.0
          %1111 = vmatpush1.msra.mxu0 0.0
          %1112 = vmatprep.subr.mxu0 0.0
          %1113 = vmatpush1.msra.mxu0 0.0
          %1114 = vmatprep.subr.mxu0 0.0
          %1115 = vmatpush1.msra.mxu0 0.0
          %1116 = vmatprep.subr.mxu0 0.0
          %1117 = vmatpush1.msra.mxu0 0.0
          %1118 = vmatprep.subr.mxu0 0.0
          %1119 = vmatpush1.msra.mxu0 0.0
          %1120 = vmatprep.subr.mxu0 0.0
          %1121 = vmatpush1.msra.mxu0 0.0
          %1122 = vmatprep.subr.mxu0 0.0
          %1123 = vmatpush1.msra.mxu0 0.0
          %1124 = vmatprep.subr.mxu0 0.0
          %1125 = vmatpush1.msra.mxu0 0.0
          %1126 = vmatprep.subr.mxu0 0.0
          %1127 = vmatpush1.msra.mxu0 0.0
          %1128 = vmatprep.subr.mxu0 0.0
          %1129 = vmatpush1.msra.mxu0 0.0
          %1130 = vmatprep.subr.mxu0 0.0
          %1131 = vmatpush1.msra.mxu0 0.0
          %1132 = vmatprep.subr.mxu0 0.0
          %1133 = vmatpush1.msra.mxu0 0.0
          %1134 = vmatprep.subr.mxu0 0.0
          %1135 = vmatpush1.msra.mxu0 0.0
          %1136 = vmatprep.subr.mxu0 0.0
          %1137 = vmatpush1.msra.mxu0 0.0
          %1138 = vmatprep.subr.mxu0 0.0
          %1139 = vmatpush1.msra.mxu0 0.0
          %1140 = vmatprep.subr.mxu0 0.0
          %1141 = vmatpush1.msra.mxu0 0.0
          %1142 = vmatprep.mubr.f32.mxu0 0.0
          %1143 = vmatmul.mubr.f32.gmra.mrb[0].mxu0 %v1055
          %v1144 = vpop.f32.mrb[0].mxu0
          %v1145 = vadd.f32 0.0, %v1144
          %v1146 = vpop.f32.mrb[0].mxu0
          %1147 = vmatprep.mubr.f32.mxu0 0.0
          %1148 = vmatmul.mubr.f32.gmra.mrb[0].mxu0 %v1058
          %v1149 = vpop.f32.mrb[0].mxu0
          %v1150 = vadd.f32 0.0, %v1149
          %v1151 = vpop.f32.mrb[0].mxu0
          %1152 = vmatprep.mubr.f32.mxu0 0.0
          %1153 = vmatmul.mubr.f32.gmra.mrb[0].mxu0 %v1061
          %v1154 = vpop.f32.mrb[0].mxu0
          %v1155 = vadd.f32 0.0, %v1154
          %v1156 = vpop.f32.mrb[0].mxu0
          %1157 = vmatprep.mubr.f32.mxu0 0.0
          %1158 = vmatmul.mubr.f32.gmra.mrb[0].mxu0 %v1064
          %v1159 = vpop.f32.mrb[0].mxu0
          %v1160 = vadd.f32 0.0, %v1159
          %v1161 = vpop.f32.mrb[0].mxu0
          %1162 = vmatprep.mubr.f32.mxu0 0.0
          %1163 = vmatmul.mubr.f32.gmra.mrb[0].mxu0 %v1067
          %v1164 = vpop.f32.mrb[0].mxu0
          %v1165 = vadd.f32 0.0, %v1164
          %v1166 = vpop.f32.mrb[0].mxu0
          %1167 = vmatprep.mubr.f32.mxu0 0.0
          %1168 = vmatmul.mubr.f32.gmra.mrb[0].mxu0 %v1070
          %v1169 = vpop.f32.mrb[0].mxu0
          %v1170 = vadd.f32 0.0, %v1169
          %v1171 = vpop.f32.mrb[0].mxu0
          %1172 = vmatprep.mubr.f32.mxu0 0.0
          %1173 = vmatmul.mubr.f32.gmra.mrb[0].mxu0 %v1073
          %v1174 = vpop.f32.mrb[0].mxu0
          %v1175 = vadd.f32 0.0, %v1174
          %v1176 = vpop.f32.mrb[0].mxu0
          %1177 = vmatprep.mubr.f32.mxu0 0.0
          %1178 = vmatmul.mubr.f32.gmra.mrb[0].mxu0 %v1076
          %v1179 = vpop.f32.mrb[0].mxu0
          %v1180 = vadd.f32 0.0, %v1179
          %v1181 = vpop.f32.mrb[0].mxu0
          %1182 = vdwg.mxu0
          %v1183 = vld [vmem:[#allocation12] sm:$0xff]
          %v1184 = vld [vmem:[#allocation12 + $0x8] sm:$0xff]
          %v1185 = vld [vmem:[#allocation12 + $0x10] sm:$0xff]
          %v1186 = vld [vmem:[#allocation12 + $0x18] sm:$0xff]
          %vm1187 = vcmask 261120
          %v1189 = vsel %vm1187, %v1035, 0
          %1191 = vmatprep.subr.mxu0 0.0
          %1192 = vmatpush1.msra.mxu0 %v1183
          %1193 = vmatprep.subr.mxu0 0.0
          %1194 = vmatpush1.msra.mxu0 %v1184
          %1195 = vmatprep.subr.mxu0 0.0
          %1196 = vmatpush1.msra.mxu0 %v1185
          %1197 = vmatprep.subr.mxu0 0.0
          %1198 = vmatpush1.msra.mxu0 %v1186
          %1199 = vmatprep.subr.mxu0 0.0
          %1200 = vmatpush1.msra.mxu0 0.0
          %1201 = vmatprep.subr.mxu0 0.0
          %1202 = vmatpush1.msra.mxu0 0.0
          %1203 = vmatprep.subr.mxu0 0.0
          %1204 = vmatpush1.msra.mxu0 0.0
          %1205 = vmatprep.subr.mxu0 0.0
          %1206 = vmatpush1.msra.mxu0 0.0
          %1207 = vmatprep.subr.mxu0 0.0
          %1208 = vmatpush1.msra.mxu0 0.0
          %1209 = vmatprep.subr.mxu0 0.0
          %1210 = vmatpush1.msra.mxu0 0.0
          %1211 = vmatprep.subr.mxu0 0.0
          %1212 = vmatpush1.msra.mxu0 0.0
          %1213 = vmatprep.subr.mxu0 0.0
          %1214 = vmatpush1.msra.mxu0 0.0
          %1215 = vmatprep.subr.mxu0 0.0
          %1216 = vmatpush1.msra.mxu0 0.0
          %1217 = vmatprep.subr.mxu0 0.0
          %1218 = vmatpush1.msra.mxu0 0.0
          %1219 = vmatprep.subr.mxu0 0.0
          %1220 = vmatpush1.msra.mxu0 0.0
          %1221 = vmatprep.subr.mxu0 0.0
          %1222 = vmatpush1.msra.mxu0 0.0
          %1223 = vmatprep.subr.mxu0 0.0
          %1224 = vmatpush1.msra.mxu0 0.0
          %1225 = vmatprep.subr.mxu0 0.0
          %1226 = vmatpush1.msra.mxu0 0.0
          %1227 = vmatprep.subr.mxu0 0.0
          %1228 = vmatpush1.msra.mxu0 0.0
          %1229 = vmatprep.subr.mxu0 0.0
          %1230 = vmatpush1.msra.mxu0 0.0
          %1231 = vmatprep.subr.mxu0 0.0
          %1232 = vmatpush1.msra.mxu0 0.0
          %1233 = vmatprep.subr.mxu0 0.0
          %1234 = vmatpush1.msra.mxu0 0.0
          %1235 = vmatprep.subr.mxu0 0.0
          %1236 = vmatpush1.msra.mxu0 0.0
          %1237 = vmatprep.subr.mxu0 0.0
          %1238 = vmatpush1.msra.mxu0 0.0
          %1239 = vmatprep.subr.mxu0 0.0
          %1240 = vmatpush1.msra.mxu0 0.0
          %1241 = vmatprep.subr.mxu0 0.0
          %1242 = vmatpush1.msra.mxu0 0.0
          %1243 = vmatprep.subr.mxu0 0.0
          %1244 = vmatpush1.msra.mxu0 0.0
          %1245 = vmatprep.subr.mxu0 0.0
          %1246 = vmatpush1.msra.mxu0 0.0
          %1247 = vmatprep.subr.mxu0 0.0
          %1248 = vmatpush1.msra.mxu0 0.0
          %1249 = vmatprep.subr.mxu0 0.0
          %1250 = vmatpush1.msra.mxu0 0.0
          %1251 = vmatprep.subr.mxu0 0.0
          %1252 = vmatpush1.msra.mxu0 0.0
          %1253 = vmatprep.subr.mxu0 0.0
          %1254 = vmatpush1.msra.mxu0 0.0
          %1255 = vmatprep.mubr.f32.mxu0 0.0
          %1256 = vmatmul.mubr.f32.gmra.mrb[0].mxu0 %v1189
          %v1257 = vpop.f32.mrb[0].mxu0
          %v1258 = vadd.f32 0.0, %v1257
          %v1259 = vpop.f32.mrb[0].mxu0
          %1260 = vdwg.mxu0
          %v1262 = vcombine.high %v1258, %v1258
          %v1264 = vunpack.c.l.s4 1966171168
          %v1265 = vunpack.c.0.s8 %v1264
          %v1266 = vlaneseq
          %v1267 = vshrl.u32 %v1266, 7
          %v1268 = vsub.s32 %v1265, %v1267
          %v1269 = vrot.slane %v1258, %v1268
          %v1271 = vunpack.c.l.s4 1966171168
          %v1272 = vunpack.c.0.s8 %v1271
          %v1273 = vlaneseq
          %v1274 = vshrl.u32 %v1273, 7
          %v1275 = vsub.s32 %v1272, %v1274
          %v1276 = vrot.slane %v1262, %v1275
          %v1277 = vcombine.high %v1269, %v1269
          %v1278 = vcombine.high %v1276, %v1276
          %v1280 = vunpack.c.l.s4 1966171168
          %v1281 = vunpack.c.0.s8 %v1280
          %v1282 = vlaneseq
          %v1283 = vshrl.u32 %v1282, 7
          %v1284 = vsub.s32 %v1281, %v1283
          %v1285 = vrot.slane %v1269, %v1284
          %v1287 = vunpack.c.l.s4 1966171168
          %v1288 = vunpack.c.0.s8 %v1287
          %v1289 = vlaneseq
          %v1290 = vshrl.u32 %v1289, 7
          %v1291 = vsub.s32 %v1288, %v1290
          %v1292 = vrot.slane %v1276, %v1291
          %v1294 = vunpack.c.l.s4 1966171168
          %v1295 = vunpack.c.0.s8 %v1294
          %v1296 = vlaneseq
          %v1297 = vshrl.u32 %v1296, 7
          %v1298 = vsub.s32 %v1295, %v1297
          %v1299 = vrot.slane %v1277, %v1298
          %v1301 = vunpack.c.l.s4 1966171168
          %v1302 = vunpack.c.0.s8 %v1301
          %v1303 = vlaneseq
          %v1304 = vshrl.u32 %v1303, 7
          %v1305 = vsub.s32 %v1302, %v1304
          %v1306 = vrot.slane %v1278, %v1305
          %v1307 = vcombine.high %v1285, %v1285
          %v1308 = vcombine.high %v1292, %v1292
          %v1309 = vcombine.high %v1299, %v1299
          %v1310 = vcombine.high %v1306, %v1306
          %v1311 = vlaneseq
          %v1312 = vshrl.u32 %v1311, 7
          %v1313 = vsub.s32 0, %v1312
          %v1314 = vrot.slane %v1285, %v1313
          %v1315 = vlaneseq
          %v1316 = vshrl.u32 %v1315, 7
          %v1317 = vsub.s32 0, %v1316
          %v1318 = vrot.slane %v1299, %v1317
          %v1319 = vlaneseq
          %v1320 = vshrl.u32 %v1319, 7
          %v1321 = vsub.s32 0, %v1320
          %v1322 = vrot.slane %v1307, %v1321
          %v1323 = vlaneseq
          %v1324 = vshrl.u32 %v1323, 7
          %v1325 = vsub.s32 0, %v1324
          %v1326 = vrot.slane %v1309, %v1325
          %v1327 = vlaneseq
          %v1328 = vshrl.u32 %v1327, 7
          %v1329 = vsub.s32 0, %v1328
          %v1330 = vrot.slane %v1292, %v1329
          %v1331 = vlaneseq
          %v1332 = vshrl.u32 %v1331, 7
          %v1333 = vsub.s32 0, %v1332
          %v1334 = vrot.slane %v1306, %v1333
          %v1335 = vlaneseq
          %v1336 = vshrl.u32 %v1335, 7
          %v1337 = vsub.s32 0, %v1336
          %v1338 = vrot.slane %v1308, %v1337
          %v1339 = vlaneseq
          %v1340 = vshrl.u32 %v1339, 7
          %v1341 = vsub.s32 0, %v1340
          %v1342 = vrot.slane %v1310, %v1341
          %v1351 = vadd.f32 %v1145, %v1314
          %v1352 = vadd.f32 %v1150, %v1318
          %v1353 = vadd.f32 %v1155, %v1322
          %v1354 = vadd.f32 %v1160, %v1326
          %v1355 = vadd.f32 %v1165, %v1330
          %v1356 = vadd.f32 %v1170, %v1334
          %v1357 = vadd.f32 %v1175, %v1338
          %v1358 = vadd.f32 %v1180, %v1342
          %v1359 = vtanh.pop %v1351
          %v1360 = vtanh.pop %v1352
          %v1361 = vtanh.pop %v1353
          %v1362 = vtanh.pop %v1354
          %v1363 = vtanh.pop %v1355
          %v1364 = vtanh.pop %v1356
          %v1365 = vtanh.pop %v1357
          %v1366 = vtanh.pop %v1358
          %v1367 = vld [vmem:[#allocation14] sm:$0x1]
          %v1369 = vlaneseq
          %v1370 = vshrl.u32 %v1369, 7
          %v1371 = vsub.s32 0, %v1370
          %v1372 = vrot.slane %v1367, %v1371
          %v1374 = vmul.f32 %v1359, %v1372
          %v1375 = vmul.f32 %v1360, %v1372
          %v1376 = vmul.f32 %v1361, %v1372
          %v1377 = vmul.f32 %v1362, %v1372
          %v1378 = vmul.f32 %v1363, %v1372
          %v1379 = vmul.f32 %v1364, %v1372
          %v1380 = vmul.f32 %v1365, %v1372
          %v1381 = vmul.f32 %v1366, %v1372
          %v1382 = vsel %vm1187, %v1374, 0.0
          %1383 = vadd.xlane.f32.xlu0 %v1382
          %v1384 = vpop.xlane.xlu0 %1383
          %v1385 = vsel %vm1187, %v1375, 0.0
          %1386 = vadd.xlane.f32.xlu0 %v1385
          %v1387 = vpop.xlane.xlu0 %1386
          %v1388 = vsel %vm1187, %v1376, 0.0
          %1389 = vadd.xlane.f32.xlu0 %v1388
          %v1390 = vpop.xlane.xlu0 %1389
          %v1391 = vsel %vm1187, %v1377, 0.0
          %1392 = vadd.xlane.f32.xlu0 %v1391
          %v1393 = vpop.xlane.xlu0 %1392
          %v1394 = vsel %vm1187, %v1378, 0.0
          %1395 = vadd.xlane.f32.xlu0 %v1394
          %v1396 = vpop.xlane.xlu0 %1395
          %v1397 = vsel %vm1187, %v1379, 0.0
          %1398 = vadd.xlane.f32.xlu0 %v1397
          %v1399 = vpop.xlane.xlu0 %1398
          %v1400 = vsel %vm1187, %v1380, 0.0
          %1401 = vadd.xlane.f32.xlu0 %v1400
          %v1402 = vpop.xlane.xlu0 %1401
          %v1403 = vsel %vm1187, %v1381, 0.0
          %1404 = vadd.xlane.f32.xlu0 %v1403
          %v1405 = vpop.xlane.xlu0 %1404
          %vm1406 = vcmp.gt.f32.partialorder %v1044, 0.0
          %v1415 = vlaneseq
          %v1416 = vand.u32 %v1415, 127
          %v1417 = vlaneseq
          %v1418 = vshrl.u32 %v1417, 7
          %v1419 = vsub.s32 %v1416, %v1418
          %v1420 = vrot.slane %v1384, %v1419
          %v1421 = vlaneseq
          %v1422 = vshrl.u32 %v1421, 7
          %v1423 = vsub.s32 %v1416, %v1422
          %v1424 = vrot.slane %v1387, %v1423
          %v1425 = vlaneseq
          %v1426 = vshrl.u32 %v1425, 7
          %v1427 = vsub.s32 %v1416, %v1426
          %v1428 = vrot.slane %v1390, %v1427
          %v1429 = vlaneseq
          %v1430 = vshrl.u32 %v1429, 7
          %v1431 = vsub.s32 %v1416, %v1430
          %v1432 = vrot.slane %v1393, %v1431
          %v1433 = vlaneseq
          %v1434 = vshrl.u32 %v1433, 7
          %v1435 = vsub.s32 %v1416, %v1434
          %v1436 = vrot.slane %v1396, %v1435
          %v1437 = vlaneseq
          %v1438 = vshrl.u32 %v1437, 7
          %v1439 = vsub.s32 %v1416, %v1438
          %v1440 = vrot.slane %v1399, %v1439
          %v1441 = vlaneseq
          %v1442 = vshrl.u32 %v1441, 7
          %v1443 = vsub.s32 %v1416, %v1442
          %v1444 = vrot.slane %v1402, %v1443
          %v1445 = vlaneseq
          %v1446 = vshrl.u32 %v1445, 7
          %v1447 = vsub.s32 %v1416, %v1446
          %v1448 = vrot.slane %v1405, %v1447
          %vm1449 = vcmask 1041409
          %v1450 = vsel %vm1449, %v1424, %v1420
          %vm1451 = vcmask 1042434
          %v1452 = vsel %vm1451, %v1428, %v1450
          %vm1453 = vcmask 1043459
          %v1454 = vsel %vm1453, %v1432, %v1452
          %vm1455 = vcmask 1044484
          %v1456 = vsel %vm1455, %v1436, %v1454
          %vm1457 = vcmask 1045509
          %v1458 = vsel %vm1457, %v1440, %v1456
          %vm1459 = vcmask 1046534
          %v1460 = vsel %vm1459, %v1444, %v1458
          %vm1461 = vcmask 1047559
          %v1462 = vsel %vm1461, %v1448, %v1460
          %v1464 = vsel %vm1406, %v1462, -1e+09
          %vm1465 = vcmask 64512
          %v1466 = vsel %vm1465, %v1464, -inf
          %1467 = vmax.xlane.f32.xlu0 %v1466
          %v1468 = vpop.xlane.xlu0 %1467
          %v1469 = vsub.f32 %v1464, %v1468
          %v1470 = vmul.f32 %v1469, 1.442695
          %v1471 = vpow.pop %v1470
          %v1472 = vsel %vm1465, %v1471, 0.0
          %1473 = vadd.xlane.f32.xlu0 %v1472
          %v1474 = vpop.xlane.xlu0 %1473
          %v1475 = vrcp.pop %v1474
          %v1476 = vmul.f32 %v1471, %v1475
          %v1477 = vlaneseq
          %v1478 = vshrl.u32 %v1477, 7
          %v1479 = vsub.s32 0, %v1478
          %v1480 = vrot.slane %v1476, %v1479
          %1482 = vbcast.lane.b32.xlu0 %v1480, 256
          %v1483 = vpop.permute.xlu0 %1482
          %v1484 = vlaneseq
          %v1485 = vshrl.u32 %v1484, 7
          %v1486 = vsub.s32 1, %v1485
          %v1487 = vrot.slane %v1476, %v1486
          %1489 = vbcast.lane.b32.xlu0 %v1487, 256
          %v1490 = vpop.permute.xlu0 %1489
          %v1491 = vlaneseq
          %v1492 = vshrl.u32 %v1491, 7
          %v1493 = vsub.s32 2, %v1492
          %v1494 = vrot.slane %v1476, %v1493
          %1496 = vbcast.lane.b32.xlu0 %v1494, 256
          %v1497 = vpop.permute.xlu0 %1496
          %v1498 = vlaneseq
          %v1499 = vshrl.u32 %v1498, 7
          %v1500 = vsub.s32 3, %v1499
          %v1501 = vrot.slane %v1476, %v1500
          %1503 = vbcast.lane.b32.xlu0 %v1501, 256
          %v1504 = vpop.permute.xlu0 %1503
          %v1505 = vlaneseq
          %v1506 = vshrl.u32 %v1505, 7
          %v1507 = vsub.s32 4, %v1506
          %v1508 = vrot.slane %v1476, %v1507
          %1510 = vbcast.lane.b32.xlu0 %v1508, 256
          %v1511 = vpop.permute.xlu0 %1510
          %v1512 = vlaneseq
          %v1513 = vshrl.u32 %v1512, 7
          %v1514 = vsub.s32 5, %v1513
          %v1515 = vrot.slane %v1476, %v1514
          %1517 = vbcast.lane.b32.xlu0 %v1515, 256
          %v1518 = vpop.permute.xlu0 %1517
          %v1519 = vlaneseq
          %v1520 = vshrl.u32 %v1519, 7
          %v1521 = vsub.s32 6, %v1520
          %v1522 = vrot.slane %v1476, %v1521
          %1524 = vbcast.lane.b32.xlu0 %v1522, 256
          %v1525 = vpop.permute.xlu0 %1524
          %v1526 = vlaneseq
          %v1527 = vshrl.u32 %v1526, 7
          %v1528 = vsub.s32 7, %v1527
          %v1529 = vrot.slane %v1476, %v1528
          %1531 = vbcast.lane.b32.xlu0 %v1529, 256
          %v1532 = vpop.permute.xlu0 %1531
          %v1533 = vmul.f32 %v1483, %v1036
          %v1534 = vmul.f32 %v1490, %v1037
          %v1535 = vmul.f32 %v1497, %v1038
          %v1536 = vmul.f32 %v1504, %v1039
          %v1537 = vmul.f32 %v1511, %v1040
          %v1538 = vmul.f32 %v1518, %v1041
          %v1539 = vmul.f32 %v1525, %v1042
          %v1540 = vmul.f32 %v1532, %v1043
          %v1541 = vsel %vm1053, %v1533, 0.0
          %v1542 = vrot.slane %v1541, 4
          %v1543 = vadd.f32 %v1541, %v1542
          %v1544 = vrot.slane %v1543, 2
          %v1545 = vadd.f32 %v1543, %v1544
          %v1546 = vrot.slane %v1545, 1
          %v1547 = vadd.f32 %v1545, %v1546
          %v1548 = vsel %vm1053, %v1534, 0.0
          %v1549 = vrot.slane %v1548, 4
          %v1550 = vadd.f32 %v1548, %v1549
          %v1551 = vrot.slane %v1550, 2
          %v1552 = vadd.f32 %v1550, %v1551
          %v1553 = vrot.slane %v1552, 1
          %v1554 = vadd.f32 %v1552, %v1553
          %v1555 = vsel %vm1053, %v1535, 0.0
          %v1556 = vrot.slane %v1555, 4
          %v1557 = vadd.f32 %v1555, %v1556
          %v1558 = vrot.slane %v1557, 2
          %v1559 = vadd.f32 %v1557, %v1558
          %v1560 = vrot.slane %v1559, 1
          %v1561 = vadd.f32 %v1559, %v1560
          %v1562 = vsel %vm1053, %v1536, 0.0
          %v1563 = vrot.slane %v1562, 4
          %v1564 = vadd.f32 %v1562, %v1563
          %v1565 = vrot.slane %v1564, 2
          %v1566 = vadd.f32 %v1564, %v1565
          %v1567 = vrot.slane %v1566, 1
          %v1568 = vadd.f32 %v1566, %v1567
          %v1569 = vsel %vm1053, %v1537, 0.0
          %v1570 = vrot.slane %v1569, 4
          %v1571 = vadd.f32 %v1569, %v1570
          %v1572 = vrot.slane %v1571, 2
          %v1573 = vadd.f32 %v1571, %v1572
          %v1574 = vrot.slane %v1573, 1
          %v1575 = vadd.f32 %v1573, %v1574
          %v1576 = vsel %vm1053, %v1538, 0.0
          %v1577 = vrot.slane %v1576, 4
          %v1578 = vadd.f32 %v1576, %v1577
          %v1579 = vrot.slane %v1578, 2
          %v1580 = vadd.f32 %v1578, %v1579
          %v1581 = vrot.slane %v1580, 1
          %v1582 = vadd.f32 %v1580, %v1581
          %v1583 = vsel %vm1053, %v1539, 0.0
          %v1584 = vrot.slane %v1583, 4
          %v1585 = vadd.f32 %v1583, %v1584
          %v1586 = vrot.slane %v1585, 2
          %v1587 = vadd.f32 %v1585, %v1586
          %v1588 = vrot.slane %v1587, 1
          %v1589 = vadd.f32 %v1587, %v1588
          %v1590 = vsel %vm1053, %v1540, 0.0
          %v1591 = vrot.slane %v1590, 4
          %v1592 = vadd.f32 %v1590, %v1591
          %v1593 = vrot.slane %v1592, 2
          %v1594 = vadd.f32 %v1592, %v1593
          %v1595 = vrot.slane %v1594, 1
          %v1596 = vadd.f32 %v1594, %v1595
          %v1597 = vld [vmem:[#allocation15] sm:$0xff]
          %v1598 = vld [vmem:[#allocation15 + $0x8] sm:$0xff]
          %v1599 = vld [vmem:[#allocation15 + $0x10] sm:$0xff]
          %v1600 = vld [vmem:[#allocation15 + $0x18] sm:$0xff]
          %v1601 = vld [vmem:[#allocation20] sm:$0xff]
          %v1602 = vld [vmem:[#allocation20 + $0x8] sm:$0xff]
          %v1603 = vld [vmem:[#allocation20 + $0x10] sm:$0xff]
          %v1604 = vld [vmem:[#allocation20 + $0x18] sm:$0xff]
          %v1605 = vld [vmem:[#allocation20 + $0x20] sm:$0xff]
          %v1606 = vld [vmem:[#allocation20 + $0x28] sm:$0xff]
          %v1607 = vld [vmem:[#allocation20 + $0x30] sm:$0xff]
          %v1608 = vld [vmem:[#allocation20 + $0x38] sm:$0xff]
          %v1617 = vsel %vm1449, %v1554, %v1547
          %v1618 = vsel %vm1451, %v1561, %v1617
          %v1619 = vsel %vm1453, %v1568, %v1618
          %v1620 = vsel %vm1455, %v1575, %v1619
          %v1621 = vsel %vm1457, %v1582, %v1620
          %v1622 = vsel %vm1459, %v1589, %v1621
          %v1623 = vsel %vm1461, %v1596, %v1622
          %v1624 = vsel %vm1053, %v1623, 0
          %1626 = vmatprep.subr.mxu0 0.0
          %1627 = vmatpush1.msra.mxu0 %v1601
          %1628 = vmatprep.subr.mxu0 0.0
          %1629 = vmatpush1.msra.mxu0 %v1602
          %1630 = vmatprep.subr.mxu0 0.0
          %1631 = vmatpush1.msra.mxu0 %v1603
          %1632 = vmatprep.subr.mxu0 0.0
          %1633 = vmatpush1.msra.mxu0 %v1604
          %1634 = vmatprep.subr.mxu0 0.0
          %1635 = vmatpush1.msra.mxu0 %v1605
          %1636 = vmatprep.subr.mxu0 0.0
          %1637 = vmatpush1.msra.mxu0 %v1606
          %1638 = vmatprep.subr.mxu0 0.0
          %1639 = vmatpush1.msra.mxu0 %v1607
          %1640 = vmatprep.subr.mxu0 0.0
          %1641 = vmatpush1.msra.mxu0 %v1608
          %1642 = vmatprep.subr.mxu0 0.0
          %1643 = vmatpush1.msra.mxu0 0.0
          %1644 = vmatprep.subr.mxu0 0.0
          %1645 = vmatpush1.msra.mxu0 0.0
          %1646 = vmatprep.subr.mxu0 0.0
          %1647 = vmatpush1.msra.mxu0 0.0
          %1648 = vmatprep.subr.mxu0 0.0
          %1649 = vmatpush1.msra.mxu0 0.0
          %1650 = vmatprep.subr.mxu0 0.0
          %1651 = vmatpush1.msra.mxu0 0.0
          %1652 = vmatprep.subr.mxu0 0.0
          %1653 = vmatpush1.msra.mxu0 0.0
          %1654 = vmatprep.subr.mxu0 0.0
          %1655 = vmatpush1.msra.mxu0 0.0
          %1656 = vmatprep.subr.mxu0 0.0
          %1657 = vmatpush1.msra.mxu0 0.0
          %1658 = vmatprep.subr.mxu0 0.0
          %1659 = vmatpush1.msra.mxu0 0.0
          %1660 = vmatprep.subr.mxu0 0.0
          %1661 = vmatpush1.msra.mxu0 0.0
          %1662 = vmatprep.subr.mxu0 0.0
          %1663 = vmatpush1.msra.mxu0 0.0
          %1664 = vmatprep.subr.mxu0 0.0
          %1665 = vmatpush1.msra.mxu0 0.0
          %1666 = vmatprep.subr.mxu0 0.0
          %1667 = vmatpush1.msra.mxu0 0.0
          %1668 = vmatprep.subr.mxu0 0.0
          %1669 = vmatpush1.msra.mxu0 0.0
          %1670 = vmatprep.subr.mxu0 0.0
          %1671 = vmatpush1.msra.mxu0 0.0
          %1672 = vmatprep.subr.mxu0 0.0
          %1673 = vmatpush1.msra.mxu0 0.0
          %1674 = vmatprep.subr.mxu0 0.0
          %1675 = vmatpush1.msra.mxu0 0.0
          %1676 = vmatprep.subr.mxu0 0.0
          %1677 = vmatpush1.msra.mxu0 0.0
          %1678 = vmatprep.subr.mxu0 0.0
          %1679 = vmatpush1.msra.mxu0 0.0
          %1680 = vmatprep.subr.mxu0 0.0
          %1681 = vmatpush1.msra.mxu0 0.0
          %1682 = vmatprep.subr.mxu0 0.0
          %1683 = vmatpush1.msra.mxu0 0.0
          %1684 = vmatprep.subr.mxu0 0.0
          %1685 = vmatpush1.msra.mxu0 0.0
          %1686 = vmatprep.subr.mxu0 0.0
          %1687 = vmatpush1.msra.mxu0 0.0
          %1688 = vmatprep.subr.mxu0 0.0
          %1689 = vmatpush1.msra.mxu0 0.0
          %1690 = vmatprep.mubr.f32.mxu0 0.0
          %1691 = vmatmul.mubr.f32.gmra.mrb[0].mxu0 %v1624
          %v1692 = vpop.f32.mrb[0].mxu0
          %v1693 = vadd.f32 0.0, %v1692
          %v1694 = vpop.f32.mrb[0].mxu0
          %1695 = vdwg.mxu0
          %v1697 = vsel %vm1187, %v1034, 0
          %1699 = vmatprep.subr.mxu0 0.0
          %1700 = vmatpush1.msra.mxu0 %v1597
          %1701 = vmatprep.subr.mxu0 0.0
          %1702 = vmatpush1.msra.mxu0 %v1598
          %1703 = vmatprep.subr.mxu0 0.0
          %1704 = vmatpush1.msra.mxu0 %v1599
          %1705 = vmatprep.subr.mxu0 0.0
          %1706 = vmatpush1.msra.mxu0 %v1600
          %1707 = vmatprep.subr.mxu0 0.0
          %1708 = vmatpush1.msra.mxu0 0.0
          %1709 = vmatprep.subr.mxu0 0.0
          %1710 = vmatpush1.msra.mxu0 0.0
          %1711 = vmatprep.subr.mxu0 0.0
          %1712 = vmatpush1.msra.mxu0 0.0
          %1713 = vmatprep.subr.mxu0 0.0
          %1714 = vmatpush1.msra.mxu0 0.0
          %1715 = vmatprep.subr.mxu0 0.0
          %1716 = vmatpush1.msra.mxu0 0.0
          %1717 = vmatprep.subr.mxu0 0.0
          %1718 = vmatpush1.msra.mxu0 0.0
          %1719 = vmatprep.subr.mxu0 0.0
          %1720 = vmatpush1.msra.mxu0 0.0
          %1721 = vmatprep.subr.mxu0 0.0
          %1722 = vmatpush1.msra.mxu0 0.0
          %1723 = vmatprep.subr.mxu0 0.0
          %1724 = vmatpush1.msra.mxu0 0.0
          %1725 = vmatprep.subr.mxu0 0.0
          %1726 = vmatpush1.msra.mxu0 0.0
          %1727 = vmatprep.subr.mxu0 0.0
          %1728 = vmatpush1.msra.mxu0 0.0
          %1729 = vmatprep.subr.mxu0 0.0
          %1730 = vmatpush1.msra.mxu0 0.0
          %1731 = vmatprep.subr.mxu0 0.0
          %1732 = vmatpush1.msra.mxu0 0.0
          %1733 = vmatprep.subr.mxu0 0.0
          %1734 = vmatpush1.msra.mxu0 0.0
          %1735 = vmatprep.subr.mxu0 0.0
          %1736 = vmatpush1.msra.mxu0 0.0
          %1737 = vmatprep.subr.mxu0 0.0
          %1738 = vmatpush1.msra.mxu0 0.0
          %1739 = vmatprep.subr.mxu0 0.0
          %1740 = vmatpush1.msra.mxu0 0.0
          %1741 = vmatprep.subr.mxu0 0.0
          %1742 = vmatpush1.msra.mxu0 0.0
          %1743 = vmatprep.subr.mxu0 0.0
          %1744 = vmatpush1.msra.mxu0 0.0
          %1745 = vmatprep.subr.mxu0 0.0
          %1746 = vmatpush1.msra.mxu0 0.0
          %1747 = vmatprep.subr.mxu0 0.0
          %1748 = vmatpush1.msra.mxu0 0.0
          %1749 = vmatprep.subr.mxu0 0.0
          %1750 = vmatpush1.msra.mxu0 0.0
          %1751 = vmatprep.subr.mxu0 0.0
          %1752 = vmatpush1.msra.mxu0 0.0
          %1753 = vmatprep.subr.mxu0 0.0
          %1754 = vmatpush1.msra.mxu0 0.0
          %1755 = vmatprep.subr.mxu0 0.0
          %1756 = vmatpush1.msra.mxu0 0.0
          %1757 = vmatprep.subr.mxu0 0.0
          %1758 = vmatpush1.msra.mxu0 0.0
          %1759 = vmatprep.subr.mxu0 0.0
          %1760 = vmatpush1.msra.mxu0 0.0
          %1761 = vmatprep.subr.mxu0 0.0
          %1762 = vmatpush1.msra.mxu0 0.0
          %1763 = vmatprep.mubr.f32.mxu0 0.0
          %1764 = vmatmul.mubr.f32.gmra.mrb[0].mxu0 %v1697
          %v1765 = vpop.f32.mrb[0].mxu0
          %v1766 = vadd.f32 %v1693, %v1765
          %v1767 = vpop.f32.mrb[0].mxu0
          %1768 = vdwg.mxu0
          %v1769 = vld [vmem:[#allocation24] sm:$0xff]
          %v1770 = vld [vmem:[#allocation24 + $0x8] sm:$0xff]
          %v1771 = vld [vmem:[#allocation24 + $0x10] sm:$0xff]
          %v1772 = vld [vmem:[#allocation24 + $0x18] sm:$0xff]
          %1773 = vmatprep.subr.mxu0 0.0
          %1774 = vmatpush1.msra.mxu0 %v1769
          %1775 = vmatprep.subr.mxu0 0.0
          %1776 = vmatpush1.msra.mxu0 %v1770
          %1777 = vmatprep.subr.mxu0 0.0
          %1778 = vmatpush1.msra.mxu0 %v1771
          %1779 = vmatprep.subr.mxu0 0.0
          %1780 = vmatpush1.msra.mxu0 %v1772
          %1781 = vmatprep.subr.mxu0 0.0
          %1782 = vmatpush1.msra.mxu0 0.0
          %1783 = vmatprep.subr.mxu0 0.0
          %1784 = vmatpush1.msra.mxu0 0.0
          %1785 = vmatprep.subr.mxu0 0.0
          %1786 = vmatpush1.msra.mxu0 0.0
          %1787 = vmatprep.subr.mxu0 0.0
          %1788 = vmatpush1.msra.mxu0 0.0
          %1789 = vmatprep.subr.mxu0 0.0
          %1790 = vmatpush1.msra.mxu0 0.0
          %1791 = vmatprep.subr.mxu0 0.0
          %1792 = vmatpush1.msra.mxu0 0.0
          %1793 = vmatprep.subr.mxu0 0.0
          %1794 = vmatpush1.msra.mxu0 0.0
          %1795 = vmatprep.subr.mxu0 0.0
          %1796 = vmatpush1.msra.mxu0 0.0
          %1797 = vmatprep.subr.mxu0 0.0
          %1798 = vmatpush1.msra.mxu0 0.0
          %1799 = vmatprep.subr.mxu0 0.0
          %1800 = vmatpush1.msra.mxu0 0.0
          %1801 = vmatprep.subr.mxu0 0.0
          %1802 = vmatpush1.msra.mxu0 0.0
          %1803 = vmatprep.subr.mxu0 0.0
          %1804 = vmatpush1.msra.mxu0 0.0
          %1805 = vmatprep.subr.mxu0 0.0
          %1806 = vmatpush1.msra.mxu0 0.0
          %1807 = vmatprep.subr.mxu0 0.0
          %1808 = vmatpush1.msra.mxu0 0.0
          %1809 = vmatprep.subr.mxu0 0.0
          %1810 = vmatpush1.msra.mxu0 0.0
          %1811 = vmatprep.subr.mxu0 0.0
          %1812 = vmatpush1.msra.mxu0 0.0
          %1813 = vmatprep.subr.mxu0 0.0
          %1814 = vmatpush1.msra.mxu0 0.0
          %1815 = vmatprep.subr.mxu0 0.0
          %1816 = vmatpush1.msra.mxu0 0.0
          %1817 = vmatprep.subr.mxu0 0.0
          %1818 = vmatpush1.msra.mxu0 0.0
          %1819 = vmatprep.subr.mxu0 0.0
          %1820 = vmatpush1.msra.mxu0 0.0
          %1821 = vmatprep.subr.mxu0 0.0
          %1822 = vmatpush1.msra.mxu0 0.0
          %1823 = vmatprep.subr.mxu0 0.0
          %1824 = vmatpush1.msra.mxu0 0.0
          %1825 = vmatprep.subr.mxu0 0.0
          %1826 = vmatpush1.msra.mxu0 0.0
          %1827 = vmatprep.subr.mxu0 0.0
          %1828 = vmatpush1.msra.mxu0 0.0
          %1829 = vmatprep.subr.mxu0 0.0
          %1830 = vmatpush1.msra.mxu0 0.0
          %1831 = vmatprep.subr.mxu0 0.0
          %1832 = vmatpush1.msra.mxu0 0.0
          %1833 = vmatprep.subr.mxu0 0.0
          %1834 = vmatpush1.msra.mxu0 0.0
          %1835 = vmatprep.subr.mxu0 0.0
          %1836 = vmatpush1.msra.mxu0 0.0
          %1837 = vmatprep.mubr.f32.mxu0 0.0
          %1838 = vmatmul.mubr.f32.gmra.mrb[0].mxu0 %v1189
          %v1839 = vpop.f32.mrb[0].mxu0
          %v1840 = vadd.f32 0.0, %v1839
          %v1841 = vpop.f32.mrb[0].mxu0
          %1842 = vdwg.mxu0
          %v1843 = vadd.f32 %v1766, %v1840
          %v1844 = vld [vmem:[#allocation29] sm:$0x1]
          %v1846 = vlaneseq
          %v1847 = vshrl.u32 %v1846, 7
          %v1848 = vsub.s32 0, %v1847
          %v1849 = vrot.slane %v1844, %v1848
          %v1851 = vadd.f32 %v1843, %v1849
          %v1852 = vld [vmem:[#allocation17] sm:$0xff]
          %v1853 = vld [vmem:[#allocation17 + $0x8] sm:$0xff]
          %v1854 = vld [vmem:[#allocation17 + $0x10] sm:$0xff]
          %v1855 = vld [vmem:[#allocation17 + $0x18] sm:$0xff]
          %v1856 = vld [vmem:[#allocation21] sm:$0xff]
          %v1857 = vld [vmem:[#allocation21 + $0x8] sm:$0xff]
          %v1858 = vld [vmem:[#allocation21 + $0x10] sm:$0xff]
          %v1859 = vld [vmem:[#allocation21 + $0x18] sm:$0xff]
          %v1860 = vld [vmem:[#allocation21 + $0x20] sm:$0xff]
          %v1861 = vld [vmem:[#allocation21 + $0x28] sm:$0xff]
          %v1862 = vld [vmem:[#allocation21 + $0x30] sm:$0xff]
          %v1863 = vld [vmem:[#allocation21 + $0x38] sm:$0xff]
          %1864 = vmatprep.subr.mxu0 0.0
          %1865 = vmatpush1.msra.mxu0 %v1856
          %1866 = vmatprep.subr.mxu0 0.0
          %1867 = vmatpush1.msra.mxu0 %v1857
          %1868 = vmatprep.subr.mxu0 0.0
          %1869 = vmatpush1.msra.mxu0 %v1858
          %1870 = vmatprep.subr.mxu0 0.0
          %1871 = vmatpush1.msra.mxu0 %v1859
          %1872 = vmatprep.subr.mxu0 0.0
          %1873 = vmatpush1.msra.mxu0 %v1860
          %1874 = vmatprep.subr.mxu0 0.0
          %1875 = vmatpush1.msra.mxu0 %v1861
          %1876 = vmatprep.subr.mxu0 0.0
          %1877 = vmatpush1.msra.mxu0 %v1862
          %1878 = vmatprep.subr.mxu0 0.0
          %1879 = vmatpush1.msra.mxu0 %v1863
          %1880 = vmatprep.subr.mxu0 0.0
          %1881 = vmatpush1.msra.mxu0 0.0
          %1882 = vmatprep.subr.mxu0 0.0
          %1883 = vmatpush1.msra.mxu0 0.0
          %1884 = vmatprep.subr.mxu0 0.0
          %1885 = vmatpush1.msra.mxu0 0.0
          %1886 = vmatprep.subr.mxu0 0.0
          %1887 = vmatpush1.msra.mxu0 0.0
          %1888 = vmatprep.subr.mxu0 0.0
          %1889 = vmatpush1.msra.mxu0 0.0
          %1890 = vmatprep.subr.mxu0 0.0
          %1891 = vmatpush1.msra.mxu0 0.0
          %1892 = vmatprep.subr.mxu0 0.0
          %1893 = vmatpush1.msra.mxu0 0.0
          %1894 = vmatprep.subr.mxu0 0.0
          %1895 = vmatpush1.msra.mxu0 0.0
          %1896 = vmatprep.subr.mxu0 0.0
          %1897 = vmatpush1.msra.mxu0 0.0
          %1898 = vmatprep.subr.mxu0 0.0
          %1899 = vmatpush1.msra.mxu0 0.0
          %1900 = vmatprep.subr.mxu0 0.0
          %1901 = vmatpush1.msra.mxu0 0.0
          %1902 = vmatprep.subr.mxu0 0.0
          %1903 = vmatpush1.msra.mxu0 0.0
          %1904 = vmatprep.subr.mxu0 0.0
          %1905 = vmatpush1.msra.mxu0 0.0
          %1906 = vmatprep.subr.mxu0 0.0
          %1907 = vmatpush1.msra.mxu0 0.0
          %1908 = vmatprep.subr.mxu0 0.0
          %1909 = vmatpush1.msra.mxu0 0.0
          %1910 = vmatprep.subr.mxu0 0.0
          %1911 = vmatpush1.msra.mxu0 0.0
          %1912 = vmatprep.subr.mxu0 0.0
          %1913 = vmatpush1.msra.mxu0 0.0
          %1914 = vmatprep.subr.mxu0 0.0
          %1915 = vmatpush1.msra.mxu0 0.0
          %1916 = vmatprep.subr.mxu0 0.0
          %1917 = vmatpush1.msra.mxu0 0.0
          %1918 = vmatprep.subr.mxu0 0.0
          %1919 = vmatpush1.msra.mxu0 0.0
          %1920 = vmatprep.subr.mxu0 0.0
          %1921 = vmatpush1.msra.mxu0 0.0
          %1922 = vmatprep.subr.mxu0 0.0
          %1923 = vmatpush1.msra.mxu0 0.0
          %1924 = vmatprep.subr.mxu0 0.0
          %1925 = vmatpush1.msra.mxu0 0.0
          %1926 = vmatprep.subr.mxu0 0.0
          %1927 = vmatpush1.msra.mxu0 0.0
          %1928 = vmatprep.mubr.f32.mxu0 0.0
          %1929 = vmatmul.mubr.f32.gmra.mrb[0].mxu0 %v1624
          %v1930 = vpop.f32.mrb[0].mxu0
          %v1931 = vadd.f32 0.0, %v1930
          %v1932 = vpop.f32.mrb[0].mxu0
          %1933 = vdwg.mxu0
          %1934 = vmatprep.subr.mxu0 0.0
          %1935 = vmatpush1.msra.mxu0 %v1852
          %1936 = vmatprep.subr.mxu0 0.0
          %1937 = vmatpush1.msra.mxu0 %v1853
          %1938 = vmatprep.subr.mxu0 0.0
          %1939 = vmatpush1.msra.mxu0 %v1854
          %1940 = vmatprep.subr.mxu0 0.0
          %1941 = vmatpush1.msra.mxu0 %v1855
          %1942 = vmatprep.subr.mxu0 0.0
          %1943 = vmatpush1.msra.mxu0 0.0
          %1944 = vmatprep.subr.mxu0 0.0
          %1945 = vmatpush1.msra.mxu0 0.0
          %1946 = vmatprep.subr.mxu0 0.0
          %1947 = vmatpush1.msra.mxu0 0.0
          %1948 = vmatprep.subr.mxu0 0.0
          %1949 = vmatpush1.msra.mxu0 0.0
          %1950 = vmatprep.subr.mxu0 0.0
          %1951 = vmatpush1.msra.mxu0 0.0
          %1952 = vmatprep.subr.mxu0 0.0
          %1953 = vmatpush1.msra.mxu0 0.0
          %1954 = vmatprep.subr.mxu0 0.0
          %1955 = vmatpush1.msra.mxu0 0.0
          %1956 = vmatprep.subr.mxu0 0.0
          %1957 = vmatpush1.msra.mxu0 0.0
          %1958 = vmatprep.subr.mxu0 0.0
          %1959 = vmatpush1.msra.mxu0 0.0
          %1960 = vmatprep.subr.mxu0 0.0
          %1961 = vmatpush1.msra.mxu0 0.0
          %1962 = vmatprep.subr.mxu0 0.0
          %1963 = vmatpush1.msra.mxu0 0.0
          %1964 = vmatprep.subr.mxu0 0.0
          %1965 = vmatpush1.msra.mxu0 0.0
          %1966 = vmatprep.subr.mxu0 0.0
          %1967 = vmatpush1.msra.mxu0 0.0
          %1968 = vmatprep.subr.mxu0 0.0
          %1969 = vmatpush1.msra.mxu0 0.0
          %1970 = vmatprep.subr.mxu0 0.0
          %1971 = vmatpush1.msra.mxu0 0.0
          %1972 = vmatprep.subr.mxu0 0.0
          %1973 = vmatpush1.msra.mxu0 0.0
          %1974 = vmatprep.subr.mxu0 0.0
          %1975 = vmatpush1.msra.mxu0 0.0
          %1976 = vmatprep.subr.mxu0 0.0
          %1977 = vmatpush1.msra.mxu0 0.0
          %1978 = vmatprep.subr.mxu0 0.0
          %1979 = vmatpush1.msra.mxu0 0.0
          %1980 = vmatprep.subr.mxu0 0.0
          %1981 = vmatpush1.msra.mxu0 0.0
          %1982 = vmatprep.subr.mxu0 0.0
          %1983 = vmatpush1.msra.mxu0 0.0
          %1984 = vmatprep.subr.mxu0 0.0
          %1985 = vmatpush1.msra.mxu0 0.0
          %1986 = vmatprep.subr.mxu0 0.0
          %1987 = vmatpush1.msra.mxu0 0.0
          %1988 = vmatprep.subr.mxu0 0.0
          %1989 = vmatpush1.msra.mxu0 0.0
          %1990 = vmatprep.subr.mxu0 0.0
          %1991 = vmatpush1.msra.mxu0 0.0
          %1992 = vmatprep.subr.mxu0 0.0
          %1993 = vmatpush1.msra.mxu0 0.0
          %1994 = vmatprep.subr.mxu0 0.0
          %1995 = vmatpush1.msra.mxu0 0.0
          %1996 = vmatprep.subr.mxu0 0.0
          %1997 = vmatpush1.msra.mxu0 0.0
          %1998 = vmatprep.mubr.f32.mxu0 0.0
          %1999 = vmatmul.mubr.f32.gmra.mrb[0].mxu0 %v1697
          %v2000 = vpop.f32.mrb[0].mxu0
          %v2001 = vadd.f32 %v1931, %v2000
          %v2002 = vpop.f32.mrb[0].mxu0
          %2003 = vdwg.mxu0
          %v2004 = vld [vmem:[#allocation26] sm:$0xff]
          %v2005 = vld [vmem:[#allocation26 + $0x8] sm:$0xff]
          %v2006 = vld [vmem:[#allocation26 + $0x10] sm:$0xff]
          %v2007 = vld [vmem:[#allocation26 + $0x18] sm:$0xff]
          %2008 = vmatprep.subr.mxu0 0.0
          %2009 = vmatpush1.msra.mxu0 %v2004
          %2010 = vmatprep.subr.mxu0 0.0
          %2011 = vmatpush1.msra.mxu0 %v2005
          %2012 = vmatprep.subr.mxu0 0.0
          %2013 = vmatpush1.msra.mxu0 %v2006
          %2014 = vmatprep.subr.mxu0 0.0
          %2015 = vmatpush1.msra.mxu0 %v2007
          %2016 = vmatprep.subr.mxu0 0.0
          %2017 = vmatpush1.msra.mxu0 0.0
          %2018 = vmatprep.subr.mxu0 0.0
          %2019 = vmatpush1.msra.mxu0 0.0
          %2020 = vmatprep.subr.mxu0 0.0
          %2021 = vmatpush1.msra.mxu0 0.0
          %2022 = vmatprep.subr.mxu0 0.0
          %2023 = vmatpush1.msra.mxu0 0.0
          %2024 = vmatprep.subr.mxu0 0.0
          %2025 = vmatpush1.msra.mxu0 0.0
          %2026 = vmatprep.subr.mxu0 0.0
          %2027 = vmatpush1.msra.mxu0 0.0
          %2028 = vmatprep.subr.mxu0 0.0
          %2029 = vmatpush1.msra.mxu0 0.0
          %2030 = vmatprep.subr.mxu0 0.0
          %2031 = vmatpush1.msra.mxu0 0.0
          %2032 = vmatprep.subr.mxu0 0.0
          %2033 = vmatpush1.msra.mxu0 0.0
          %2034 = vmatprep.subr.mxu0 0.0
          %2035 = vmatpush1.msra.mxu0 0.0
          %2036 = vmatprep.subr.mxu0 0.0
          %2037 = vmatpush1.msra.mxu0 0.0
          %2038 = vmatprep.subr.mxu0 0.0
          %2039 = vmatpush1.msra.mxu0 0.0
          %2040 = vmatprep.subr.mxu0 0.0
          %2041 = vmatpush1.msra.mxu0 0.0
          %2042 = vmatprep.subr.mxu0 0.0
          %2043 = vmatpush1.msra.mxu0 0.0
          %2044 = vmatprep.subr.mxu0 0.0
          %2045 = vmatpush1.msra.mxu0 0.0
          %2046 = vmatprep.subr.mxu0 0.0
          %2047 = vmatpush1.msra.mxu0 0.0
          %2048 = vmatprep.subr.mxu0 0.0
          %2049 = vmatpush1.msra.mxu0 0.0
          %2050 = vmatprep.subr.mxu0 0.0
          %2051 = vmatpush1.msra.mxu0 0.0
          %2052 = vmatprep.subr.mxu0 0.0
          %2053 = vmatpush1.msra.mxu0 0.0
          %2054 = vmatprep.subr.mxu0 0.0
          %2055 = vmatpush1.msra.mxu0 0.0
          %2056 = vmatprep.subr.mxu0 0.0
          %2057 = vmatpush1.msra.mxu0 0.0
          %2058 = vmatprep.subr.mxu0 0.0
          %2059 = vmatpush1.msra.mxu0 0.0
          %2060 = vmatprep.subr.mxu0 0.0
          %2061 = vmatpush1.msra.mxu0 0.0
          %2062 = vmatprep.subr.mxu0 0.0
          %2063 = vmatpush1.msra.mxu0 0.0
          %2064 = vmatprep.subr.mxu0 0.0
          %2065 = vmatpush1.msra.mxu0 0.0
          %2066 = vmatprep.subr.mxu0 0.0
          %2067 = vmatpush1.msra.mxu0 0.0
          %2068 = vmatprep.subr.mxu0 0.0
          %2069 = vmatpush1.msra.mxu0 0.0
          %2070 = vmatprep.subr.mxu0 0.0
          %2071 = vmatpush1.msra.mxu0 0.0
          %2072 = vmatprep.mubr.f32.mxu0 0.0
          %2073 = vmatmul.mubr.f32.gmra.mrb[0].mxu0 %v1189
          %v2074 = vpop.f32.mrb[0].mxu0
          %v2075 = vadd.f32 0.0, %v2074
          %v2076 = vpop.f32.mrb[0].mxu0
          %2077 = vdwg.mxu0
          %v2078 = vadd.f32 %v2001, %v2075
          %v2079 = vld [vmem:[#allocation30] sm:$0x1]
          %v2081 = vlaneseq
          %v2082 = vshrl.u32 %v2081, 7
          %v2083 = vsub.s32 0, %v2082
          %v2084 = vrot.slane %v2079, %v2083
          %v2086 = vadd.f32 %v2078, %v2084
          %v2087 = vld [vmem:[#allocation18] sm:$0xff]
          %v2088 = vld [vmem:[#allocation18 + $0x8] sm:$0xff]
          %v2089 = vld [vmem:[#allocation18 + $0x10] sm:$0xff]
          %v2090 = vld [vmem:[#allocation18 + $0x18] sm:$0xff]
          %v2091 = vld [vmem:[#allocation23] sm:$0xff]
          %v2092 = vld [vmem:[#allocation23 + $0x8] sm:$0xff]
          %v2093 = vld [vmem:[#allocation23 + $0x10] sm:$0xff]
          %v2094 = vld [vmem:[#allocation23 + $0x18] sm:$0xff]
          %v2095 = vld [vmem:[#allocation23 + $0x20] sm:$0xff]
          %v2096 = vld [vmem:[#allocation23 + $0x28] sm:$0xff]
          %v2097 = vld [vmem:[#allocation23 + $0x30] sm:$0xff]
          %v2098 = vld [vmem:[#allocation23 + $0x38] sm:$0xff]
          %2099 = vmatprep.subr.mxu0 0.0
          %2100 = vmatpush1.msra.mxu0 %v2091
          %2101 = vmatprep.subr.mxu0 0.0
          %2102 = vmatpush1.msra.mxu0 %v2092
          %2103 = vmatprep.subr.mxu0 0.0
          %2104 = vmatpush1.msra.mxu0 %v2093
          %2105 = vmatprep.subr.mxu0 0.0
          %2106 = vmatpush1.msra.mxu0 %v2094
          %2107 = vmatprep.subr.mxu0 0.0
          %2108 = vmatpush1.msra.mxu0 %v2095
          %2109 = vmatprep.subr.mxu0 0.0
          %2110 = vmatpush1.msra.mxu0 %v2096
          %2111 = vmatprep.subr.mxu0 0.0
          %2112 = vmatpush1.msra.mxu0 %v2097
          %2113 = vmatprep.subr.mxu0 0.0
          %2114 = vmatpush1.msra.mxu0 %v2098
          %2115 = vmatprep.subr.mxu0 0.0
          %2116 = vmatpush1.msra.mxu0 0.0
          %2117 = vmatprep.subr.mxu0 0.0
          %2118 = vmatpush1.msra.mxu0 0.0
          %2119 = vmatprep.subr.mxu0 0.0
          %2120 = vmatpush1.msra.mxu0 0.0
          %2121 = vmatprep.subr.mxu0 0.0
          %2122 = vmatpush1.msra.mxu0 0.0
          %2123 = vmatprep.subr.mxu0 0.0
          %2124 = vmatpush1.msra.mxu0 0.0
          %2125 = vmatprep.subr.mxu0 0.0
          %2126 = vmatpush1.msra.mxu0 0.0
          %2127 = vmatprep.subr.mxu0 0.0
          %2128 = vmatpush1.msra.mxu0 0.0
          %2129 = vmatprep.subr.mxu0 0.0
          %2130 = vmatpush1.msra.mxu0 0.0
          %2131 = vmatprep.subr.mxu0 0.0
          %2132 = vmatpush1.msra.mxu0 0.0
          %2133 = vmatprep.subr.mxu0 0.0
          %2134 = vmatpush1.msra.mxu0 0.0
          %2135 = vmatprep.subr.mxu0 0.0
          %2136 = vmatpush1.msra.mxu0 0.0
          %2137 = vmatprep.subr.mxu0 0.0
          %2138 = vmatpush1.msra.mxu0 0.0
          %2139 = vmatprep.subr.mxu0 0.0
          %2140 = vmatpush1.msra.mxu0 0.0
          %2141 = vmatprep.subr.mxu0 0.0
          %2142 = vmatpush1.msra.mxu0 0.0
          %2143 = vmatprep.subr.mxu0 0.0
          %2144 = vmatpush1.msra.mxu0 0.0
          %2145 = vmatprep.subr.mxu0 0.0
          %2146 = vmatpush1.msra.mxu0 0.0
          %2147 = vmatprep.subr.mxu0 0.0
          %2148 = vmatpush1.msra.mxu0 0.0
          %2149 = vmatprep.subr.mxu0 0.0
          %2150 = vmatpush1.msra.mxu0 0.0
          %2151 = vmatprep.subr.mxu0 0.0
          %2152 = vmatpush1.msra.mxu0 0.0
          %2153 = vmatprep.subr.mxu0 0.0
          %2154 = vmatpush1.msra.mxu0 0.0
          %2155 = vmatprep.subr.mxu0 0.0
          %2156 = vmatpush1.msra.mxu0 0.0
          %2157 = vmatprep.subr.mxu0 0.0
          %2158 = vmatpush1.msra.mxu0 0.0
          %2159 = vmatprep.subr.mxu0 0.0
          %2160 = vmatpush1.msra.mxu0 0.0
          %2161 = vmatprep.subr.mxu0 0.0
          %2162 = vmatpush1.msra.mxu0 0.0
          %2163 = vmatprep.mubr.f32.mxu0 0.0
          %2164 = vmatmul.mubr.f32.gmra.mrb[0].mxu0 %v1624
          %v2165 = vpop.f32.mrb[0].mxu0
          %v2166 = vadd.f32 0.0, %v2165
          %v2167 = vpop.f32.mrb[0].mxu0
          %2168 = vdwg.mxu0
          %2169 = vmatprep.subr.mxu0 0.0
          %2170 = vmatpush1.msra.mxu0 %v2087
          %2171 = vmatprep.subr.mxu0 0.0
          %2172 = vmatpush1.msra.mxu0 %v2088
          %2173 = vmatprep.subr.mxu0 0.0
          %2174 = vmatpush1.msra.mxu0 %v2089
          %2175 = vmatprep.subr.mxu0 0.0
          %2176 = vmatpush1.msra.mxu0 %v2090
          %2177 = vmatprep.subr.mxu0 0.0
          %2178 = vmatpush1.msra.mxu0 0.0
          %2179 = vmatprep.subr.mxu0 0.0
          %2180 = vmatpush1.msra.mxu0 0.0
          %2181 = vmatprep.subr.mxu0 0.0
          %2182 = vmatpush1.msra.mxu0 0.0
          %2183 = vmatprep.subr.mxu0 0.0
          %2184 = vmatpush1.msra.mxu0 0.0
          %2185 = vmatprep.subr.mxu0 0.0
          %2186 = vmatpush1.msra.mxu0 0.0
          %2187 = vmatprep.subr.mxu0 0.0
          %2188 = vmatpush1.msra.mxu0 0.0
          %2189 = vmatprep.subr.mxu0 0.0
          %2190 = vmatpush1.msra.mxu0 0.0
          %2191 = vmatprep.subr.mxu0 0.0
          %2192 = vmatpush1.msra.mxu0 0.0
          %2193 = vmatprep.subr.mxu0 0.0
          %2194 = vmatpush1.msra.mxu0 0.0
          %2195 = vmatprep.subr.mxu0 0.0
          %2196 = vmatpush1.msra.mxu0 0.0
          %2197 = vmatprep.subr.mxu0 0.0
          %2198 = vmatpush1.msra.mxu0 0.0
          %2199 = vmatprep.subr.mxu0 0.0
          %2200 = vmatpush1.msra.mxu0 0.0
          %2201 = vmatprep.subr.mxu0 0.0
          %2202 = vmatpush1.msra.mxu0 0.0
          %2203 = vmatprep.subr.mxu0 0.0
          %2204 = vmatpush1.msra.mxu0 0.0
          %2205 = vmatprep.subr.mxu0 0.0
          %2206 = vmatpush1.msra.mxu0 0.0
          %2207 = vmatprep.subr.mxu0 0.0
          %2208 = vmatpush1.msra.mxu0 0.0
          %2209 = vmatprep.subr.mxu0 0.0
          %2210 = vmatpush1.msra.mxu0 0.0
          %2211 = vmatprep.subr.mxu0 0.0
          %2212 = vmatpush1.msra.mxu0 0.0
          %2213 = vmatprep.subr.mxu0 0.0
          %2214 = vmatpush1.msra.mxu0 0.0
          %2215 = vmatprep.subr.mxu0 0.0
          %2216 = vmatpush1.msra.mxu0 0.0
          %2217 = vmatprep.subr.mxu0 0.0
          %2218 = vmatpush1.msra.mxu0 0.0
          %2219 = vmatprep.subr.mxu0 0.0
          %2220 = vmatpush1.msra.mxu0 0.0
          %2221 = vmatprep.subr.mxu0 0.0
          %2222 = vmatpush1.msra.mxu0 0.0
          %2223 = vmatprep.subr.mxu0 0.0
          %2224 = vmatpush1.msra.mxu0 0.0
          %2225 = vmatprep.subr.mxu0 0.0
          %2226 = vmatpush1.msra.mxu0 0.0
          %2227 = vmatprep.subr.mxu0 0.0
          %2228 = vmatpush1.msra.mxu0 0.0
          %2229 = vmatprep.subr.mxu0 0.0
          %2230 = vmatpush1.msra.mxu0 0.0
          %2231 = vmatprep.subr.mxu0 0.0
          %2232 = vmatpush1.msra.mxu0 0.0
          %2233 = vmatprep.mubr.f32.mxu0 0.0
          %2234 = vmatmul.mubr.f32.gmra.mrb[0].mxu0 %v1697
          %v2235 = vpop.f32.mrb[0].mxu0
          %v2236 = vadd.f32 %v2166, %v2235
          %v2237 = vpop.f32.mrb[0].mxu0
          %2238 = vdwg.mxu0
          %v2239 = vld [vmem:[#allocation32] sm:$0x1]
          %v2241 = vlaneseq
          %v2242 = vshrl.u32 %v2241, 7
          %v2243 = vsub.s32 0, %v2242
          %v2244 = vrot.slane %v2239, %v2243
          %v2246 = vadd.f32 %v2236, %v2244
          %v2247 = vld [vmem:[#allocation27] sm:$0xff]
          %v2248 = vld [vmem:[#allocation27 + $0x8] sm:$0xff]
          %v2249 = vld [vmem:[#allocation27 + $0x10] sm:$0xff]
          %v2250 = vld [vmem:[#allocation27 + $0x18] sm:$0xff]
          %v2251 = vld [vmem:[#allocation33] sm:$0x1]
          %v2253 = vlaneseq
          %v2254 = vshrl.u32 %v2253, 7
          %v2255 = vsub.s32 0, %v2254
          %v2256 = vrot.slane %v2251, %v2255
          %2258 = vmatprep.subr.mxu0 0.0
          %2259 = vmatpush1.msra.mxu0 %v2247
          %2260 = vmatprep.subr.mxu0 0.0
          %2261 = vmatpush1.msra.mxu0 %v2248
          %2262 = vmatprep.subr.mxu0 0.0
          %2263 = vmatpush1.msra.mxu0 %v2249
          %2264 = vmatprep.subr.mxu0 0.0
          %2265 = vmatpush1.msra.mxu0 %v2250
          %2266 = vmatprep.subr.mxu0 0.0
          %2267 = vmatpush1.msra.mxu0 0.0
          %2268 = vmatprep.subr.mxu0 0.0
          %2269 = vmatpush1.msra.mxu0 0.0
          %2270 = vmatprep.subr.mxu0 0.0
          %2271 = vmatpush1.msra.mxu0 0.0
          %2272 = vmatprep.subr.mxu0 0.0
          %2273 = vmatpush1.msra.mxu0 0.0
          %2274 = vmatprep.subr.mxu0 0.0
          %2275 = vmatpush1.msra.mxu0 0.0
          %2276 = vmatprep.subr.mxu0 0.0
          %2277 = vmatpush1.msra.mxu0 0.0
          %2278 = vmatprep.subr.mxu0 0.0
          %2279 = vmatpush1.msra.mxu0 0.0
          %2280 = vmatprep.subr.mxu0 0.0
          %2281 = vmatpush1.msra.mxu0 0.0
          %2282 = vmatprep.subr.mxu0 0.0
          %2283 = vmatpush1.msra.mxu0 0.0
          %2284 = vmatprep.subr.mxu0 0.0
          %2285 = vmatpush1.msra.mxu0 0.0
          %2286 = vmatprep.subr.mxu0 0.0
          %2287 = vmatpush1.msra.mxu0 0.0
          %2288 = vmatprep.subr.mxu0 0.0
          %2289 = vmatpush1.msra.mxu0 0.0
          %2290 = vmatprep.subr.mxu0 0.0
          %2291 = vmatpush1.msra.mxu0 0.0
          %2292 = vmatprep.subr.mxu0 0.0
          %2293 = vmatpush1.msra.mxu0 0.0
          %2294 = vmatprep.subr.mxu0 0.0
          %2295 = vmatpush1.msra.mxu0 0.0
          %2296 = vmatprep.subr.mxu0 0.0
          %2297 = vmatpush1.msra.mxu0 0.0
          %2298 = vmatprep.subr.mxu0 0.0
          %2299 = vmatpush1.msra.mxu0 0.0
          %2300 = vmatprep.subr.mxu0 0.0
          %2301 = vmatpush1.msra.mxu0 0.0
          %2302 = vmatprep.subr.mxu0 0.0
          %2303 = vmatpush1.msra.mxu0 0.0
          %2304 = vmatprep.subr.mxu0 0.0
          %2305 = vmatpush1.msra.mxu0 0.0
          %2306 = vmatprep.subr.mxu0 0.0
          %2307 = vmatpush1.msra.mxu0 0.0
          %2308 = vmatprep.subr.mxu0 0.0
          %2309 = vmatpush1.msra.mxu0 0.0
          %2310 = vmatprep.subr.mxu0 0.0
          %2311 = vmatpush1.msra.mxu0 0.0
          %2312 = vmatprep.subr.mxu0 0.0
          %2313 = vmatpush1.msra.mxu0 0.0
          %2314 = vmatprep.subr.mxu0 0.0
          %2315 = vmatpush1.msra.mxu0 0.0
          %2316 = vmatprep.subr.mxu0 0.0
          %2317 = vmatpush1.msra.mxu0 0.0
          %2318 = vmatprep.subr.mxu0 0.0
          %2319 = vmatpush1.msra.mxu0 0.0
          %2320 = vmatprep.subr.mxu0 0.0
          %2321 = vmatpush1.msra.mxu0 0.0
          %2322 = vmatprep.mubr.f32.mxu0 0.0
          %2323 = vmatmul.mubr.f32.gmra.mrb[0].mxu0 %v1189
          %v2324 = vpop.f32.mrb[0].mxu0
          %v2325 = vadd.f32 %v2256, %v2324
          %v2326 = vpop.f32.mrb[0].mxu0
          %2327 = vdwg.mxu0
          %v2328 = vxor.u32 %v1851, 2147483648
          %v2329 = vmul.f32 %v2328, 1.442695
          %v2330 = vpow.pop %v2329
          %v2331 = vadd.f32 %v2330, 1.0
          %v2332 = vrcp.pop %v2331
          %v2333 = vmul.f32 1.0, %v2332
          %v2334 = vxor.u32 %v2086, 2147483648
          %v2335 = vmul.f32 %v2334, 1.442695
          %v2336 = vpow.pop %v2335
          %v2337 = vadd.f32 %v2336, 1.0
          %v2338 = vrcp.pop %v2337
          %v2339 = vmul.f32 1.0, %v2338
          %v2340 = vmul.f32 %v2333, %v2325
          %v2341 = vadd.f32 %v2246, %v2340
          %v2342 = vtanh.pop %v2341
          %v2343 = vsub.f32 1.0, %v2339
          %v2344 = vmul.f32 %v2343, %v2342
          %v2345 = vmul.f32 %v2339, %v1035
          %v2346 = vadd.f32 %v2344, %v2345
          %2347 = vst.msk [vmem:[#allocation2] sm:$0xff] %vm1187, %v2346
        $region200: #{tpu_custom_call.1} parent=107 // pred_fallthru
          _
        %v2348 = vld [vmem:[#allocation2] sm:$0xff]
        %vm2349 = vcmask 261120
        %2350 = vst.msk [vmem:[#allocation38] sm:$0xff] %vm2349, %v2348
        %v2351 = vld [vmem:[%s955] sm:$0xff]
        %v2352 = vld [vmem:[%s955 + $0x8] sm:$0xff]
        %v2353 = vld [vmem:[%s955 + $0x10] sm:$0xff]
        %v2354 = vld [vmem:[%s955 + $0x18] sm:$0xff]
        %v2355 = vld [vmem:[%s963] sm:$0x1]
        %v2357 = vlaneseq
        %v2358 = vshrl.u32 %v2357, 7
        %v2359 = vsub.s32 0, %v2358
        %v2360 = vrot.slane %v2355, %v2359
        %v2363 = vsel %vm2349, %v2348, 0
        %2365 = vmatprep.subr.mxu0 0.0
        %2366 = vmatpush1.msra.mxu0 %v2351
        %2367 = vmatprep.subr.mxu0 0.0
        %2368 = vmatpush1.msra.mxu0 %v2352
        %2369 = vmatprep.subr.mxu0 0.0
        %2370 = vmatpush1.msra.mxu0 %v2353
        %2371 = vmatprep.subr.mxu0 0.0
        %2372 = vmatpush1.msra.mxu0 %v2354
        %2373 = vmatprep.subr.mxu0 0.0
        %2374 = vmatpush1.msra.mxu0 0.0
        %2375 = vmatprep.subr.mxu0 0.0
        %2376 = vmatpush1.msra.mxu0 0.0
        %2377 = vmatprep.subr.mxu0 0.0
        %2378 = vmatpush1.msra.mxu0 0.0
        %2379 = vmatprep.subr.mxu0 0.0
        %2380 = vmatpush1.msra.mxu0 0.0
        %2381 = vmatprep.subr.mxu0 0.0
        %2382 = vmatpush1.msra.mxu0 0.0
        %2383 = vmatprep.subr.mxu0 0.0
        %2384 = vmatpush1.msra.mxu0 0.0
        %2385 = vmatprep.subr.mxu0 0.0
        %2386 = vmatpush1.msra.mxu0 0.0
        %2387 = vmatprep.subr.mxu0 0.0
        %2388 = vmatpush1.msra.mxu0 0.0
        %2389 = vmatprep.subr.mxu0 0.0
        %2390 = vmatpush1.msra.mxu0 0.0
        %2391 = vmatprep.subr.mxu0 0.0
        %2392 = vmatpush1.msra.mxu0 0.0
        %2393 = vmatprep.subr.mxu0 0.0
        %2394 = vmatpush1.msra.mxu0 0.0
        %2395 = vmatprep.subr.mxu0 0.0
        %2396 = vmatpush1.msra.mxu0 0.0
        %2397 = vmatprep.subr.mxu0 0.0
        %2398 = vmatpush1.msra.mxu0 0.0
        %2399 = vmatprep.subr.mxu0 0.0
        %2400 = vmatpush1.msra.mxu0 0.0
        %2401 = vmatprep.subr.mxu0 0.0
        %2402 = vmatpush1.msra.mxu0 0.0
        %2403 = vmatprep.subr.mxu0 0.0
        %2404 = vmatpush1.msra.mxu0 0.0
        %2405 = vmatprep.subr.mxu0 0.0
        %2406 = vmatpush1.msra.mxu0 0.0
        %2407 = vmatprep.subr.mxu0 0.0
        %2408 = vmatpush1.msra.mxu0 0.0
        %2409 = vmatprep.subr.mxu0 0.0
        %2410 = vmatpush1.msra.mxu0 0.0
        %2411 = vmatprep.subr.mxu0 0.0
        %2412 = vmatpush1.msra.mxu0 0.0
        %2413 = vmatprep.subr.mxu0 0.0
        %2414 = vmatpush1.msra.mxu0 0.0
        %2415 = vmatprep.subr.mxu0 0.0
        %2416 = vmatpush1.msra.mxu0 0.0
        %2417 = vmatprep.subr.mxu0 0.0
        %2418 = vmatpush1.msra.mxu0 0.0
        %2419 = vmatprep.subr.mxu0 0.0
        %2420 = vmatpush1.msra.mxu0 0.0
        %2421 = vmatprep.subr.mxu0 0.0
        %2422 = vmatpush1.msra.mxu0 0.0
        %2423 = vmatprep.subr.mxu0 0.0
        %2424 = vmatpush1.msra.mxu0 0.0
        %2425 = vmatprep.subr.mxu0 0.0
        %2426 = vmatpush1.msra.mxu0 0.0
        %2427 = vmatprep.subr.mxu0 0.0
        %2428 = vmatpush1.msra.mxu0 0.0
        %2429 = vmatprep.mubr.f32.mxu0 0.0
        %2430 = vmatmul.mubr.f32.gmra.mrb[0].mxu0 %v2363
        %v2431 = vpop.f32.mrb[0].mxu0
        %v2432 = vadd.f32 %v2360, %v2431
        %v2433 = vpop.f32.mrb[0].mxu0
        %2434 = vdwg.mxu0
        %2435 = vst [vmem:[%s1027] sm:$0xff] %v2432
        %s2436 = sand.u32 %s530, 1
        %s2437 = scalar_lea.sflag [#allocation5], %s2436
        %s2438 = sand.u32 %s530, 1
        %s2439 = smul.addr %s2438, 8
        %s2440 = scalar_lea.vmem [#allocation37], %s2439
        // Predicated region
        $region201: #{tpu_custom_call.1} parent=107 // pred_check
          %p2441 = pneg %p540
        $region202: #{tpu_custom_call.1} parent=107 // pred_check_branch
          %2443 = sbr.rel (%p2441) target = $region204
        $region203: #{tpu_custom_call.1} parent=107 // pred_region
          %s2445 = ssub.s32 128, 128
          %2446 = vsyncadd %s2437, %s2445
          %s2447 = smul.addr %s50, 128
          %s2448 = scalar_lea.hbm %s22, %s2447
          %s2450 = sshll.u32 %s2440, 4
          %s2451 = int_to_ptr.vmem [resolvable:$true] %s2450
          %2453 = dma.vmem_to_hbm [thread:$0]  %s2451, 128, %s2448, %s2437
        $region204: #{tpu_custom_call.1} parent=107 // pred_fallthru
          _
        // Predicated region
        $region205: #{tpu_custom_call.1} parent=107 // pred_check
          %p2454 = pneg %p561
        $region206: #{tpu_custom_call.1} parent=107 // pred_check_branch
          %2456 = sbr.rel (%p2454) target = $region208
        $region207: #{tpu_custom_call.1} parent=107 // pred_region
          %s2458 = ssub.s32 128, 128
          %2459 = vsyncadd [#allocation39], %s2458
          %s2461 = sshll.u32 [#allocation38], 4
          %s2462 = int_to_ptr.vmem [resolvable:$true] %s2461
          %2464 = dma.vmem_to_hbm [thread:$0]  %s2462, 128, %s23, [#allocation39]
        $region208: #{tpu_custom_call.1} parent=107 // pred_fallthru
          _
        // Predicated region
        $region209: #{tpu_custom_call.1} parent=107 // pred_check
          %p2465 = pneg %p561
        $region210: #{tpu_custom_call.1} parent=107 // pred_check_branch
          %2467 = sbr.rel (%p2465) target = $region212
        $region211: #{tpu_custom_call.1} parent=107 // pred_region
          %2468 = dma.done [#allocation39], 128
        $region212: #{tpu_custom_call.1} parent=107 // pred_fallthru
          _
      $region108: #{tpu_custom_call.1} parent=5 // pred_fallthru
        _
      %p2469 = scmp.le.s32.totalorder 2, %s45
      // Predicated region
      $region213: #{tpu_custom_call.1} parent=5 // pred_check
        %p2470 = pneg %p2469
      $region214: #{tpu_custom_call.1} parent=5 // pred_check_branch
        %2472 = sbr.rel (%p2470) target = $region216
      $region215: #{tpu_custom_call.1} parent=5 // pred_region
        %s2473 = ssub.s32 %s45, 2
        // Predicated region
        $region217: #{tpu_custom_call.1} parent=215 // pred_check
          %p2474 = pneg %p546
        $region218: #{tpu_custom_call.1} parent=215 // pred_check_branch
          %2476 = sbr.rel (%p2474) target = $region220
        $region219: #{tpu_custom_call.1} parent=215 // pred_region
          %s2477 = sand.u32 %s531, 1
          %s2478 = scalar_lea.sflag [#allocation5], %s2477
          %s2479 = sand.u32 %s531, 1
          %s2480 = smul.addr %s2479, 8
          %s2481 = scalar_lea.vmem [#allocation37], %s2480
          %2482 = dma.done %s2478, 128
        $region220: #{tpu_custom_call.1} parent=215 // pred_fallthru
          _
      $region216: #{tpu_custom_call.1} parent=5 // pred_fallthru
        _
    $region6: #{tpu_custom_call.1} parent=1 // loop_footer
      %s49 = sadd.s32 1, %s45
    $region7: #{tpu_custom_call.1} parent=1 // loop_footer_branch
      %44 = sbr.rel target = $region3
    $region8: #{tpu_custom_call.1} parent=1 // loop_exit
      _
    %2483 = vsyncpa [#allocation4], 1
    %s2484 = scalar_lea.sflag [#allocation4], 1
    %2485 = vsyncpa %s2484, 1
    %2486 = vsyncpa [#allocation7], 1
    %2487 = vsyncpa [#allocation10], 1
    %2488 = vsyncpa [#allocation13], 1
    %2489 = vsyncpa [#allocation16], 1
    %2490 = vsyncpa [#allocation19], 1
    %2491 = vsyncpa [#allocation22], 1
    %2492 = vsyncpa [#allocation25], 1
    %2493 = vsyncpa [#allocation28], 1
    %2494 = vsyncpa [#allocation31], 1
    %2495 = vsyncpa [#allocation34], 1
    %2496 = vsyncpa [#allocation5], 1
    %s2497 = scalar_lea.sflag [#allocation5], 1
    %2498 = vsyncpa %s2497, 1
    %2499 = vsyncpa [#allocation39], 1

</llo_original>
